<compile_context>
chip_gen: v6e
topology: v6e:2x2x1
jax: 0.10.0
libtpu: 0.0.40
codegen_flags: <defaults>
</compile_context>

<pallas_src>
import functools

import jax
import jax.numpy as jnp
from jax import lax
from jax.experimental import pallas as pl
from jax.experimental.pallas import tpu as pltpu


def _device_kind() -> str:
    try:
        return jax.devices()[0].device_kind.lower()
    except Exception:
        return ""


def _vmem_limit_bytes() -> int:
    """Generation-aware VMEM cap: ~104 MiB on v5e/v6e (128 MiB physical), 56 MiB on v7x."""
    cap = None
    try:
        info = pltpu.get_tpu_info()
        for name in ("vmem_capacity_bytes", "vmem_size_bytes", "vmem_bytes"):
            val = getattr(info, name, None)
            if val:
                cap = int(val)
                break
    except Exception:
        cap = None
    if cap is None:
        cap = (64 if "v7" in _device_kind() else 128) * 1024 * 1024
    if cap >= 100 * 1024 * 1024:
        return 104 * 1024 * 1024          # v5e / v6e: 128 MiB physical VMEM
    return 56 * 1024 * 1024               # v7x: 64 MiB per TensorCore


def _default_q_tile(seq_len: int) -> int:
    # v6e/v7x MXU is 2x256^2 -> TQ=256 halves grid-step count and keeps the result
    # path fuller; v5e's 4x128^2 MXU is already well fed at TQ=128.
    base = 128 if "v5" in _device_kind() else 256
    return min(seq_len, base)


def _attention_kernel(x_full_ref, x_q_ref,
                      wq_ref, bq_ref, wk_ref, bk_ref, wv_ref, bv_ref,
                      wo_ref, bo_ref,
                      o_ref,
                      k_scr, v_scr, ctx_scr,
                      *, num_heads: int):
    """One grid step = one (batch element, query tile).

    x_full_ref : (1, S, H)   full-sequence input (constant across query tiles)
    x_q_ref    : (1, TQ, H)  this query tile's input
    w*_ref     : (H, H)      projection weights, (in, out) layout
    b*_ref     : (1, H)      projection biases
    o_ref      : (1, TQ, H)  output tile
    k_scr/v_scr: (num_heads, S, head_dim)  head-major K/V caches (per batch element)
    ctx_scr    : (TQ, H)     per-tile head contexts, consumed by the output matmul
    """
    qi = pl.program_id(1)
    nh, S, d = k_scr.shape
    scale = 1.0 / float(d) ** 0.5

    # ---- Once per batch element: project K and V over the full sequence as two
    # separate matmuls (live f32 intermediate bounded to (S, H)); pay the per-head
    # split / relayout once here instead of on every query tile.
    @pl.when(qi == 0)
    def _():
        x = x_full_ref[0]                                   # (S, H) native dtype
        k = jnp.dot(x, wk_ref[...],
                    preferred_element_type=jnp.float32) + bk_ref[...]
        for h in range(num_heads):
            k_scr[h] = k[:, h * d:(h + 1) * d].astype(k_scr.dtype)
        v = jnp.dot(x, wv_ref[...],
                    preferred_element_type=jnp.float32) + bv_ref[...]
        for h in range(num_heads):
            v_scr[h] = v[:, h * d:(h + 1) * d].astype(v_scr.dtype)

    # ---- Per query tile: Q projection for just this tile (no full-sequence Q cache,
    # no qi==0 projection spike).
    q = jnp.dot(x_q_ref[0], wq_ref[...],
                preferred_element_type=jnp.float32) + bq_ref[...]   # (TQ, H) f32
    q = q.astype(k_scr.dtype)

    # ---- Per-head attention. Each head's context lands in its lane slice of ctx_scr;
    # the output projection is a single full-depth matmul after the loop.
    for h in range(num_heads):                              # static unroll
        qh = q[:, h * d:(h + 1) * d]                        # (TQ, d)
        kh = k_scr[h]                                       # (S, d)
        vh = v_scr[h]                                       # (S, d)

        # Contract the last axes directly -> no materialized K transpose.
        scores = lax.dot_general(
            qh, kh, (((1,), (1,)), ((), ())),
            preferred_element_type=jnp.float32) * scale     # (TQ, S) f32

        scores = scores - jnp.max(scores, axis=-1, keepdims=True)
        p = jnp.exp(scores)
        p = p * pl.reciprocal(jnp.sum(p, axis=-1, keepdims=True), approx=True)

        ctx = jnp.dot(p.astype(vh.dtype), vh,
                      preferred_element_type=jnp.float32)   # (TQ, d)
        ctx_scr[:, h * d:(h + 1) * d] = ctx.astype(ctx_scr.dtype)

    # Single full-contraction (K = H) output projection: fills the MXU depth and
    # removes the per-head full-width accumulator read-modify-writes.
    out = jnp.dot(ctx_scr[...], wo_ref[...],
                  preferred_element_type=jnp.float32) + bo_ref[...]
    o_ref[0] = out.astype(o_ref.dtype)


def base_attention_forward(x, params, num_heads, *, q_tile=None):
    """x: (B, S, H). params: dict of (in,out)-layout weights/biases. Returns (B, S, H)."""
    B, S, H = x.shape
    assert H % num_heads == 0
    head_dim = H // num_heads

    wq, bq = params["wq"], params["bq"]
    wk, bk = params["wk"], params["bk"]
    wv, bv = params["wv"], params["bv"]
    wo, bo = params["wo"], params["bo"]

    if q_tile is None:
        q_tile = _default_q_tile(S)
    q_tile = min(q_tile, S)
    if q_tile != S and q_tile % 8 != 0:          # (8, 128) sublane constraint
        q_tile = min(S, ((q_tile + 7) // 8) * 8)
    nq = pl.cdiv(S, q_tile)                      # ragged tail handled by block padding

    kernel = functools.partial(_attention_kernel, num_heads=num_heads)

    itemsize = jnp.dtype(x.dtype).itemsize
    cost = pl.CostEstimate(
        flops=int(2 * B * S * H * (4 * H + 2 * S)),
        transcendentals=int(B * num_heads * S * S),
        bytes_accessed=int((2 * B * S * H + 4 * H * H + 4 * H) * itemsize),
    )

    const = lambda b, qi: (0, 0)
    x_full_spec = pl.BlockSpec((1, S, H), lambda b, qi: (b, 0, 0))
    x_q_spec = pl.BlockSpec((1, q_tile, H), lambda b, qi: (b, qi, 0))
    out_spec = pl.BlockSpec((1, q_tile, H), lambda b, qi: (b, qi, 0))
    scratch = [
        pltpu.VMEM((num_heads, S, head_dim), x.dtype),   # K cache (head-major)
        pltpu.VMEM((num_heads, S, head_dim), x.dtype),   # V cache (head-major)
        pltpu.VMEM((q_tile, H), x.dtype),                # per-tile head contexts
    ]
    compiler_params = pltpu.CompilerParams(
        dimension_semantics=("parallel", "arbitrary"),
        vmem_limit_bytes=_vmem_limit_bytes(),
    )

    def _call(single_buffer_weights):
        if single_buffer_weights:
            def wspec(shape):
                # Block index never changes -> single-buffer to halve weight VMEM.
                return pl.BlockSpec(shape, const, pipeline_mode=pl.Buffered(1))
        else:
            def wspec(shape):
                return pl.BlockSpec(shape, const)
        in_specs = [
            x_full_spec, x_q_spec,
            wspec((H, H)), wspec((1, H)),   # wq, bq
            wspec((H, H)), wspec((1, H)),   # wk, bk
            wspec((H, H)), wspec((1, H)),   # wv, bv
            wspec((H, H)), wspec((1, H)),   # wo, bo
        ]
        return pl.pallas_call(
            kernel,
            out_shape=jax.ShapeDtypeStruct((B, S, H), x.dtype),
            grid_spec=pltpu.PrefetchScalarGridSpec(
                num_scalar_prefetch=0,
                grid=(B, nq),
                in_specs=in_specs,
                out_specs=out_spec,
                scratch_shapes=scratch,
            ),
            compiler_params=compiler_params,
            cost_estimate=cost,
        )(x, x, wq, bq, wk, bk, wv, bv, wo, bo)

    try:
        return _call(True)
    except Exception:
        # JAX build without pipeline_mode=Buffered support: default double-buffering.
        return _call(False)


def _reference_forward(x, params, num_heads):
    """Pure-JAX reference matching the PyTorch forward (training=False, mask=None)."""
    B, S, H = x.shape
    d = H // num_heads

    def lin(t, w, b):
        return t @ w + b

    q = lin(x, params["wq"], params["bq"]).reshape(B, S, num_heads, d).transpose(0, 2, 1, 3)
    k = lin(x, params["wk"], params["bk"]).reshape(B, S, num_heads, d).transpose(0, 2, 1, 3)
    v = lin(x, params["wv"], params["bv"]).reshape(B, S, num_heads, d).transpose(0, 2, 1, 3)

    scores = jnp.einsum("bhqd,bhkd->bhqk", q, k) / jnp.sqrt(jnp.float32(d))
    w = jax.nn.softmax(scores, axis=-1)
    out = jnp.einsum("bhqk,bhkd->bhqd", w, v)
    out = out.transpose(0, 2, 1, 3).reshape(B, S, H)
    return lin(out, params["wo"], params["bo"])


def init_params(key, hidden_size):
    keys = jax.random.split(key, 8)

    def w(k):
        return jax.random.normal(k, (hidden_size, hidden_size), jnp.float32) * 0.02

    def b(k):
        return jax.random.normal(k, (1, hidden_size), jnp.float32) * 0.02

    return {
        "wq": w(keys[0]), "bq": b(keys[1]),
        "wk": w(keys[2]), "bk": b(keys[3]),
        "wv": w(keys[4]), "bv": b(keys[5]),
        "wo": w(keys[6]), "bo": b(keys[7]),
    }


if __name__ == "__main__":
    B, S, H = 2, 8, 32
    NUM_HEADS = 4

    key = jax.random.PRNGKey(0)
    k_x, k_p = jax.random.split(key)
    x = jax.random.normal(k_x, (B, S, H), jnp.float32)
    params = init_params(k_p, H)

    out = base_attention_forward(x, params, NUM_HEADS)
    out = jax.block_until_ready(out)

    ref = _reference_forward(x, params, NUM_HEADS)
    assert out.shape == (B, S, H)
    # Tolerance accounts for the EUP approximate reciprocal in the softmax.
    assert jnp.allclose(out, ref, atol=2e-3, rtol=2e-3), "mismatch vs reference"

    print("KERNEL_OK")
</pallas_src>

<mosaic_0001>
module attributes {stable_mosaic.version = 11 : i64} {
  func.func @_attention_kernel(%arg0: i32, %arg1: i32, %arg2: memref<1x8x32xf32, #tpu.memory_space<vmem>>, %arg3: memref<1x8x32xf32, #tpu.memory_space<vmem>>, %arg4: memref<32x32xf32, #tpu.memory_space<vmem>>, %arg5: memref<1x32xf32, #tpu.memory_space<vmem>>, %arg6: memref<32x32xf32, #tpu.memory_space<vmem>>, %arg7: memref<1x32xf32, #tpu.memory_space<vmem>>, %arg8: memref<32x32xf32, #tpu.memory_space<vmem>>, %arg9: memref<1x32xf32, #tpu.memory_space<vmem>>, %arg10: memref<32x32xf32, #tpu.memory_space<vmem>>, %arg11: memref<1x32xf32, #tpu.memory_space<vmem>>, %arg12: memref<1x8x32xf32, #tpu.memory_space<vmem>>, %arg13: memref<4x8x8xf32, #tpu.memory_space<vmem>>, %arg14: memref<4x8x8xf32, #tpu.memory_space<vmem>>, %arg15: memref<8x32xf32, #tpu.memory_space<vmem>>) attributes {dimension_semantics = [#tpu.dimension_semantics<parallel>, #tpu.dimension_semantics<arbitrary>], iteration_bounds = array<i64: 2, 1>, scalar_prefetch = 0 : i64, scratch_operands = 3 : i64, tpu.core_type = #tpu.core_type<tc>, window_params = [{transform_indices = @transform_0, window_bounds = array<i64: 1, 8, 32>}, {transform_indices = @transform_1, window_bounds = array<i64: 1, 8, 32>}, {pipeline_mode = #tpu.pipeline_mode<synchronous>, transform_indices = @transform_2, window_bounds = array<i64: 32, 32>}, {pipeline_mode = #tpu.pipeline_mode<synchronous>, transform_indices = @transform_3, window_bounds = array<i64: 1, 32>}, {pipeline_mode = #tpu.pipeline_mode<synchronous>, transform_indices = @transform_4, window_bounds = array<i64: 32, 32>}, {pipeline_mode = #tpu.pipeline_mode<synchronous>, transform_indices = @transform_5, window_bounds = array<i64: 1, 32>}, {pipeline_mode = #tpu.pipeline_mode<synchronous>, transform_indices = @transform_6, window_bounds = array<i64: 32, 32>}, {pipeline_mode = #tpu.pipeline_mode<synchronous>, transform_indices = @transform_7, window_bounds = array<i64: 1, 32>}, {pipeline_mode = #tpu.pipeline_mode<synchronous>, transform_indices = @transform_8, window_bounds = array<i64: 32, 32>}, {pipeline_mode = #tpu.pipeline_mode<synchronous>, transform_indices = @transform_9, window_bounds = array<i64: 1, 32>}, {transform_indices = @transform_10, window_bounds = array<i64: 1, 8, 32>}]} {
    %c0_i32 = arith.constant 0 : i32
    %0 = arith.cmpi eq, %arg1, %c0_i32 : i32
    %1 = arith.extui %0 : i1 to i32
    %c0_i32_0 = arith.constant 0 : i32
    %2 = arith.cmpi ne, %1, %c0_i32_0 : i32
    scf.if %2 {
      %c0_63 = arith.constant 0 : index
      %c0_64 = arith.constant 0 : index
      %c0_65 = arith.constant 0 : index
      %99 = vector.load %arg2[%c0_63, %c0_64, %c0_65] : memref<1x8x32xf32, #tpu.memory_space<vmem>>, vector<1x8x32xf32>
      %100 = vector.shape_cast %99 : vector<1x8x32xf32> to vector<8x32xf32>
      %c0_66 = arith.constant 0 : index
      %c0_67 = arith.constant 0 : index
      %101 = vector.load %arg6[%c0_66, %c0_67] : memref<32x32xf32, #tpu.memory_space<vmem>>, vector<32x32xf32>
      %cst_68 = arith.constant dense<0.000000e+00> : vector<8x32xf32>
      %102 = tpu.matmul %100, %101, %cst_68 {dimension_numbers = #tpu.dot_dimension_numbers<[1], [0], [0], [1], [0, 0, 1, 1], [], []>} : vector<8x32xf32>, vector<32x32xf32>, vector<8x32xf32> -> vector<8x32xf32>
      %c0_69 = arith.constant 0 : index
      %c0_70 = arith.constant 0 : index
      %103 = vector.load %arg7[%c0_69, %c0_70] : memref<1x32xf32, #tpu.memory_space<vmem>>, vector<1x32xf32>
      %104 = vector.broadcast %103 : vector<1x32xf32> to vector<8x32xf32>
      %105 = arith.addf %102, %104 : vector<8x32xf32>
      %106 = vector.extract_strided_slice %105 {offsets = [0, 0], sizes = [8, 8], strides = [1, 1]} : vector<8x32xf32> to vector<8x8xf32>
      %c0_71 = arith.constant 0 : index
      %c0_72 = arith.constant 0 : index
      %c0_73 = arith.constant 0 : index
      %107 = vector.load %arg13[%c0_71, %c0_72, %c0_73] : memref<4x8x8xf32, #tpu.memory_space<vmem>>, vector<1x8x8xf32>
      %108 = vector.shape_cast %107 : vector<1x8x8xf32> to vector<8x8xf32>
      %109 = vector.shape_cast %106 : vector<8x8xf32> to vector<1x8x8xf32>
      tpu.vector_store %arg13[%c0_71, %c0_72, %c0_73], %109 {strides = array<i32>} : memref<4x8x8xf32, #tpu.memory_space<vmem>>, vector<1x8x8xf32>,
      %110 = vector.extract_strided_slice %105 {offsets = [0, 8], sizes = [8, 8], strides = [1, 1]} : vector<8x32xf32> to vector<8x8xf32>
      %c1_74 = arith.constant 1 : index
      %c0_75 = arith.constant 0 : index
      %c0_76 = arith.constant 0 : index
      %111 = vector.load %arg13[%c1_74, %c0_75, %c0_76] : memref<4x8x8xf32, #tpu.memory_space<vmem>>, vector<1x8x8xf32>
      %112 = vector.shape_cast %111 : vector<1x8x8xf32> to vector<8x8xf32>
      %113 = vector.shape_cast %110 : vector<8x8xf32> to vector<1x8x8xf32>
      tpu.vector_store %arg13[%c1_74, %c0_75, %c0_76], %113 {strides = array<i32>} : memref<4x8x8xf32, #tpu.memory_space<vmem>>, vector<1x8x8xf32>,
      %114 = vector.extract_strided_slice %105 {offsets = [0, 16], sizes = [8, 8], strides = [1, 1]} : vector<8x32xf32> to vector<8x8xf32>
      %c2_77 = arith.constant 2 : index
      %c0_78 = arith.constant 0 : index
      %c0_79 = arith.constant 0 : index
      %115 = vector.load %arg13[%c2_77, %c0_78, %c0_79] : memref<4x8x8xf32, #tpu.memory_space<vmem>>, vector<1x8x8xf32>
      %116 = vector.shape_cast %115 : vector<1x8x8xf32> to vector<8x8xf32>
      %117 = vector.shape_cast %114 : vector<8x8xf32> to vector<1x8x8xf32>
      tpu.vector_store %arg13[%c2_77, %c0_78, %c0_79], %117 {strides = array<i32>} : memref<4x8x8xf32, #tpu.memory_space<vmem>>, vector<1x8x8xf32>,
      %118 = vector.extract_strided_slice %105 {offsets = [0, 24], sizes = [8, 8], strides = [1, 1]} : vector<8x32xf32> to vector<8x8xf32>
      %c3_80 = arith.constant 3 : index
      %c0_81 = arith.constant 0 : index
      %c0_82 = arith.constant 0 : index
      %119 = vector.load %arg13[%c3_80, %c0_81, %c0_82] : memref<4x8x8xf32, #tpu.memory_space<vmem>>, vector<1x8x8xf32>
      %120 = vector.shape_cast %119 : vector<1x8x8xf32> to vector<8x8xf32>
      %121 = vector.shape_cast %118 : vector<8x8xf32> to vector<1x8x8xf32>
      tpu.vector_store %arg13[%c3_80, %c0_81, %c0_82], %121 {strides = array<i32>} : memref<4x8x8xf32, #tpu.memory_space<vmem>>, vector<1x8x8xf32>,
      %c0_83 = arith.constant 0 : index
      %c0_84 = arith.constant 0 : index
      %122 = vector.load %arg8[%c0_83, %c0_84] : memref<32x32xf32, #tpu.memory_space<vmem>>, vector<32x32xf32>
      %cst_85 = arith.constant dense<0.000000e+00> : vector<8x32xf32>
      %123 = tpu.matmul %100, %122, %cst_85 {dimension_numbers = #tpu.dot_dimension_numbers<[1], [0], [0], [1], [0, 0, 1, 1], [], []>} : vector<8x32xf32>, vector<32x32xf32>, vector<8x32xf32> -> vector<8x32xf32>
      %c0_86 = arith.constant 0 : index
      %c0_87 = arith.constant 0 : index
      %124 = vector.load %arg9[%c0_86, %c0_87] : memref<1x32xf32, #tpu.memory_space<vmem>>, vector<1x32xf32>
      %125 = vector.broadcast %124 : vector<1x32xf32> to vector<8x32xf32>
      %126 = arith.addf %123, %125 : vector<8x32xf32>
      %127 = vector.extract_strided_slice %126 {offsets = [0, 0], sizes = [8, 8], strides = [1, 1]} : vector<8x32xf32> to vector<8x8xf32>
      %c0_88 = arith.constant 0 : index
      %c0_89 = arith.constant 0 : index
      %c0_90 = arith.constant 0 : index
      %128 = vector.load %arg14[%c0_88, %c0_89, %c0_90] : memref<4x8x8xf32, #tpu.memory_space<vmem>>, vector<1x8x8xf32>
      %129 = vector.shape_cast %128 : vector<1x8x8xf32> to vector<8x8xf32>
      %130 = vector.shape_cast %127 : vector<8x8xf32> to vector<1x8x8xf32>
      tpu.vector_store %arg14[%c0_88, %c0_89, %c0_90], %130 {strides = array<i32>} : memref<4x8x8xf32, #tpu.memory_space<vmem>>, vector<1x8x8xf32>,
      %131 = vector.extract_strided_slice %126 {offsets = [0, 8], sizes = [8, 8], strides = [1, 1]} : vector<8x32xf32> to vector<8x8xf32>
      %c1_91 = arith.constant 1 : index
      %c0_92 = arith.constant 0 : index
      %c0_93 = arith.constant 0 : index
      %132 = vector.load %arg14[%c1_91, %c0_92, %c0_93] : memref<4x8x8xf32, #tpu.memory_space<vmem>>, vector<1x8x8xf32>
      %133 = vector.shape_cast %132 : vector<1x8x8xf32> to vector<8x8xf32>
      %134 = vector.shape_cast %131 : vector<8x8xf32> to vector<1x8x8xf32>
      tpu.vector_store %arg14[%c1_91, %c0_92, %c0_93], %134 {strides = array<i32>} : memref<4x8x8xf32, #tpu.memory_space<vmem>>, vector<1x8x8xf32>,
      %135 = vector.extract_strided_slice %126 {offsets = [0, 16], sizes = [8, 8], strides = [1, 1]} : vector<8x32xf32> to vector<8x8xf32>
      %c2_94 = arith.constant 2 : index
      %c0_95 = arith.constant 0 : index
      %c0_96 = arith.constant 0 : index
      %136 = vector.load %arg14[%c2_94, %c0_95, %c0_96] : memref<4x8x8xf32, #tpu.memory_space<vmem>>, vector<1x8x8xf32>
      %137 = vector.shape_cast %136 : vector<1x8x8xf32> to vector<8x8xf32>
      %138 = vector.shape_cast %135 : vector<8x8xf32> to vector<1x8x8xf32>
      tpu.vector_store %arg14[%c2_94, %c0_95, %c0_96], %138 {strides = array<i32>} : memref<4x8x8xf32, #tpu.memory_space<vmem>>, vector<1x8x8xf32>,
      %139 = vector.extract_strided_slice %126 {offsets = [0, 24], sizes = [8, 8], strides = [1, 1]} : vector<8x32xf32> to vector<8x8xf32>
      %c3_97 = arith.constant 3 : index
      %c0_98 = arith.constant 0 : index
      %c0_99 = arith.constant 0 : index
      %140 = vector.load %arg14[%c3_97, %c0_98, %c0_99] : memref<4x8x8xf32, #tpu.memory_space<vmem>>, vector<1x8x8xf32>
      %141 = vector.shape_cast %140 : vector<1x8x8xf32> to vector<8x8xf32>
      %142 = vector.shape_cast %139 : vector<8x8xf32> to vector<1x8x8xf32>
      tpu.vector_store %arg14[%c3_97, %c0_98, %c0_99], %142 {strides = array<i32>} : memref<4x8x8xf32, #tpu.memory_space<vmem>>, vector<1x8x8xf32>,
    } else {
    }
    %c0 = arith.constant 0 : index
    %c0_1 = arith.constant 0 : index
    %c0_2 = arith.constant 0 : index
    %3 = vector.load %arg3[%c0, %c0_1, %c0_2] : memref<1x8x32xf32, #tpu.memory_space<vmem>>, vector<1x8x32xf32>
    %4 = vector.shape_cast %3 : vector<1x8x32xf32> to vector<8x32xf32>
    %c0_3 = arith.constant 0 : index
    %c0_4 = arith.constant 0 : index
    %5 = vector.load %arg4[%c0_3, %c0_4] : memref<32x32xf32, #tpu.memory_space<vmem>>, vector<32x32xf32>
    %cst = arith.constant dense<0.000000e+00> : vector<8x32xf32>
    %6 = tpu.matmul %4, %5, %cst {dimension_numbers = #tpu.dot_dimension_numbers<[1], [0], [0], [1], [0, 0, 1, 1], [], []>} : vector<8x32xf32>, vector<32x32xf32>, vector<8x32xf32> -> vector<8x32xf32>
    %c0_5 = arith.constant 0 : index
    %c0_6 = arith.constant 0 : index
    %7 = vector.load %arg5[%c0_5, %c0_6] : memref<1x32xf32, #tpu.memory_space<vmem>>, vector<1x32xf32>
    %8 = vector.broadcast %7 : vector<1x32xf32> to vector<8x32xf32>
    %9 = arith.addf %6, %8 : vector<8x32xf32>
    %10 = vector.extract_strided_slice %9 {offsets = [0, 0], sizes = [8, 8], strides = [1, 1]} : vector<8x32xf32> to vector<8x8xf32>
    %c0_7 = arith.constant 0 : index
    %c0_8 = arith.constant 0 : index
    %c0_9 = arith.constant 0 : index
    %11 = vector.load %arg13[%c0_7, %c0_8, %c0_9] : memref<4x8x8xf32, #tpu.memory_space<vmem>>, vector<1x8x8xf32>
    %12 = vector.shape_cast %11 : vector<1x8x8xf32> to vector<8x8xf32>
    %c0_10 = arith.constant 0 : index
    %c0_11 = arith.constant 0 : index
    %c0_12 = arith.constant 0 : index
    %13 = vector.load %arg14[%c0_10, %c0_11, %c0_12] : memref<4x8x8xf32, #tpu.memory_space<vmem>>, vector<1x8x8xf32>
    %14 = vector.shape_cast %13 : vector<1x8x8xf32> to vector<8x8xf32>
    %cst_13 = arith.constant dense<0.000000e+00> : vector<8x8xf32>
    %15 = tpu.matmul %10, %12, %cst_13 {dimension_numbers = #tpu.dot_dimension_numbers<[1], [1], [0], [0], [0, 0, 1, 0], [], []>} : vector<8x8xf32>, vector<8x8xf32>, vector<8x8xf32> -> vector<8x8xf32>
    %cst_14 = arith.constant 0.353553385 : f32
    %16 = vector.broadcast %cst_14 : f32 to vector<8x8xf32>
    %17 = arith.mulf %15, %16 : vector<8x8xf32>
    %cst_15 = arith.constant dense<0xFF800000> : vector<8xf32>
    %18 = vector.multi_reduction <maximumf>, %17, %cst_15 [1] : vector<8x8xf32> to vector<8xf32>
    %19 = vector.shape_cast %18 : vector<8xf32> to vector<8x1xf32>
    %20 = vector.broadcast %19 : vector<8x1xf32> to vector<8x8xf32>
    %21 = arith.subf %17, %20 : vector<8x8xf32>
    %22 = math.exp %21 : vector<8x8xf32>
    %cst_16 = arith.constant dense<0.000000e+00> : vector<8xf32>
    %23 = vector.multi_reduction <add>, %22, %cst_16 [1] : vector<8x8xf32> to vector<8xf32>
    %24 = vector.shape_cast %23 : vector<8xf32> to vector<8x1xf32>
    %25 = tpu.reciprocal %24 {approx = true} : vector<8x1xf32> -> vector<8x1xf32>
    %26 = vector.broadcast %25 : vector<8x1xf32> to vector<8x8xf32>
    %27 = arith.mulf %22, %26 : vector<8x8xf32>
    %cst_17 = arith.constant dense<0.000000e+00> : vector<8x8xf32>
    %28 = tpu.matmul %27, %14, %cst_17 {dimension_numbers = #tpu.dot_dimension_numbers<[1], [0], [0], [1], [0, 0, 1, 1], [], []>} : vector<8x8xf32>, vector<8x8xf32>, vector<8x8xf32> -> vector<8x8xf32>
    %c0_18 = arith.constant 0 : index
    %c0_19 = arith.constant 0 : index
    %29 = vector.load %arg15[%c0_18, %c0_19] : memref<8x32xf32, #tpu.memory_space<vmem>>, vector<8x8xf32>
    tpu.vector_store %arg15[%c0_18, %c0_19], %28 {strides = array<i32>} : memref<8x32xf32, #tpu.memory_space<vmem>>, vector<8x8xf32>,
    %30 = vector.extract_strided_slice %9 {offsets = [0, 8], sizes = [8, 8], strides = [1, 1]} : vector<8x32xf32> to vector<8x8xf32>
    %c1 = arith.constant 1 : index
    %c0_20 = arith.constant 0 : index
    %c0_21 = arith.constant 0 : index
    %31 = vector.load %arg13[%c1, %c0_20, %c0_21] : memref<4x8x8xf32, #tpu.memory_space<vmem>>, vector<1x8x8xf32>
    %32 = vector.shape_cast %31 : vector<1x8x8xf32> to vector<8x8xf32>
    %c1_22 = arith.constant 1 : index
    %c0_23 = arith.constant 0 : index
    %c0_24 = arith.constant 0 : index
    %33 = vector.load %arg14[%c1_22, %c0_23, %c0_24] : memref<4x8x8xf32, #tpu.memory_space<vmem>>, vector<1x8x8xf32>
    %34 = vector.shape_cast %33 : vector<1x8x8xf32> to vector<8x8xf32>
    %cst_25 = arith.constant dense<0.000000e+00> : vector<8x8xf32>
    %35 = tpu.matmul %30, %32, %cst_25 {dimension_numbers = #tpu.dot_dimension_numbers<[1], [1], [0], [0], [0, 0, 1, 0], [], []>} : vector<8x8xf32>, vector<8x8xf32>, vector<8x8xf32> -> vector<8x8xf32>
    %cst_26 = arith.constant 0.353553385 : f32
    %36 = vector.broadcast %cst_26 : f32 to vector<8x8xf32>
    %37 = arith.mulf %35, %36 : vector<8x8xf32>
    %cst_27 = arith.constant dense<0xFF800000> : vector<8xf32>
    %38 = vector.multi_reduction <maximumf>, %37, %cst_27 [1] : vector<8x8xf32> to vector<8xf32>
    %39 = vector.shape_cast %38 : vector<8xf32> to vector<8x1xf32>
    %40 = vector.broadcast %39 : vector<8x1xf32> to vector<8x8xf32>
    %41 = arith.subf %37, %40 : vector<8x8xf32>
    %42 = math.exp %41 : vector<8x8xf32>
    %cst_28 = arith.constant dense<0.000000e+00> : vector<8xf32>
    %43 = vector.multi_reduction <add>, %42, %cst_28 [1] : vector<8x8xf32> to vector<8xf32>
    %44 = vector.shape_cast %43 : vector<8xf32> to vector<8x1xf32>
    %45 = tpu.reciprocal %44 {approx = true} : vector<8x1xf32> -> vector<8x1xf32>
    %46 = vector.broadcast %45 : vector<8x1xf32> to vector<8x8xf32>
    %47 = arith.mulf %42, %46 : vector<8x8xf32>
    %cst_29 = arith.constant dense<0.000000e+00> : vector<8x8xf32>
    %48 = tpu.matmul %47, %34, %cst_29 {dimension_numbers = #tpu.dot_dimension_numbers<[1], [0], [0], [1], [0, 0, 1, 1], [], []>} : vector<8x8xf32>, vector<8x8xf32>, vector<8x8xf32> -> vector<8x8xf32>
    %c0_30 = arith.constant 0 : index
    %c8 = arith.constant 8 : index
    %49 = vector.load %arg15[%c0_30, %c8] : memref<8x32xf32, #tpu.memory_space<vmem>>, vector<8x8xf32>
    tpu.vector_store %arg15[%c0_30, %c8], %48 {strides = array<i32>} : memref<8x32xf32, #tpu.memory_space<vmem>>, vector<8x8xf32>,
    %50 = vector.extract_strided_slice %9 {offsets = [0, 16], sizes = [8, 8], strides = [1, 1]} : vector<8x32xf32> to vector<8x8xf32>
    %c2 = arith.constant 2 : index
    %c0_31 = arith.constant 0 : index
    %c0_32 = arith.constant 0 : index
    %51 = vector.load %arg13[%c2, %c0_31, %c0_32] : memref<4x8x8xf32, #tpu.memory_space<vmem>>, vector<1x8x8xf32>
    %52 = vector.shape_cast %51 : vector<1x8x8xf32> to vector<8x8xf32>
    %c2_33 = arith.constant 2 : index
    %c0_34 = arith.constant 0 : index
    %c0_35 = arith.constant 0 : index
    %53 = vector.load %arg14[%c2_33, %c0_34, %c0_35] : memref<4x8x8xf32, #tpu.memory_space<vmem>>, vector<1x8x8xf32>
    %54 = vector.shape_cast %53 : vector<1x8x8xf32> to vector<8x8xf32>
    %cst_36 = arith.constant dense<0.000000e+00> : vector<8x8xf32>
    %55 = tpu.matmul %50, %52, %cst_36 {dimension_numbers = #tpu.dot_dimension_numbers<[1], [1], [0], [0], [0, 0, 1, 0], [], []>} : vector<8x8xf32>, vector<8x8xf32>, vector<8x8xf32> -> vector<8x8xf32>
    %cst_37 = arith.constant 0.353553385 : f32
    %56 = vector.broadcast %cst_37 : f32 to vector<8x8xf32>
    %57 = arith.mulf %55, %56 : vector<8x8xf32>
    %cst_38 = arith.constant dense<0xFF800000> : vector<8xf32>
    %58 = vector.multi_reduction <maximumf>, %57, %cst_38 [1] : vector<8x8xf32> to vector<8xf32>
    %59 = vector.shape_cast %58 : vector<8xf32> to vector<8x1xf32>
    %60 = vector.broadcast %59 : vector<8x1xf32> to vector<8x8xf32>
    %61 = arith.subf %57, %60 : vector<8x8xf32>
    %62 = math.exp %61 : vector<8x8xf32>
    %cst_39 = arith.constant dense<0.000000e+00> : vector<8xf32>
    %63 = vector.multi_reduction <add>, %62, %cst_39 [1] : vector<8x8xf32> to vector<8xf32>
    %64 = vector.shape_cast %63 : vector<8xf32> to vector<8x1xf32>
    %65 = tpu.reciprocal %64 {approx = true} : vector<8x1xf32> -> vector<8x1xf32>
    %66 = vector.broadcast %65 : vector<8x1xf32> to vector<8x8xf32>
    %67 = arith.mulf %62, %66 : vector<8x8xf32>
    %cst_40 = arith.constant dense<0.000000e+00> : vector<8x8xf32>
    %68 = tpu.matmul %67, %54, %cst_40 {dimension_numbers = #tpu.dot_dimension_numbers<[1], [0], [0], [1], [0, 0, 1, 1], [], []>} : vector<8x8xf32>, vector<8x8xf32>, vector<8x8xf32> -> vector<8x8xf32>
    %c0_41 = arith.constant 0 : index
    %c16 = arith.constant 16 : index
    %69 = vector.load %arg15[%c0_41, %c16] : memref<8x32xf32, #tpu.memory_space<vmem>>, vector<8x8xf32>
    tpu.vector_store %arg15[%c0_41, %c16], %68 {strides = array<i32>} : memref<8x32xf32, #tpu.memory_space<vmem>>, vector<8x8xf32>,
    %70 = vector.extract_strided_slice %9 {offsets = [0, 24], sizes = [8, 8], strides = [1, 1]} : vector<8x32xf32> to vector<8x8xf32>
    %c3 = arith.constant 3 : index
    %c0_42 = arith.constant 0 : index
    %c0_43 = arith.constant 0 : index
    %71 = vector.load %arg13[%c3, %c0_42, %c0_43] : memref<4x8x8xf32, #tpu.memory_space<vmem>>, vector<1x8x8xf32>
    %72 = vector.shape_cast %71 : vector<1x8x8xf32> to vector<8x8xf32>
    %c3_44 = arith.constant 3 : index
    %c0_45 = arith.constant 0 : index
    %c0_46 = arith.constant 0 : index
    %73 = vector.load %arg14[%c3_44, %c0_45, %c0_46] : memref<4x8x8xf32, #tpu.memory_space<vmem>>, vector<1x8x8xf32>
    %74 = vector.shape_cast %73 : vector<1x8x8xf32> to vector<8x8xf32>
    %cst_47 = arith.constant dense<0.000000e+00> : vector<8x8xf32>
    %75 = tpu.matmul %70, %72, %cst_47 {dimension_numbers = #tpu.dot_dimension_numbers<[1], [1], [0], [0], [0, 0, 1, 0], [], []>} : vector<8x8xf32>, vector<8x8xf32>, vector<8x8xf32> -> vector<8x8xf32>
    %cst_48 = arith.constant 0.353553385 : f32
    %76 = vector.broadcast %cst_48 : f32 to vector<8x8xf32>
    %77 = arith.mulf %75, %76 : vector<8x8xf32>
    %cst_49 = arith.constant dense<0xFF800000> : vector<8xf32>
    %78 = vector.multi_reduction <maximumf>, %77, %cst_49 [1] : vector<8x8xf32> to vector<8xf32>
    %79 = vector.shape_cast %78 : vector<8xf32> to vector<8x1xf32>
    %80 = vector.broadcast %79 : vector<8x1xf32> to vector<8x8xf32>
    %81 = arith.subf %77, %80 : vector<8x8xf32>
    %82 = math.exp %81 : vector<8x8xf32>
    %cst_50 = arith.constant dense<0.000000e+00> : vector<8xf32>
    %83 = vector.multi_reduction <add>, %82, %cst_50 [1] : vector<8x8xf32> to vector<8xf32>
    %84 = vector.shape_cast %83 : vector<8xf32> to vector<8x1xf32>
    %85 = tpu.reciprocal %84 {approx = true} : vector<8x1xf32> -> vector<8x1xf32>
    %86 = vector.broadcast %85 : vector<8x1xf32> to vector<8x8xf32>
    %87 = arith.mulf %82, %86 : vector<8x8xf32>
    %cst_51 = arith.constant dense<0.000000e+00> : vector<8x8xf32>
    %88 = tpu.matmul %87, %74, %cst_51 {dimension_numbers = #tpu.dot_dimension_numbers<[1], [0], [0], [1], [0, 0, 1, 1], [], []>} : vector<8x8xf32>, vector<8x8xf32>, vector<8x8xf32> -> vector<8x8xf32>
    %c0_52 = arith.constant 0 : index
    %c24 = arith.constant 24 : index
    %89 = vector.load %arg15[%c0_52, %c24] : memref<8x32xf32, #tpu.memory_space<vmem>>, vector<8x8xf32>
    tpu.vector_store %arg15[%c0_52, %c24], %88 {strides = array<i32>} : memref<8x32xf32, #tpu.memory_space<vmem>>, vector<8x8xf32>,
    %c0_53 = arith.constant 0 : index
    %c0_54 = arith.constant 0 : index
    %90 = vector.load %arg15[%c0_53, %c0_54] : memref<8x32xf32, #tpu.memory_space<vmem>>, vector<8x32xf32>
    %c0_55 = arith.constant 0 : index
    %c0_56 = arith.constant 0 : index
    %91 = vector.load %arg10[%c0_55, %c0_56] : memref<32x32xf32, #tpu.memory_space<vmem>>, vector<32x32xf32>
    %cst_57 = arith.constant dense<0.000000e+00> : vector<8x32xf32>
    %92 = tpu.matmul %90, %91, %cst_57 {dimension_numbers = #tpu.dot_dimension_numbers<[1], [0], [0], [1], [0, 0, 1, 1], [], []>} : vector<8x32xf32>, vector<32x32xf32>, vector<8x32xf32> -> vector<8x32xf32>
    %c0_58 = arith.constant 0 : index
    %c0_59 = arith.constant 0 : index
    %93 = vector.load %arg11[%c0_58, %c0_59] : memref<1x32xf32, #tpu.memory_space<vmem>>, vector<1x32xf32>
    %94 = vector.broadcast %93 : vector<1x32xf32> to vector<8x32xf32>
    %95 = arith.addf %92, %94 : vector<8x32xf32>
    %c0_60 = arith.constant 0 : index
    %c0_61 = arith.constant 0 : index
    %c0_62 = arith.constant 0 : index
    %96 = vector.load %arg12[%c0_60, %c0_61, %c0_62] : memref<1x8x32xf32, #tpu.memory_space<vmem>>, vector<1x8x32xf32>
    %97 = vector.shape_cast %96 : vector<1x8x32xf32> to vector<8x32xf32>
    %98 = vector.shape_cast %95 : vector<8x32xf32> to vector<1x8x32xf32>
    tpu.vector_store %arg12[%c0_60, %c0_61, %c0_62], %98 {strides = array<i32>} : memref<1x8x32xf32, #tpu.memory_space<vmem>>, vector<1x8x32xf32>,
    return
  }
  func.func @transform_0(%arg0: i32, %arg1: i32) -> (i32, i32, i32) {
    %c0_i32 = arith.constant 0 : i32
    %c0_i32_0 = arith.constant 0 : i32
    %c0_i32_1 = arith.constant 0 : i32
    return %arg0, %c0_i32, %c0_i32_0 : i32, i32, i32
  }
  func.func @transform_1(%arg0: i32, %arg1: i32) -> (i32, i32, i32) {
    %c0_i32 = arith.constant 0 : i32
    %c0_i32_0 = arith.constant 0 : i32
    return %arg0, %arg1, %c0_i32 : i32, i32, i32
  }
  func.func @transform_2(%arg0: i32, %arg1: i32) -> (i32, i32) {
    %c0_i32 = arith.constant 0 : i32
    %c0_i32_0 = arith.constant 0 : i32
    %c0_i32_1 = arith.constant 0 : i32
    return %c0_i32, %c0_i32_0 : i32, i32
  }
  func.func @transform_3(%arg0: i32, %arg1: i32) -> (i32, i32) {
    %c0_i32 = arith.constant 0 : i32
    %c0_i32_0 = arith.constant 0 : i32
    %c0_i32_1 = arith.constant 0 : i32
    return %c0_i32, %c0_i32_0 : i32, i32
  }
  func.func @transform_4(%arg0: i32, %arg1: i32) -> (i32, i32) {
    %c0_i32 = arith.constant 0 : i32
    %c0_i32_0 = arith.constant 0 : i32
    %c0_i32_1 = arith.constant 0 : i32
    return %c0_i32, %c0_i32_0 : i32, i32
  }
  func.func @transform_5(%arg0: i32, %arg1: i32) -> (i32, i32) {
    %c0_i32 = arith.constant 0 : i32
    %c0_i32_0 = arith.constant 0 : i32
    %c0_i32_1 = arith.constant 0 : i32
    return %c0_i32, %c0_i32_0 : i32, i32
  }
  func.func @transform_6(%arg0: i32, %arg1: i32) -> (i32, i32) {
    %c0_i32 = arith.constant 0 : i32
    %c0_i32_0 = arith.constant 0 : i32
    %c0_i32_1 = arith.constant 0 : i32
    return %c0_i32, %c0_i32_0 : i32, i32
  }
  func.func @transform_7(%arg0: i32, %arg1: i32) -> (i32, i32) {
    %c0_i32 = arith.constant 0 : i32
    %c0_i32_0 = arith.constant 0 : i32
    %c0_i32_1 = arith.constant 0 : i32
    return %c0_i32, %c0_i32_0 : i32, i32
  }
  func.func @transform_8(%arg0: i32, %arg1: i32) -> (i32, i32) {
    %c0_i32 = arith.constant 0 : i32
    %c0_i32_0 = arith.constant 0 : i32
    %c0_i32_1 = arith.constant 0 : i32
    return %c0_i32, %c0_i32_0 : i32, i32
  }
  func.func @transform_9(%arg0: i32, %arg1: i32) -> (i32, i32) {
    %c0_i32 = arith.constant 0 : i32
    %c0_i32_0 = arith.constant 0 : i32
    %c0_i32_1 = arith.constant 0 : i32
    return %c0_i32, %c0_i32_0 : i32, i32
  }
  func.func @transform_10(%arg0: i32, %arg1: i32) -> (i32, i32, i32) {
    %c0_i32 = arith.constant 0 : i32
    %c0_i32_0 = arith.constant 0 : i32
    return %arg0, %arg1, %c0_i32 : i32, i32, i32
  }
}

module attributes {stable_mosaic.version = 11 : i64} {
  func.func @_attention_kernel(%arg0: i32, %arg1: i32, %arg2: memref<1x8x32xf32, #tpu.memory_space<vmem>>, %arg3: memref<1x8x32xf32, #tpu.memory_space<vmem>>, %arg4: memref<32x32xf32, #tpu.memory_space<vmem>>, %arg5: memref<1x32xf32, #tpu.memory_space<vmem>>, %arg6: memref<32x32xf32, #tpu.memory_space<vmem>>, %arg7: memref<1x32xf32, #tpu.memory_space<vmem>>, %arg8: memref<32x32xf32, #tpu.memory_space<vmem>>, %arg9: memref<1x32xf32, #tpu.memory_space<vmem>>, %arg10: memref<32x32xf32, #tpu.memory_space<vmem>>, %arg11: memref<1x32xf32, #tpu.memory_space<vmem>>, %arg12: memref<1x8x32xf32, #tpu.memory_space<vmem>>, %arg13: memref<4x8x8xf32, #tpu.memory_space<vmem>>, %arg14: memref<4x8x8xf32, #tpu.memory_space<vmem>>, %arg15: memref<8x32xf32, #tpu.memory_space<vmem>>) attributes {dimension_semantics = [#tpu.dimension_semantics<parallel>, #tpu.dimension_semantics<arbitrary>], iteration_bounds = array<i64: 2, 1>, scalar_prefetch = 0 : i64, scratch_operands = 3 : i64, tpu.core_type = #tpu.core_type<tc>, window_params = [{transform_indices = @transform_0, window_bounds = array<i64: 1, 8, 32>}, {transform_indices = @transform_1, window_bounds = array<i64: 1, 8, 32>}, {pipeline_mode = #tpu.pipeline_mode<synchronous>, transform_indices = @transform_2, window_bounds = array<i64: 32, 32>}, {pipeline_mode = #tpu.pipeline_mode<synchronous>, transform_indices = @transform_3, window_bounds = array<i64: 1, 32>}, {pipeline_mode = #tpu.pipeline_mode<synchronous>, transform_indices = @transform_4, window_bounds = array<i64: 32, 32>}, {pipeline_mode = #tpu.pipeline_mode<synchronous>, transform_indices = @transform_5, window_bounds = array<i64: 1, 32>}, {pipeline_mode = #tpu.pipeline_mode<synchronous>, transform_indices = @transform_6, window_bounds = array<i64: 32, 32>}, {pipeline_mode = #tpu.pipeline_mode<synchronous>, transform_indices = @transform_7, window_bounds = array<i64: 1, 32>}, {pipeline_mode = #tpu.pipeline_mode<synchronous>, transform_indices = @transform_8, window_bounds = array<i64: 32, 32>}, {pipeline_mode = #tpu.pipeline_mode<synchronous>, transform_indices = @transform_9, window_bounds = array<i64: 1, 32>}, {transform_indices = @transform_10, window_bounds = array<i64: 1, 8, 32>}]} {
    %c0_i32 = arith.constant 0 : i32
    %0 = arith.cmpi eq, %arg1, %c0_i32 : i32
    %1 = arith.extui %0 : i1 to i32
    %c0_i32_0 = arith.constant 0 : i32
    %2 = arith.cmpi ne, %1, %c0_i32_0 : i32
    scf.if %2 {
      %c0_63 = arith.constant 0 : index
      %c0_64 = arith.constant 0 : index
      %c0_65 = arith.constant 0 : index
      %99 = vector.load %arg2[%c0_63, %c0_64, %c0_65] : memref<1x8x32xf32, #tpu.memory_space<vmem>>, vector<1x8x32xf32>
      %100 = vector.shape_cast %99 : vector<1x8x32xf32> to vector<8x32xf32>
      %c0_66 = arith.constant 0 : index
      %c0_67 = arith.constant 0 : index
      %101 = vector.load %arg6[%c0_66, %c0_67] : memref<32x32xf32, #tpu.memory_space<vmem>>, vector<32x32xf32>
      %cst_68 = arith.constant dense<0.000000e+00> : vector<8x32xf32>
      %102 = tpu.matmul %100, %101, %cst_68 {dimension_numbers = #tpu.dot_dimension_numbers<[1], [0], [0], [1], [0, 0, 1, 1], [], []>} : vector<8x32xf32>, vector<32x32xf32>, vector<8x32xf32> -> vector<8x32xf32>
      %c0_69 = arith.constant 0 : index
      %c0_70 = arith.constant 0 : index
      %103 = vector.load %arg7[%c0_69, %c0_70] : memref<1x32xf32, #tpu.memory_space<vmem>>, vector<1x32xf32>
      %104 = vector.broadcast %103 : vector<1x32xf32> to vector<8x32xf32>
      %105 = arith.addf %102, %104 : vector<8x32xf32>
      %106 = vector.extract_strided_slice %105 {offsets = [0, 0], sizes = [8, 8], strides = [1, 1]} : vector<8x32xf32> to vector<8x8xf32>
      %c0_71 = arith.constant 0 : index
      %c0_72 = arith.constant 0 : index
      %c0_73 = arith.constant 0 : index
      %107 = vector.load %arg13[%c0_71, %c0_72, %c0_73] : memref<4x8x8xf32, #tpu.memory_space<vmem>>, vector<1x8x8xf32>
      %108 = vector.shape_cast %107 : vector<1x8x8xf32> to vector<8x8xf32>
      %109 = vector.shape_cast %106 : vector<8x8xf32> to vector<1x8x8xf32>
      tpu.vector_store %arg13[%c0_71, %c0_72, %c0_73], %109 {strides = array<i32>} : memref<4x8x8xf32, #tpu.memory_space<vmem>>, vector<1x8x8xf32>,
      %110 = vector.extract_strided_slice %105 {offsets = [0, 8], sizes = [8, 8], strides = [1, 1]} : vector<8x32xf32> to vector<8x8xf32>
      %c1_74 = arith.constant 1 : index
      %c0_75 = arith.constant 0 : index
      %c0_76 = arith.constant 0 : index
      %111 = vector.load %arg13[%c1_74, %c0_75, %c0_76] : memref<4x8x8xf32, #tpu.memory_space<vmem>>, vector<1x8x8xf32>
      %112 = vector.shape_cast %111 : vector<1x8x8xf32> to vector<8x8xf32>
      %113 = vector.shape_cast %110 : vector<8x8xf32> to vector<1x8x8xf32>
      tpu.vector_store %arg13[%c1_74, %c0_75, %c0_76], %113 {strides = array<i32>} : memref<4x8x8xf32, #tpu.memory_space<vmem>>, vector<1x8x8xf32>,
      %114 = vector.extract_strided_slice %105 {offsets = [0, 16], sizes = [8, 8], strides = [1, 1]} : vector<8x32xf32> to vector<8x8xf32>
      %c2_77 = arith.constant 2 : index
      %c0_78 = arith.constant 0 : index
      %c0_79 = arith.constant 0 : index
      %115 = vector.load %arg13[%c2_77, %c0_78, %c0_79] : memref<4x8x8xf32, #tpu.memory_space<vmem>>, vector<1x8x8xf32>
      %116 = vector.shape_cast %115 : vector<1x8x8xf32> to vector<8x8xf32>
      %117 = vector.shape_cast %114 : vector<8x8xf32> to vector<1x8x8xf32>
      tpu.vector_store %arg13[%c2_77, %c0_78, %c0_79], %117 {strides = array<i32>} : memref<4x8x8xf32, #tpu.memory_space<vmem>>, vector<1x8x8xf32>,
      %118 = vector.extract_strided_slice %105 {offsets = [0, 24], sizes = [8, 8], strides = [1, 1]} : vector<8x32xf32> to vector<8x8xf32>
      %c3_80 = arith.constant 3 : index
      %c0_81 = arith.constant 0 : index
      %c0_82 = arith.constant 0 : index
      %119 = vector.load %arg13[%c3_80, %c0_81, %c0_82] : memref<4x8x8xf32, #tpu.memory_space<vmem>>, vector<1x8x8xf32>
      %120 = vector.shape_cast %119 : vector<1x8x8xf32> to vector<8x8xf32>
      %121 = vector.shape_cast %118 : vector<8x8xf32> to vector<1x8x8xf32>
      tpu.vector_store %arg13[%c3_80, %c0_81, %c0_82], %121 {strides = array<i32>} : memref<4x8x8xf32, #tpu.memory_space<vmem>>, vector<1x8x8xf32>,
      %c0_83 = arith.constant 0 : index
      %c0_84 = arith.constant 0 : index
      %122 = vector.load %arg8[%c0_83, %c0_84] : memref<32x32xf32, #tpu.memory_space<vmem>>, vector<32x32xf32>
      %cst_85 = arith.constant dense<0.000000e+00> : vector<8x32xf32>
      %123 = tpu.matmul %100, %122, %cst_85 {dimension_numbers = #tpu.dot_dimension_numbers<[1], [0], [0], [1], [0, 0, 1, 1], [], []>} : vector<8x32xf32>, vector<32x32xf32>, vector<8x32xf32> -> vector<8x32xf32>
      %c0_86 = arith.constant 0 : index
      %c0_87 = arith.constant 0 : index
      %124 = vector.load %arg9[%c0_86, %c0_87] : memref<1x32xf32, #tpu.memory_space<vmem>>, vector<1x32xf32>
      %125 = vector.broadcast %124 : vector<1x32xf32> to vector<8x32xf32>
      %126 = arith.addf %123, %125 : vector<8x32xf32>
      %127 = vector.extract_strided_slice %126 {offsets = [0, 0], sizes = [8, 8], strides = [1, 1]} : vector<8x32xf32> to vector<8x8xf32>
      %c0_88 = arith.constant 0 : index
      %c0_89 = arith.constant 0 : index
      %c0_90 = arith.constant 0 : index
      %128 = vector.load %arg14[%c0_88, %c0_89, %c0_90] : memref<4x8x8xf32, #tpu.memory_space<vmem>>, vector<1x8x8xf32>
      %129 = vector.shape_cast %128 : vector<1x8x8xf32> to vector<8x8xf32>
      %130 = vector.shape_cast %127 : vector<8x8xf32> to vector<1x8x8xf32>
      tpu.vector_store %arg14[%c0_88, %c0_89, %c0_90], %130 {strides = array<i32>} : memref<4x8x8xf32, #tpu.memory_space<vmem>>, vector<1x8x8xf32>,
      %131 = vector.extract_strided_slice %126 {offsets = [0, 8], sizes = [8, 8], strides = [1, 1]} : vector<8x32xf32> to vector<8x8xf32>
      %c1_91 = arith.constant 1 : index
      %c0_92 = arith.constant 0 : index
      %c0_93 = arith.constant 0 : index
      %132 = vector.load %arg14[%c1_91, %c0_92, %c0_93] : memref<4x8x8xf32, #tpu.memory_space<vmem>>, vector<1x8x8xf32>
      %133 = vector.shape_cast %132 : vector<1x8x8xf32> to vector<8x8xf32>
      %134 = vector.shape_cast %131 : vector<8x8xf32> to vector<1x8x8xf32>
      tpu.vector_store %arg14[%c1_91, %c0_92, %c0_93], %134 {strides = array<i32>} : memref<4x8x8xf32, #tpu.memory_space<vmem>>, vector<1x8x8xf32>,
      %135 = vector.extract_strided_slice %126 {offsets = [0, 16], sizes = [8, 8], strides = [1, 1]} : vector<8x32xf32> to vector<8x8xf32>
      %c2_94 = arith.constant 2 : index
      %c0_95 = arith.constant 0 : index
      %c0_96 = arith.constant 0 : index
      %136 = vector.load %arg14[%c2_94, %c0_95, %c0_96] : memref<4x8x8xf32, #tpu.memory_space<vmem>>, vector<1x8x8xf32>
      %137 = vector.shape_cast %136 : vector<1x8x8xf32> to vector<8x8xf32>
      %138 = vector.shape_cast %135 : vector<8x8xf32> to vector<1x8x8xf32>
      tpu.vector_store %arg14[%c2_94, %c0_95, %c0_96], %138 {strides = array<i32>} : memref<4x8x8xf32, #tpu.memory_space<vmem>>, vector<1x8x8xf32>,
      %139 = vector.extract_strided_slice %126 {offsets = [0, 24], sizes = [8, 8], strides = [1, 1]} : vector<8x32xf32> to vector<8x8xf32>
      %c3_97 = arith.constant 3 : index
      %c0_98 = arith.constant 0 : index
      %c0_99 = arith.constant 0 : index
      %140 = vector.load %arg14[%c3_97, %c0_98, %c0_99] : memref<4x8x8xf32, #tpu.memory_space<vmem>>, vector<1x8x8xf32>
      %141 = vector.shape_cast %140 : vector<1x8x8xf32> to vector<8x8xf32>
      %142 = vector.shape_cast %139 : vector<8x8xf32> to vector<1x8x8xf32>
      tpu.vector_store %arg14[%c3_97, %c0_98, %c0_99], %142 {strides = array<i32>} : memref<4x8x8xf32, #tpu.memory_space<vmem>>, vector<1x8x8xf32>,
    } else {
    }
    %c0 = arith.constant 0 : index
    %c0_1 = arith.constant 0 : index
    %c0_2 = arith.constant 0 : index
    %3 = vector.load %arg3[%c0, %c0_1, %c0_2] : memref<1x8x32xf32, #tpu.memory_space<vmem>>, vector<1x8x32xf32>
    %4 = vector.shape_cast %3 : vector<1x8x32xf32> to vector<8x32xf32>
    %c0_3 = arith.constant 0 : index
    %c0_4 = arith.constant 0 : index
    %5 = vector.load %arg4[%c0_3, %c0_4] : memref<32x32xf32, #tpu.memory_space<vmem>>, vector<32x32xf32>
    %cst = arith.constant dense<0.000000e+00> : vector<8x32xf32>
    %6 = tpu.matmul %4, %5, %cst {dimension_numbers = #tpu.dot_dimension_numbers<[1], [0], [0], [1], [0, 0, 1, 1], [], []>} : vector<8x32xf32>, vector<32x32xf32>, vector<8x32xf32> -> vector<8x32xf32>
    %c0_5 = arith.constant 0 : index
    %c0_6 = arith.constant 0 : index
    %7 = vector.load %arg5[%c0_5, %c0_6] : memref<1x32xf32, #tpu.memory_space<vmem>>, vector<1x32xf32>
    %8 = vector.broadcast %7 : vector<1x32xf32> to vector<8x32xf32>
    %9 = arith.addf %6, %8 : vector<8x32xf32>
    %10 = vector.extract_strided_slice %9 {offsets = [0, 0], sizes = [8, 8], strides = [1, 1]} : vector<8x32xf32> to vector<8x8xf32>
    %c0_7 = arith.constant 0 : index
    %c0_8 = arith.constant 0 : index
    %c0_9 = arith.constant 0 : index
    %11 = vector.load %arg13[%c0_7, %c0_8, %c0_9] : memref<4x8x8xf32, #tpu.memory_space<vmem>>, vector<1x8x8xf32>
    %12 = vector.shape_cast %11 : vector<1x8x8xf32> to vector<8x8xf32>
    %c0_10 = arith.constant 0 : index
    %c0_11 = arith.constant 0 : index
    %c0_12 = arith.constant 0 : index
    %13 = vector.load %arg14[%c0_10, %c0_11, %c0_12] : memref<4x8x8xf32, #tpu.memory_space<vmem>>, vector<1x8x8xf32>
    %14 = vector.shape_cast %13 : vector<1x8x8xf32> to vector<8x8xf32>
    %cst_13 = arith.constant dense<0.000000e+00> : vector<8x8xf32>
    %15 = tpu.matmul %10, %12, %cst_13 {dimension_numbers = #tpu.dot_dimension_numbers<[1], [1], [0], [0], [0, 0, 1, 0], [], []>} : vector<8x8xf32>, vector<8x8xf32>, vector<8x8xf32> -> vector<8x8xf32>
    %cst_14 = arith.constant 0.353553385 : f32
    %16 = vector.broadcast %cst_14 : f32 to vector<8x8xf32>
    %17 = arith.mulf %15, %16 : vector<8x8xf32>
    %cst_15 = arith.constant dense<0xFF800000> : vector<8xf32>
    %18 = vector.multi_reduction <maximumf>, %17, %cst_15 [1] : vector<8x8xf32> to vector<8xf32>
    %19 = vector.shape_cast %18 : vector<8xf32> to vector<8x1xf32>
    %20 = vector.broadcast %19 : vector<8x1xf32> to vector<8x8xf32>
    %21 = arith.subf %17, %20 : vector<8x8xf32>
    %22 = math.exp %21 : vector<8x8xf32>
    %cst_16 = arith.constant dense<0.000000e+00> : vector<8xf32>
    %23 = vector.multi_reduction <add>, %22, %cst_16 [1] : vector<8x8xf32> to vector<8xf32>
    %24 = vector.shape_cast %23 : vector<8xf32> to vector<8x1xf32>
    %25 = tpu.reciprocal %24 {approx = true} : vector<8x1xf32> -> vector<8x1xf32>
    %26 = vector.broadcast %25 : vector<8x1xf32> to vector<8x8xf32>
    %27 = arith.mulf %22, %26 : vector<8x8xf32>
    %cst_17 = arith.constant dense<0.000000e+00> : vector<8x8xf32>
    %28 = tpu.matmul %27, %14, %cst_17 {dimension_numbers = #tpu.dot_dimension_numbers<[1], [0], [0], [1], [0, 0, 1, 1], [], []>} : vector<8x8xf32>, vector<8x8xf32>, vector<8x8xf32> -> vector<8x8xf32>
    %c0_18 = arith.constant 0 : index
    %c0_19 = arith.constant 0 : index
    %29 = vector.load %arg15[%c0_18, %c0_19] : memref<8x32xf32, #tpu.memory_space<vmem>>, vector<8x8xf32>
    tpu.vector_store %arg15[%c0_18, %c0_19], %28 {strides = array<i32>} : memref<8x32xf32, #tpu.memory_space<vmem>>, vector<8x8xf32>,
    %30 = vector.extract_strided_slice %9 {offsets = [0, 8], sizes = [8, 8], strides = [1, 1]} : vector<8x32xf32> to vector<8x8xf32>
    %c1 = arith.constant 1 : index
    %c0_20 = arith.constant 0 : index
    %c0_21 = arith.constant 0 : index
    %31 = vector.load %arg13[%c1, %c0_20, %c0_21] : memref<4x8x8xf32, #tpu.memory_space<vmem>>, vector<1x8x8xf32>
    %32 = vector.shape_cast %31 : vector<1x8x8xf32> to vector<8x8xf32>
    %c1_22 = arith.constant 1 : index
    %c0_23 = arith.constant 0 : index
    %c0_24 = arith.constant 0 : index
    %33 = vector.load %arg14[%c1_22, %c0_23, %c0_24] : memref<4x8x8xf32, #tpu.memory_space<vmem>>, vector<1x8x8xf32>
    %34 = vector.shape_cast %33 : vector<1x8x8xf32> to vector<8x8xf32>
    %cst_25 = arith.constant dense<0.000000e+00> : vector<8x8xf32>
    %35 = tpu.matmul %30, %32, %cst_25 {dimension_numbers = #tpu.dot_dimension_numbers<[1], [1], [0], [0], [0, 0, 1, 0], [], []>} : vector<8x8xf32>, vector<8x8xf32>, vector<8x8xf32> -> vector<8x8xf32>
    %cst_26 = arith.constant 0.353553385 : f32
    %36 = vector.broadcast %cst_26 : f32 to vector<8x8xf32>
    %37 = arith.mulf %35, %36 : vector<8x8xf32>
    %cst_27 = arith.constant dense<0xFF800000> : vector<8xf32>
    %38 = vector.multi_reduction <maximumf>, %37, %cst_27 [1] : vector<8x8xf32> to vector<8xf32>
    %39 = vector.shape_cast %38 : vector<8xf32> to vector<8x1xf32>
    %40 = vector.broadcast %39 : vector<8x1xf32> to vector<8x8xf32>
    %41 = arith.subf %37, %40 : vector<8x8xf32>
    %42 = math.exp %41 : vector<8x8xf32>
    %cst_28 = arith.constant dense<0.000000e+00> : vector<8xf32>
    %43 = vector.multi_reduction <add>, %42, %cst_28 [1] : vector<8x8xf32> to vector<8xf32>
    %44 = vector.shape_cast %43 : vector<8xf32> to vector<8x1xf32>
    %45 = tpu.reciprocal %44 {approx = true} : vector<8x1xf32> -> vector<8x1xf32>
    %46 = vector.broadcast %45 : vector<8x1xf32> to vector<8x8xf32>
    %47 = arith.mulf %42, %46 : vector<8x8xf32>
    %cst_29 = arith.constant dense<0.000000e+00> : vector<8x8xf32>
    %48 = tpu.matmul %47, %34, %cst_29 {dimension_numbers = #tpu.dot_dimension_numbers<[1], [0], [0], [1], [0, 0, 1, 1], [], []>} : vector<8x8xf32>, vector<8x8xf32>, vector<8x8xf32> -> vector<8x8xf32>
    %c0_30 = arith.constant 0 : index
    %c8 = arith.constant 8 : index
    %49 = vector.load %arg15[%c0_30, %c8] : memref<8x32xf32, #tpu.memory_space<vmem>>, vector<8x8xf32>
    tpu.vector_store %arg15[%c0_30, %c8], %48 {strides = array<i32>} : memref<8x32xf32, #tpu.memory_space<vmem>>, vector<8x8xf32>,
    %50 = vector.extract_strided_slice %9 {offsets = [0, 16], sizes = [8, 8], strides = [1, 1]} : vector<8x32xf32> to vector<8x8xf32>
    %c2 = arith.constant 2 : index
    %c0_31 = arith.constant 0 : index
    %c0_32 = arith.constant 0 : index
    %51 = vector.load %arg13[%c2, %c0_31, %c0_32] : memref<4x8x8xf32, #tpu.memory_space<vmem>>, vector<1x8x8xf32>
    %52 = vector.shape_cast %51 : vector<1x8x8xf32> to vector<8x8xf32>
    %c2_33 = arith.constant 2 : index
    %c0_34 = arith.constant 0 : index
    %c0_35 = arith.constant 0 : index
    %53 = vector.load %arg14[%c2_33, %c0_34, %c0_35] : memref<4x8x8xf32, #tpu.memory_space<vmem>>, vector<1x8x8xf32>
    %54 = vector.shape_cast %53 : vector<1x8x8xf32> to vector<8x8xf32>
    %cst_36 = arith.constant dense<0.000000e+00> : vector<8x8xf32>
    %55 = tpu.matmul %50, %52, %cst_36 {dimension_numbers = #tpu.dot_dimension_numbers<[1], [1], [0], [0], [0, 0, 1, 0], [], []>} : vector<8x8xf32>, vector<8x8xf32>, vector<8x8xf32> -> vector<8x8xf32>
    %cst_37 = arith.constant 0.353553385 : f32
    %56 = vector.broadcast %cst_37 : f32 to vector<8x8xf32>
    %57 = arith.mulf %55, %56 : vector<8x8xf32>
    %cst_38 = arith.constant dense<0xFF800000> : vector<8xf32>
    %58 = vector.multi_reduction <maximumf>, %57, %cst_38 [1] : vector<8x8xf32> to vector<8xf32>
    %59 = vector.shape_cast %58 : vector<8xf32> to vector<8x1xf32>
    %60 = vector.broadcast %59 : vector<8x1xf32> to vector<8x8xf32>
    %61 = arith.subf %57, %60 : vector<8x8xf32>
    %62 = math.exp %61 : vector<8x8xf32>
    %cst_39 = arith.constant dense<0.000000e+00> : vector<8xf32>
    %63 = vector.multi_reduction <add>, %62, %cst_39 [1] : vector<8x8xf32> to vector<8xf32>
    %64 = vector.shape_cast %63 : vector<8xf32> to vector<8x1xf32>
    %65 = tpu.reciprocal %64 {approx = true} : vector<8x1xf32> -> vector<8x1xf32>
    %66 = vector.broadcast %65 : vector<8x1xf32> to vector<8x8xf32>
    %67 = arith.mulf %62, %66 : vector<8x8xf32>
    %cst_40 = arith.constant dense<0.000000e+00> : vector<8x8xf32>
    %68 = tpu.matmul %67, %54, %cst_40 {dimension_numbers = #tpu.dot_dimension_numbers<[1], [0], [0], [1], [0, 0, 1, 1], [], []>} : vector<8x8xf32>, vector<8x8xf32>, vector<8x8xf32> -> vector<8x8xf32>
    %c0_41 = arith.constant 0 : index
    %c16 = arith.constant 16 : index
    %69 = vector.load %arg15[%c0_41, %c16] : memref<8x32xf32, #tpu.memory_space<vmem>>, vector<8x8xf32>
    tpu.vector_store %arg15[%c0_41, %c16], %68 {strides = array<i32>} : memref<8x32xf32, #tpu.memory_space<vmem>>, vector<8x8xf32>,
    %70 = vector.extract_strided_slice %9 {offsets = [0, 24], sizes = [8, 8], strides = [1, 1]} : vector<8x32xf32> to vector<8x8xf32>
    %c3 = arith.constant 3 : index
    %c0_42 = arith.constant 0 : index
    %c0_43 = arith.constant 0 : index
    %71 = vector.load %arg13[%c3, %c0_42, %c0_43] : memref<4x8x8xf32, #tpu.memory_space<vmem>>, vector<1x8x8xf32>
    %72 = vector.shape_cast %71 : vector<1x8x8xf32> to vector<8x8xf32>
    %c3_44 = arith.constant 3 : index
    %c0_45 = arith.constant 0 : index
    %c0_46 = arith.constant 0 : index
    %73 = vector.load %arg14[%c3_44, %c0_45, %c0_46] : memref<4x8x8xf32, #tpu.memory_space<vmem>>, vector<1x8x8xf32>
    %74 = vector.shape_cast %73 : vector<1x8x8xf32> to vector<8x8xf32>
    %cst_47 = arith.constant dense<0.000000e+00> : vector<8x8xf32>
    %75 = tpu.matmul %70, %72, %cst_47 {dimension_numbers = #tpu.dot_dimension_numbers<[1], [1], [0], [0], [0, 0, 1, 0], [], []>} : vector<8x8xf32>, vector<8x8xf32>, vector<8x8xf32> -> vector<8x8xf32>
    %cst_48 = arith.constant 0.353553385 : f32
    %76 = vector.broadcast %cst_48 : f32 to vector<8x8xf32>
    %77 = arith.mulf %75, %76 : vector<8x8xf32>
    %cst_49 = arith.constant dense<0xFF800000> : vector<8xf32>
    %78 = vector.multi_reduction <maximumf>, %77, %cst_49 [1] : vector<8x8xf32> to vector<8xf32>
    %79 = vector.shape_cast %78 : vector<8xf32> to vector<8x1xf32>
    %80 = vector.broadcast %79 : vector<8x1xf32> to vector<8x8xf32>
    %81 = arith.subf %77, %80 : vector<8x8xf32>
    %82 = math.exp %81 : vector<8x8xf32>
    %cst_50 = arith.constant dense<0.000000e+00> : vector<8xf32>
    %83 = vector.multi_reduction <add>, %82, %cst_50 [1] : vector<8x8xf32> to vector<8xf32>
    %84 = vector.shape_cast %83 : vector<8xf32> to vector<8x1xf32>
    %85 = tpu.reciprocal %84 {approx = true} : vector<8x1xf32> -> vector<8x1xf32>
    %86 = vector.broadcast %85 : vector<8x1xf32> to vector<8x8xf32>
    %87 = arith.mulf %82, %86 : vector<8x8xf32>
    %cst_51 = arith.constant dense<0.000000e+00> : vector<8x8xf32>
    %88 = tpu.matmul %87, %74, %cst_51 {dimension_numbers = #tpu.dot_dimension_numbers<[1], [0], [0], [1], [0, 0, 1, 1], [], []>} : vector<8x8xf32>, vector<8x8xf32>, vector<8x8xf32> -> vector<8x8xf32>
    %c0_52 = arith.constant 0 : index
    %c24 = arith.constant 24 : index
    %89 = vector.load %arg15[%c0_52, %c24] : memref<8x32xf32, #tpu.memory_space<vmem>>, vector<8x8xf32>
    tpu.vector_store %arg15[%c0_52, %c24], %88 {strides = array<i32>} : memref<8x32xf32, #tpu.memory_space<vmem>>, vector<8x8xf32>,
    %c0_53 = arith.constant 0 : index
    %c0_54 = arith.constant 0 : index
    %90 = vector.load %arg15[%c0_53, %c0_54] : memref<8x32xf32, #tpu.memory_space<vmem>>, vector<8x32xf32>
    %c0_55 = arith.constant 0 : index
    %c0_56 = arith.constant 0 : index
    %91 = vector.load %arg10[%c0_55, %c0_56] : memref<32x32xf32, #tpu.memory_space<vmem>>, vector<32x32xf32>
    %cst_57 = arith.constant dense<0.000000e+00> : vector<8x32xf32>
    %92 = tpu.matmul %90, %91, %cst_57 {dimension_numbers = #tpu.dot_dimension_numbers<[1], [0], [0], [1], [0, 0, 1, 1], [], []>} : vector<8x32xf32>, vector<32x32xf32>, vector<8x32xf32> -> vector<8x32xf32>
    %c0_58 = arith.constant 0 : index
    %c0_59 = arith.constant 0 : index
    %93 = vector.load %arg11[%c0_58, %c0_59] : memref<1x32xf32, #tpu.memory_space<vmem>>, vector<1x32xf32>
    %94 = vector.broadcast %93 : vector<1x32xf32> to vector<8x32xf32>
    %95 = arith.addf %92, %94 : vector<8x32xf32>
    %c0_60 = arith.constant 0 : index
    %c0_61 = arith.constant 0 : index
    %c0_62 = arith.constant 0 : index
    %96 = vector.load %arg12[%c0_60, %c0_61, %c0_62] : memref<1x8x32xf32, #tpu.memory_space<vmem>>, vector<1x8x32xf32>
    %97 = vector.shape_cast %96 : vector<1x8x32xf32> to vector<8x32xf32>
    %98 = vector.shape_cast %95 : vector<8x32xf32> to vector<1x8x32xf32>
    tpu.vector_store %arg12[%c0_60, %c0_61, %c0_62], %98 {strides = array<i32>} : memref<1x8x32xf32, #tpu.memory_space<vmem>>, vector<1x8x32xf32>,
    return
  }
  func.func @transform_0(%arg0: i32, %arg1: i32) -> (i32, i32, i32) {
    %c0_i32 = arith.constant 0 : i32
    %c0_i32_0 = arith.constant 0 : i32
    %c0_i32_1 = arith.constant 0 : i32
    return %arg0, %c0_i32, %c0_i32_0 : i32, i32, i32
  }
  func.func @transform_1(%arg0: i32, %arg1: i32) -> (i32, i32, i32) {
    %c0_i32 = arith.constant 0 : i32
    %c0_i32_0 = arith.constant 0 : i32
    return %arg0, %arg1, %c0_i32 : i32, i32, i32
  }
  func.func @transform_2(%arg0: i32, %arg1: i32) -> (i32, i32) {
    %c0_i32 = arith.constant 0 : i32
    %c0_i32_0 = arith.constant 0 : i32
    %c0_i32_1 = arith.constant 0 : i32
    return %c0_i32, %c0_i32_0 : i32, i32
  }
  func.func @transform_3(%arg0: i32, %arg1: i32) -> (i32, i32) {
    %c0_i32 = arith.constant 0 : i32
    %c0_i32_0 = arith.constant 0 : i32
    %c0_i32_1 = arith.constant 0 : i32
    return %c0_i32, %c0_i32_0 : i32, i32
  }
  func.func @transform_4(%arg0: i32, %arg1: i32) -> (i32, i32) {
    %c0_i32 = arith.constant 0 : i32
    %c0_i32_0 = arith.constant 0 : i32
    %c0_i32_1 = arith.constant 0 : i32
    return %c0_i32, %c0_i32_0 : i32, i32
  }
  func.func @transform_5(%arg0: i32, %arg1: i32) -> (i32, i32) {
    %c0_i32 = arith.constant 0 : i32
    %c0_i32_0 = arith.constant 0 : i32
    %c0_i32_1 = arith.constant 0 : i32
    return %c0_i32, %c0_i32_0 : i32, i32
  }
  func.func @transform_6(%arg0: i32, %arg1: i32) -> (i32, i32) {
    %c0_i32 = arith.constant 0 : i32
    %c0_i32_0 = arith.constant 0 : i32
    %c0_i32_1 = arith.constant 0 : i32
    return %c0_i32, %c0_i32_0 : i32, i32
  }
  func.func @transform_7(%arg0: i32, %arg1: i32) -> (i32, i32) {
    %c0_i32 = arith.constant 0 : i32
    %c0_i32_0 = arith.constant 0 : i32
    %c0_i32_1 = arith.constant 0 : i32
    return %c0_i32, %c0_i32_0 : i32, i32
  }
  func.func @transform_8(%arg0: i32, %arg1: i32) -> (i32, i32) {
    %c0_i32 = arith.constant 0 : i32
    %c0_i32_0 = arith.constant 0 : i32
    %c0_i32_1 = arith.constant 0 : i32
    return %c0_i32, %c0_i32_0 : i32, i32
  }
  func.func @transform_9(%arg0: i32, %arg1: i32) -> (i32, i32) {
    %c0_i32 = arith.constant 0 : i32
    %c0_i32_0 = arith.constant 0 : i32
    %c0_i32_1 = arith.constant 0 : i32
    return %c0_i32, %c0_i32_0 : i32, i32
  }
  func.func @transform_10(%arg0: i32, %arg1: i32) -> (i32, i32, i32) {
    %c0_i32 = arith.constant 0 : i32
    %c0_i32_0 = arith.constant 0 : i32
    return %arg0, %arg1, %c0_i32 : i32, i32, i32
  }
}

</mosaic_0001>

<llo_original>
// kernel: tpu_custom_call.1
$region0: #{tpu_custom_call.1}
  #allocation0 [shape = 'u32[]', space=smem, size = 0x4, offset = 0x4, fixed_abs, tag = 'smem constant byte address 0x4 - core index']
  #allocation1 [shape = 'u32[144,128]{1,0:T(1,128)}', space=vmem, size = 0x12000, scoped, tag = 'internal scratch']
  #allocation2 [shape = 'f32[4,8,8]{2,1,0:T(8,128)}', space=vmem, size = 0x4000, scoped, tag = 'scratch operand']
  #allocation3 [shape = 'f32[4,8,8]{2,1,0:T(8,128)}', space=vmem, size = 0x4000, scoped, tag = 'scratch operand']
  #allocation4 [shape = 'f32[8,32]{1,0:T(8,128)}', space=vmem, size = 0x1000, scoped, tag = 'scratch operand']
  %s0 = inlined_call_operand.hbm [shape: f32[2,8,32], index: 0, kind: input, shape index: {}]
  %s1 = inlined_call_operand.hbm [shape: f32[2,8,32], index: 1, kind: input, shape index: {}]
  %s2 = inlined_call_operand.hbm [shape: f32[32,32], index: 2, kind: input, shape index: {}]
  %s3 = inlined_call_operand.vmem [shape: f32[1,32], index: 3, kind: input, shape index: {}]
  %s4 = inlined_call_operand.hbm [shape: f32[32,32], index: 4, kind: input, shape index: {}]
  %s5 = inlined_call_operand.vmem [shape: f32[1,32], index: 5, kind: input, shape index: {}]
  %s6 = inlined_call_operand.hbm [shape: f32[32,32], index: 6, kind: input, shape index: {}]
  %s7 = inlined_call_operand.vmem [shape: f32[1,32], index: 7, kind: input, shape index: {}]
  %s8 = inlined_call_operand.hbm [shape: f32[32,32], index: 8, kind: input, shape index: {}]
  %s9 = inlined_call_operand.vmem [shape: f32[1,32], index: 9, kind: input, shape index: {}]
  %s10 = inlined_call_operand.hbm [shape: f32[2,8,32], index: 10, kind: output, shape index: {}]
  %s11 = sld [smem:[#allocation0]]
  $region101: #{tpu_custom_call.1} parent=0
    _
  %s13 = ssub.s32 1, %s11
  %s14 = scalar_select 0, %s13, %s11
  $region1: #{tpu_custom_call.1} parent=0
    #allocation5 [shape = 'u8[8192]{0}', space=vmem, size = 0x2000, scoped, tag = 'input window, operand 0']
    #allocation6 [shape = 's32[2]{0}', space=sflag, size = 0x8, scoped, tag = 'scoped memory for tpu_custom_call.1']
    #allocation7 [shape = 's32[2]{0}', space=sflag, size = 0x8, scoped, tag = 'scoped memory for tpu_custom_call.1']
    #allocation8 [shape = 'u8[8192]{0}', space=vmem, size = 0x2000, scoped, tag = 'input window, operand 1']
    #allocation9 [shape = 's32[2]{0}', space=sflag, size = 0x8, scoped, tag = 'scoped memory for tpu_custom_call.1']
    #allocation10 [shape = 'u8[16384]{0}', space=vmem, size = 0x4000, scoped, tag = 'input window, operand 2, single buffered']
    #allocation11 [shape = 'u8[16384]{0}', space=vmem, size = 0x4000, scoped, tag = 'input window, operand 4, single buffered']
    #allocation12 [shape = 's32[1]{0}', space=sflag, size = 0x4, scoped, tag = 'scoped memory for tpu_custom_call.1']
    #allocation13 [shape = 'u8[16384]{0}', space=vmem, size = 0x4000, scoped, tag = 'input window, operand 6, single buffered']
    #allocation14 [shape = 'u8[16384]{0}', space=vmem, size = 0x4000, scoped, tag = 'input window, operand 8, single buffered']
    #allocation15 [shape = 's32[1]{0}', space=sflag, size = 0x4, scoped, tag = 'scoped memory for tpu_custom_call.1']
    #allocation16 [shape = 'u8[8192]{0}', space=vmem, size = 0x2000, scoped, tag = 'output window, operand 0']
    %15 = vsyncpa [#allocation6], 0
    %s16 = scalar_lea.sflag [#allocation6], 1
    %17 = vsyncpa %s16, 0
    %18 = vsyncpa [#allocation9], 0
    %s19 = scalar_lea.sflag [#allocation9], 1
    %20 = vsyncpa %s19, 0
    %21 = vsyncpa [#allocation12], 0
    %22 = vsyncpa [#allocation15], 0
    %23 = vsyncpa [#allocation7], 0
    %s24 = scalar_lea.sflag [#allocation7], 1
    %25 = vsyncpa %s24, 0
    loop: start=0, step=1, limit=4
    $region2: #{tpu_custom_call.1} parent=1 // loop_pre_header
      _
    $region3: #{tpu_custom_call.1} parent=1 // loop_header
      %s27 = sphi 0, %s31
      %p28 = scmp.ge.s32.totalorder %s27, 4
      %s34 = sphi 0, %s46
      %s35 = sphi 0, %s42
      %s36 = sphi 0, %s34
      %s37 = sphi 0, %s35
      %s38 = sphi 0, %s36
      %s39 = sphi 0, %s37
      %s49 = sphi 0, %s51
      %s52 = sphi 0, %s49
      %s53 = sphi 0, %s52
      %s69 = sphi 0, %s53
      %s77 = sphi 0, %s79
      %s80 = sphi 0, %s77
      %s81 = sphi 0, %s80
      %s97 = sphi 0, %s81
      %s101 = sphi 0, %s101
      %s103 = sphi 0, %s101
      %s104 = sphi 0, %s103
      %s118 = sphi 0, %s104
      %s122 = sphi 0, %s122
      %s124 = sphi 0, %s122
      %s125 = sphi 0, %s124
      %s139 = sphi 0, %s125
      %s143 = sphi 0, %s143
      %s145 = sphi 0, %s143
      %s146 = sphi 0, %s145
      %s160 = sphi 0, %s146
      %s164 = sphi 0, %s164
      %s166 = sphi 0, %s164
      %s167 = sphi 0, %s166
      %s181 = sphi 0, %s167
      %s185 = sphi 0, %s185
      %s187 = sphi 0, %s185
      %s188 = sphi 0, %s187
      %s202 = sphi 0, %s188
      %s206 = sphi 0, %s206
      %s208 = sphi 0, %s206
      %s209 = sphi 0, %s208
      %s223 = sphi 0, %s209
      %s227 = sphi 0, %s227
      %s229 = sphi 0, %s227
      %s230 = sphi 0, %s229
      %s244 = sphi 0, %s230
      %s248 = sphi 0, %s248
      %s250 = sphi 0, %s248
      %s251 = sphi 0, %s250
      %s265 = sphi 0, %s251
      %s273 = sphi 0, %s275
      %s276 = sphi 0, %s273
      %s277 = sphi 0, %s276
      %s293 = sphi 0, %s277
    $region4: #{tpu_custom_call.1} parent=1 // loop_header_branch
      %30 = sbr.rel (%p28) target = $region8
    $region5: #{tpu_custom_call.1} parent=1 // loop_body
      %s32 = ssub.s32 %s27, 1
      %s33 = ssub.s32 %s27, 2
      %s40 = sadd.s32 1, %s35
      %p41 = scmp.ge.s32.totalorder %s40, 1
      %s42 = scalar_select %p41, 0, %s40
      %s43 = sadd.s32 1, %s34
      %s44 = scalar_select %p41, %s43, %s34
      %p45 = scmp.ge.s32.totalorder %s44, 2
      %s46 = scalar_select %p45, 0, %s44
      %s47 = ssub.s32 %s34, %s46
      %p48 = scmp.eq.s32.totalorder %s47, 0
      %s50 = sadd.s32 %s49, 1
      %s51 = scalar_select %p48, %s49, %s50
      %p54 = pneg %p48
      %p55 = scmp.eq.s32.totalorder %s27, 1
      %p56 = por %p54, %p55
      %p57 = scmp.ne.s32.totalorder %s49, %s52
      %p58 = scmp.eq.s32.totalorder %s27, 0
      %p59 = por %p57, %p58
      %p60 = scmp.ne.s32.totalorder %s49, %s52
      %p61 = scmp.eq.s32.totalorder %s32, 1
      %p62 = por %p60, %p61
      %p63 = scmp.ne.s32.totalorder %s52, %s53
      %p64 = scmp.eq.s32.totalorder %s32, 0
      %p65 = por %p63, %p64
      %p66 = scmp.ne.s32.totalorder %s52, %s53
      %p67 = scmp.eq.s32.totalorder %s33, 1
      %p68 = por %p66, %p67
      %p70 = scmp.ne.s32.totalorder %s53, %s69
      %p71 = scmp.eq.s32.totalorder %s33, 0
      %p72 = por %p70, %p71
      %s73 = ssub.s32 %s34, %s46
      %s74 = ssub.s32 %s35, %s42
      %s75 = sor.u32 %s73, %s74
      %p76 = scmp.eq.s32.totalorder %s75, 0
      %s78 = sadd.s32 %s77, 1
      %s79 = scalar_select %p76, %s77, %s78
      %p82 = pneg %p76
      %p83 = scmp.eq.s32.totalorder %s27, 1
      %p84 = por %p82, %p83
      %p85 = scmp.ne.s32.totalorder %s77, %s80
      %p86 = scmp.eq.s32.totalorder %s27, 0
      %p87 = por %p85, %p86
      %p88 = scmp.ne.s32.totalorder %s77, %s80
      %p89 = scmp.eq.s32.totalorder %s32, 1
      %p90 = por %p88, %p89
      %p91 = scmp.ne.s32.totalorder %s80, %s81
      %p92 = scmp.eq.s32.totalorder %s32, 0
      %p93 = por %p91, %p92
      %p94 = scmp.ne.s32.totalorder %s80, %s81
      %p95 = scmp.eq.s32.totalorder %s33, 1
      %p96 = por %p94, %p95
      %p98 = scmp.ne.s32.totalorder %s81, %s97
      %p99 = scmp.eq.s32.totalorder %s33, 0
      %p100 = por %p98, %p99
      %s102 = sadd.s32 %s101, 1
      %p105 = scmp.eq.s32.totalorder %s27, 1
      %p106 = scmp.ne.s32.totalorder %s101, %s103
      %p107 = scmp.eq.s32.totalorder %s27, 0
      %p108 = por %p106, %p107
      %p109 = scmp.ne.s32.totalorder %s101, %s103
      %p110 = scmp.eq.s32.totalorder %s32, 1
      %p111 = por %p109, %p110
      %p112 = scmp.ne.s32.totalorder %s103, %s104
      %p113 = scmp.eq.s32.totalorder %s32, 0
      %p114 = por %p112, %p113
      %p115 = scmp.ne.s32.totalorder %s103, %s104
      %p116 = scmp.eq.s32.totalorder %s33, 1
      %p117 = por %p115, %p116
      %p119 = scmp.ne.s32.totalorder %s104, %s118
      %p120 = scmp.eq.s32.totalorder %s33, 0
      %p121 = por %p119, %p120
      %s123 = sadd.s32 %s122, 1
      %p126 = scmp.eq.s32.totalorder %s27, 1
      %p127 = scmp.ne.s32.totalorder %s122, %s124
      %p128 = scmp.eq.s32.totalorder %s27, 0
      %p129 = por %p127, %p128
      %p130 = scmp.ne.s32.totalorder %s122, %s124
      %p131 = scmp.eq.s32.totalorder %s32, 1
      %p132 = por %p130, %p131
      %p133 = scmp.ne.s32.totalorder %s124, %s125
      %p134 = scmp.eq.s32.totalorder %s32, 0
      %p135 = por %p133, %p134
      %p136 = scmp.ne.s32.totalorder %s124, %s125
      %p137 = scmp.eq.s32.totalorder %s33, 1
      %p138 = por %p136, %p137
      %p140 = scmp.ne.s32.totalorder %s125, %s139
      %p141 = scmp.eq.s32.totalorder %s33, 0
      %p142 = por %p140, %p141
      %s144 = sadd.s32 %s143, 1
      %p147 = scmp.eq.s32.totalorder %s27, 1
      %p148 = scmp.ne.s32.totalorder %s143, %s145
      %p149 = scmp.eq.s32.totalorder %s27, 0
      %p150 = por %p148, %p149
      %p151 = scmp.ne.s32.totalorder %s143, %s145
      %p152 = scmp.eq.s32.totalorder %s32, 1
      %p153 = por %p151, %p152
      %p154 = scmp.ne.s32.totalorder %s145, %s146
      %p155 = scmp.eq.s32.totalorder %s32, 0
      %p156 = por %p154, %p155
      %p157 = scmp.ne.s32.totalorder %s145, %s146
      %p158 = scmp.eq.s32.totalorder %s33, 1
      %p159 = por %p157, %p158
      %p161 = scmp.ne.s32.totalorder %s146, %s160
      %p162 = scmp.eq.s32.totalorder %s33, 0
      %p163 = por %p161, %p162
      %s165 = sadd.s32 %s164, 1
      %p168 = scmp.eq.s32.totalorder %s27, 1
      %p169 = scmp.ne.s32.totalorder %s164, %s166
      %p170 = scmp.eq.s32.totalorder %s27, 0
      %p171 = por %p169, %p170
      %p172 = scmp.ne.s32.totalorder %s164, %s166
      %p173 = scmp.eq.s32.totalorder %s32, 1
      %p174 = por %p172, %p173
      %p175 = scmp.ne.s32.totalorder %s166, %s167
      %p176 = scmp.eq.s32.totalorder %s32, 0
      %p177 = por %p175, %p176
      %p178 = scmp.ne.s32.totalorder %s166, %s167
      %p179 = scmp.eq.s32.totalorder %s33, 1
      %p180 = por %p178, %p179
      %p182 = scmp.ne.s32.totalorder %s167, %s181
      %p183 = scmp.eq.s32.totalorder %s33, 0
      %p184 = por %p182, %p183
      %s186 = sadd.s32 %s185, 1
      %p189 = scmp.eq.s32.totalorder %s27, 1
      %p190 = scmp.ne.s32.totalorder %s185, %s187
      %p191 = scmp.eq.s32.totalorder %s27, 0
      %p192 = por %p190, %p191
      %p193 = scmp.ne.s32.totalorder %s185, %s187
      %p194 = scmp.eq.s32.totalorder %s32, 1
      %p195 = por %p193, %p194
      %p196 = scmp.ne.s32.totalorder %s187, %s188
      %p197 = scmp.eq.s32.totalorder %s32, 0
      %p198 = por %p196, %p197
      %p199 = scmp.ne.s32.totalorder %s187, %s188
      %p200 = scmp.eq.s32.totalorder %s33, 1
      %p201 = por %p199, %p200
      %p203 = scmp.ne.s32.totalorder %s188, %s202
      %p204 = scmp.eq.s32.totalorder %s33, 0
      %p205 = por %p203, %p204
      %s207 = sadd.s32 %s206, 1
      %p210 = scmp.eq.s32.totalorder %s27, 1
      %p211 = scmp.ne.s32.totalorder %s206, %s208
      %p212 = scmp.eq.s32.totalorder %s27, 0
      %p213 = por %p211, %p212
      %p214 = scmp.ne.s32.totalorder %s206, %s208
      %p215 = scmp.eq.s32.totalorder %s32, 1
      %p216 = por %p214, %p215
      %p217 = scmp.ne.s32.totalorder %s208, %s209
      %p218 = scmp.eq.s32.totalorder %s32, 0
      %p219 = por %p217, %p218
      %p220 = scmp.ne.s32.totalorder %s208, %s209
      %p221 = scmp.eq.s32.totalorder %s33, 1
      %p222 = por %p220, %p221
      %p224 = scmp.ne.s32.totalorder %s209, %s223
      %p225 = scmp.eq.s32.totalorder %s33, 0
      %p226 = por %p224, %p225
      %s228 = sadd.s32 %s227, 1
      %p231 = scmp.eq.s32.totalorder %s27, 1
      %p232 = scmp.ne.s32.totalorder %s227, %s229
      %p233 = scmp.eq.s32.totalorder %s27, 0
      %p234 = por %p232, %p233
      %p235 = scmp.ne.s32.totalorder %s227, %s229
      %p236 = scmp.eq.s32.totalorder %s32, 1
      %p237 = por %p235, %p236
      %p238 = scmp.ne.s32.totalorder %s229, %s230
      %p239 = scmp.eq.s32.totalorder %s32, 0
      %p240 = por %p238, %p239
      %p241 = scmp.ne.s32.totalorder %s229, %s230
      %p242 = scmp.eq.s32.totalorder %s33, 1
      %p243 = por %p241, %p242
      %p245 = scmp.ne.s32.totalorder %s230, %s244
      %p246 = scmp.eq.s32.totalorder %s33, 0
      %p247 = por %p245, %p246
      %s249 = sadd.s32 %s248, 1
      %p252 = scmp.eq.s32.totalorder %s27, 1
      %p253 = scmp.ne.s32.totalorder %s248, %s250
      %p254 = scmp.eq.s32.totalorder %s27, 0
      %p255 = por %p253, %p254
      %p256 = scmp.ne.s32.totalorder %s248, %s250
      %p257 = scmp.eq.s32.totalorder %s32, 1
      %p258 = por %p256, %p257
      %p259 = scmp.ne.s32.totalorder %s250, %s251
      %p260 = scmp.eq.s32.totalorder %s32, 0
      %p261 = por %p259, %p260
      %p262 = scmp.ne.s32.totalorder %s250, %s251
      %p263 = scmp.eq.s32.totalorder %s33, 1
      %p264 = por %p262, %p263
      %p266 = scmp.ne.s32.totalorder %s251, %s265
      %p267 = scmp.eq.s32.totalorder %s33, 0
      %p268 = por %p266, %p267
      %s269 = ssub.s32 %s34, %s46
      %s270 = ssub.s32 %s35, %s42
      %s271 = sor.u32 %s269, %s270
      %p272 = scmp.eq.s32.totalorder %s271, 0
      %s274 = sadd.s32 %s273, 1
      %s275 = scalar_select %p272, %s273, %s274
      %p278 = pneg %p272
      %p279 = scmp.eq.s32.totalorder %s27, 1
      %p280 = por %p278, %p279
      %p281 = scmp.ne.s32.totalorder %s273, %s276
      %p282 = scmp.eq.s32.totalorder %s27, 0
      %p283 = por %p281, %p282
      %p284 = scmp.ne.s32.totalorder %s273, %s276
      %p285 = scmp.eq.s32.totalorder %s32, 1
      %p286 = por %p284, %p285
      %p287 = scmp.ne.s32.totalorder %s276, %s277
      %p288 = scmp.eq.s32.totalorder %s32, 0
      %p289 = por %p287, %p288
      %p290 = scmp.ne.s32.totalorder %s276, %s277
      %p291 = scmp.eq.s32.totalorder %s33, 1
      %p292 = por %p290, %p291
      %p294 = scmp.ne.s32.totalorder %s277, %s293
      %p295 = scmp.eq.s32.totalorder %s33, 0
      %p296 = por %p294, %p295
      %p297 = scmp.le.s32.totalorder 1, %s27
      %p298 = scmp.lt.s32.totalorder %s27, 3
      %p299 = pnand %p297, %p298
      %p300 = pneg %p299
      // Predicated region
      $region9: #{tpu_custom_call.1} parent=5 // pred_check
        _
      $region10: #{tpu_custom_call.1} parent=5 // pred_check_branch
        %302 = sbr.rel (%p299) target = $region12
      $region11: #{tpu_custom_call.1} parent=5 // pred_region
        %s303 = ssub.s32 %s27, 1
        // Predicated region
        $region13: #{tpu_custom_call.1} parent=11 // pred_check
          %p304 = pneg %p114
        $region14: #{tpu_custom_call.1} parent=11 // pred_check_branch
          %306 = sbr.rel (%p304) target = $region16
        $region15: #{tpu_custom_call.1} parent=11 // pred_region
          %s308 = ssub.s32 512, 512
          %309 = vsyncadd [#allocation9], %s308
          %s310 = sshll.u32 [#allocation10], 4
          %s311 = int_to_ptr.vmem [resolvable:$true] %s310
          %316 = dma.hbm_to_vmem [thread:$0]  %s2, 512, %s311, [#allocation9], 128, 128, 8
        $region16: #{tpu_custom_call.1} parent=11 // pred_fallthru
          _
        // Predicated region
        $region17: #{tpu_custom_call.1} parent=11 // pred_check
          %p317 = pneg %p135
        $region18: #{tpu_custom_call.1} parent=11 // pred_check_branch
          %319 = sbr.rel (%p317) target = $region20
        $region19: #{tpu_custom_call.1} parent=11 // pred_region
          _
        $region20: #{tpu_custom_call.1} parent=11 // pred_fallthru
          _
        // Predicated region
        $region21: #{tpu_custom_call.1} parent=11 // pred_check
          %p320 = pneg %p156
        $region22: #{tpu_custom_call.1} parent=11 // pred_check_branch
          %322 = sbr.rel (%p320) target = $region24
        $region23: #{tpu_custom_call.1} parent=11 // pred_region
          %s324 = ssub.s32 512, 512
          %325 = vsyncadd [#allocation12], %s324
          %s326 = sshll.u32 [#allocation11], 4
          %s327 = int_to_ptr.vmem [resolvable:$true] %s326
          %332 = dma.hbm_to_vmem [thread:$0]  %s4, 512, %s327, [#allocation12], 128, 128, 8
        $region24: #{tpu_custom_call.1} parent=11 // pred_fallthru
          _
        // Predicated region
        $region25: #{tpu_custom_call.1} parent=11 // pred_check
          %p333 = pneg %p177
        $region26: #{tpu_custom_call.1} parent=11 // pred_check_branch
          %335 = sbr.rel (%p333) target = $region28
        $region27: #{tpu_custom_call.1} parent=11 // pred_region
          _
        $region28: #{tpu_custom_call.1} parent=11 // pred_fallthru
          _
        // Predicated region
        $region29: #{tpu_custom_call.1} parent=11 // pred_check
          %p336 = pneg %p198
        $region30: #{tpu_custom_call.1} parent=11 // pred_check_branch
          %338 = sbr.rel (%p336) target = $region32
        $region31: #{tpu_custom_call.1} parent=11 // pred_region
          %s340 = ssub.s32 512, 512
          %341 = vsyncadd [#allocation12], %s340
          %s342 = sshll.u32 [#allocation13], 4
          %s343 = int_to_ptr.vmem [resolvable:$true] %s342
          %348 = dma.hbm_to_vmem [thread:$0]  %s6, 512, %s343, [#allocation12], 128, 128, 8
        $region32: #{tpu_custom_call.1} parent=11 // pred_fallthru
          _
        // Predicated region
        $region33: #{tpu_custom_call.1} parent=11 // pred_check
          %p349 = pneg %p219
        $region34: #{tpu_custom_call.1} parent=11 // pred_check_branch
          %351 = sbr.rel (%p349) target = $region36
        $region35: #{tpu_custom_call.1} parent=11 // pred_region
          _
        $region36: #{tpu_custom_call.1} parent=11 // pred_fallthru
          _
        // Predicated region
        $region37: #{tpu_custom_call.1} parent=11 // pred_check
          %p352 = pneg %p240
        $region38: #{tpu_custom_call.1} parent=11 // pred_check_branch
          %354 = sbr.rel (%p352) target = $region40
        $region39: #{tpu_custom_call.1} parent=11 // pred_region
          %s356 = ssub.s32 512, 512
          %357 = vsyncadd [#allocation15], %s356
          %s358 = sshll.u32 [#allocation14], 4
          %s359 = int_to_ptr.vmem [resolvable:$true] %s358
          %364 = dma.hbm_to_vmem [thread:$0]  %s8, 512, %s359, [#allocation15], 128, 128, 8
        $region40: #{tpu_custom_call.1} parent=11 // pred_fallthru
          _
        // Predicated region
        $region41: #{tpu_custom_call.1} parent=11 // pred_check
          %p365 = pneg %p261
        $region42: #{tpu_custom_call.1} parent=11 // pred_check_branch
          %367 = sbr.rel (%p365) target = $region44
        $region43: #{tpu_custom_call.1} parent=11 // pred_region
          _
        $region44: #{tpu_custom_call.1} parent=11 // pred_fallthru
          _
      $region12: #{tpu_custom_call.1} parent=5 // pred_fallthru
        _
      %p368 = scmp.lt.s32.totalorder %s27, 2
      // Predicated region
      $region45: #{tpu_custom_call.1} parent=5 // pred_check
        %p369 = pneg %p368
      $region46: #{tpu_custom_call.1} parent=5 // pred_check_branch
        %371 = sbr.rel (%p369) target = $region48
      $region47: #{tpu_custom_call.1} parent=5 // pred_region
        // Predicated region
        $region49: #{tpu_custom_call.1} parent=47 // pred_check
          %p372 = pneg %p59
        $region50: #{tpu_custom_call.1} parent=47 // pred_check_branch
          %374 = sbr.rel (%p372) target = $region52
        $region51: #{tpu_custom_call.1} parent=47 // pred_region
          %s375 = sand.u32 %s49, 1
          %s376 = scalar_lea.sflag [#allocation6], %s375
          %s377 = sand.u32 %s49, 1
          %s378 = smul.addr %s377, 8
          %s379 = scalar_lea.vmem [#allocation5], %s378
          %s381 = ssub.s32 128, 128
          %382 = vsyncadd %s376, %s381
          %s383 = smul.addr %s34, 128
          %s384 = scalar_lea.hbm %s0, %s383
          %s386 = sshll.u32 %s379, 4
          %s387 = int_to_ptr.vmem [resolvable:$true] %s386
          %389 = dma.hbm_to_vmem [thread:$0]  %s384, 128, %s387, %s376
        $region52: #{tpu_custom_call.1} parent=47 // pred_fallthru
          _
        // Predicated region
        $region53: #{tpu_custom_call.1} parent=47 // pred_check
          %p390 = pneg %p87
        $region54: #{tpu_custom_call.1} parent=47 // pred_check_branch
          %392 = sbr.rel (%p390) target = $region56
        $region55: #{tpu_custom_call.1} parent=47 // pred_region
          %s393 = sand.u32 %s27, 1
          %s394 = scalar_lea.sflag [#allocation9], %s393
          %s395 = sand.u32 %s77, 1
          %s396 = smul.addr %s395, 8
          %s397 = scalar_lea.vmem [#allocation8], %s396
          %s399 = ssub.s32 128, 128
          %400 = vsyncadd %s394, %s399
          %s401 = sadd.s32 %s35, %s34
          %s402 = smul.addr %s401, 128
          %s403 = scalar_lea.hbm %s1, %s402
          %s405 = sshll.u32 %s397, 4
          %s406 = int_to_ptr.vmem [resolvable:$true] %s405
          %408 = dma.hbm_to_vmem [thread:$0]  %s403, 128, %s406, %s394
        $region56: #{tpu_custom_call.1} parent=47 // pred_fallthru
          _
      $region48: #{tpu_custom_call.1} parent=5 // pred_fallthru
        _
      %p409 = scmp.le.s32.totalorder 1, %s27
      %p410 = scmp.lt.s32.totalorder %s27, 3
      %p411 = pnand %p409, %p410
      %p412 = pneg %p411
      // Predicated region
      $region57: #{tpu_custom_call.1} parent=5 // pred_check
        _
      $region58: #{tpu_custom_call.1} parent=5 // pred_check_branch
        %414 = sbr.rel (%p411) target = $region60
      $region59: #{tpu_custom_call.1} parent=5 // pred_region
        %s415 = ssub.s32 %s27, 1
        %s416 = sand.u32 %s52, 1
        %s417 = scalar_lea.sflag [#allocation6], %s416
        %s418 = sand.u32 %s52, 1
        %s419 = smul.addr %s418, 8
        %s420 = scalar_lea.vmem [#allocation5], %s419
        // Predicated region
        $region61: #{tpu_custom_call.1} parent=59 // pred_check
          %p421 = pneg %p65
        $region62: #{tpu_custom_call.1} parent=59 // pred_check_branch
          %423 = sbr.rel (%p421) target = $region64
        $region63: #{tpu_custom_call.1} parent=59 // pred_region
          %424 = dma.done %s417, 128
        $region64: #{tpu_custom_call.1} parent=59 // pred_fallthru
          _
        %s425 = sand.u32 %s32, 1
        %s426 = scalar_lea.sflag [#allocation9], %s425
        %s427 = sand.u32 %s80, 1
        %s428 = smul.addr %s427, 8
        %s429 = scalar_lea.vmem [#allocation8], %s428
        // Predicated region
        $region65: #{tpu_custom_call.1} parent=59 // pred_check
          %p430 = pneg %p93
        $region66: #{tpu_custom_call.1} parent=59 // pred_check_branch
          %432 = sbr.rel (%p430) target = $region68
        $region67: #{tpu_custom_call.1} parent=59 // pred_region
          %433 = dma.done %s426, 128
        $region68: #{tpu_custom_call.1} parent=59 // pred_fallthru
          _
        // Predicated region
        $region69: #{tpu_custom_call.1} parent=59 // pred_check
          %p434 = pneg %p114
        $region70: #{tpu_custom_call.1} parent=59 // pred_check_branch
          %436 = sbr.rel (%p434) target = $region72
        $region71: #{tpu_custom_call.1} parent=59 // pred_region
          %437 = dma.done [#allocation9], 512
        $region72: #{tpu_custom_call.1} parent=59 // pred_fallthru
          _
        // Predicated region
        $region73: #{tpu_custom_call.1} parent=59 // pred_check
          %p438 = pneg %p156
        $region74: #{tpu_custom_call.1} parent=59 // pred_check_branch
          %440 = sbr.rel (%p438) target = $region76
        $region75: #{tpu_custom_call.1} parent=59 // pred_region
          %441 = dma.done [#allocation12], 512
        $region76: #{tpu_custom_call.1} parent=59 // pred_fallthru
          _
        // Predicated region
        $region77: #{tpu_custom_call.1} parent=59 // pred_check
          %p442 = pneg %p198
        $region78: #{tpu_custom_call.1} parent=59 // pred_check_branch
          %444 = sbr.rel (%p442) target = $region80
        $region79: #{tpu_custom_call.1} parent=59 // pred_region
          %445 = dma.done [#allocation12], 512
        $region80: #{tpu_custom_call.1} parent=59 // pred_fallthru
          _
        // Predicated region
        $region81: #{tpu_custom_call.1} parent=59 // pred_check
          %p446 = pneg %p240
        $region82: #{tpu_custom_call.1} parent=59 // pred_check_branch
          %448 = sbr.rel (%p446) target = $region84
        $region83: #{tpu_custom_call.1} parent=59 // pred_region
          %449 = dma.done [#allocation15], 512
        $region84: #{tpu_custom_call.1} parent=59 // pred_fallthru
          _
        %s450 = sand.u32 %s52, 1
        %s451 = scalar_lea.sflag [#allocation6], %s450
        %s452 = sand.u32 %s52, 1
        %s453 = smul.addr %s452, 8
        %s454 = scalar_lea.vmem [#allocation5], %s453
        %p455 = pneg %p65
        %p456 = pneg %p62
        %s457 = sand.u32 %s32, 1
        %s458 = scalar_lea.sflag [#allocation9], %s457
        %s459 = sand.u32 %s80, 1
        %s460 = smul.addr %s459, 8
        %s461 = scalar_lea.vmem [#allocation8], %s460
        %p462 = pneg %p93
        %p463 = pneg %p90
        %p464 = pneg %p114
        %p465 = pneg %p111
        %p466 = pneg %p135
        %p467 = pneg %p132
        %p468 = pneg %p156
        %p469 = pneg %p153
        %p470 = pneg %p177
        %p471 = pneg %p174
        %p472 = pneg %p198
        %p473 = pneg %p195
        %p474 = pneg %p219
        %p475 = pneg %p216
        %p476 = pneg %p240
        %p477 = pneg %p237
        %p478 = pneg %p261
        %p479 = pneg %p258
        %p480 = pneg %p289
        %p481 = pneg %p286
        %s482 = sand.u32 %s276, 1
        %s483 = scalar_lea.sflag [#allocation7], %s482
        %s484 = sand.u32 %s276, 1
        %s485 = smul.addr %s484, 8
        %s486 = scalar_lea.vmem [#allocation16], %s485
        %p487 = scmp.eq.s32.totalorder %s37, 0
        // Predicated region
        $region85: #{tpu_custom_call.1} parent=59 // pred_check
          %p488 = pneg %p487
        $region86: #{tpu_custom_call.1} parent=59 // pred_check_branch
          %490 = sbr.rel (%p488) target = $region88
        $region87: #{tpu_custom_call.1} parent=59 // pred_region
          %v491 = vld [vmem:[%s420] sm:$0xff]
          %v492 = vld [vmem:[#allocation11] sm:$0xff]
          %v493 = vld [vmem:[#allocation11 + $0x8] sm:$0xff]
          %v494 = vld [vmem:[#allocation11 + $0x10] sm:$0xff]
          %v495 = vld [vmem:[#allocation11 + $0x18] sm:$0xff]
          %v496 = vld [vmem:[%s5] sm:$0x1]
          %v498 = vlaneseq
          %v499 = vshrl.u32 %v498, 7
          %v500 = vsub.s32 0, %v499
          %v501 = vrot.slane %v496, %v500
          %vm503 = vcmask 261120
          %v505 = vsel %vm503, %v491, 0
          %507 = vmatprep.subr.mxu0 0.0
          %508 = vmatpush1.msra.mxu0 0.0
          %509 = vmatprep.subr.mxu0 0.0
          %510 = vmatpush1.msra.mxu0 0.0
          %511 = vmatprep.subr.mxu0 0.0
          %512 = vmatpush1.msra.mxu0 0.0
          %513 = vmatprep.subr.mxu0 0.0
          %514 = vmatpush1.msra.mxu0 0.0
          %515 = vmatprep.subr.mxu0 0.0
          %516 = vmatpush1.msra.mxu0 0.0
          %517 = vmatprep.subr.mxu0 0.0
          %518 = vmatpush1.msra.mxu0 0.0
          %519 = vmatprep.subr.mxu0 0.0
          %520 = vmatpush1.msra.mxu0 0.0
          %521 = vmatprep.subr.mxu0 0.0
          %522 = vmatpush1.msra.mxu0 0.0
          %523 = vmatprep.subr.mxu0 0.0
          %524 = vmatpush1.msra.mxu0 0.0
          %525 = vmatprep.subr.mxu0 0.0
          %526 = vmatpush1.msra.mxu0 0.0
          %527 = vmatprep.subr.mxu0 0.0
          %528 = vmatpush1.msra.mxu0 0.0
          %529 = vmatprep.subr.mxu0 0.0
          %530 = vmatpush1.msra.mxu0 0.0
          %531 = vmatprep.subr.mxu0 0.0
          %532 = vmatpush1.msra.mxu0 %v495
          %533 = vmatprep.subr.mxu0 0.0
          %534 = vmatpush1.msra.mxu0 %v494
          %535 = vmatprep.subr.mxu0 0.0
          %536 = vmatpush1.msra.mxu0 %v493
          %537 = vmatprep.subr.mxu0 0.0
          %538 = vmatpush1.msra.mxu0 %v492
          %539 = vmatprep.subr.mxu0 0.0
          %540 = vmatpush2.msra.mxu0 0.0
          %541 = vmatprep.subr.mxu0 0.0
          %542 = vmatpush2.msra.mxu0 0.0
          %543 = vmatprep.subr.mxu0 0.0
          %544 = vmatpush2.msra.mxu0 0.0
          %545 = vmatprep.subr.mxu0 0.0
          %546 = vmatpush2.msra.mxu0 0.0
          %547 = vmatprep.subr.mxu0 0.0
          %548 = vmatpush2.msra.mxu0 0.0
          %549 = vmatprep.subr.mxu0 0.0
          %550 = vmatpush2.msra.mxu0 0.0
          %551 = vmatprep.subr.mxu0 0.0
          %552 = vmatpush2.msra.mxu0 0.0
          %553 = vmatprep.subr.mxu0 0.0
          %554 = vmatpush2.msra.mxu0 0.0
          %555 = vmatprep.subr.mxu0 0.0
          %556 = vmatpush2.msra.mxu0 0.0
          %557 = vmatprep.subr.mxu0 0.0
          %558 = vmatpush2.msra.mxu0 0.0
          %559 = vmatprep.subr.mxu0 0.0
          %560 = vmatpush2.msra.mxu0 0.0
          %561 = vmatprep.subr.mxu0 0.0
          %562 = vmatpush2.msra.mxu0 0.0
          %563 = vmatprep.subr.mxu0 0.0
          %564 = vmatpush2.msra.mxu0 0.0
          %565 = vmatprep.subr.mxu0 0.0
          %566 = vmatpush2.msra.mxu0 0.0
          %567 = vmatprep.subr.mxu0 0.0
          %568 = vmatpush2.msra.mxu0 0.0
          %569 = vmatprep.subr.mxu0 0.0
          %570 = vmatpush2.msra.mxu0 0.0
          %571 = vmatprep.mubr.f32.mxu0 0.0
          %572 = vmatmul.mubr.f32.gmra.mxu0 %v505
          %v573 = vpop.f32.mrf.mxu0
          %v574 = vadd.f32 %v501, %v573
          %v575 = vpop.f32.mrf.mxu0
          %576 = vdwg.mxu0
          %vm577 = vcmask 64512
          %578 = vst.msk [vmem:[#allocation2] sm:$0xff] %vm577, %v574
          %580 = vrot.lane.b32.xlu0 %v574, 120
          %v581 = vpop.permute.xlu0 %580
          %s583 = scalar_lea.vmem [#allocation2], 8
          %584 = vst.msk [vmem:[%s583] sm:$0xff] %vm577, %v581
          %585 = vrot.lane.b32.xlu0 %v574, 112
          %v586 = vpop.permute.xlu0 %585
          %s588 = scalar_lea.vmem [#allocation2], 16
          %589 = vst.msk [vmem:[%s588] sm:$0xff] %vm577, %v586
          %590 = vrot.lane.b32.xlu0 %v574, 104
          %v591 = vpop.permute.xlu0 %590
          %s593 = scalar_lea.vmem [#allocation2], 24
          %594 = vst.msk [vmem:[%s593] sm:$0xff] %vm577, %v591
          %v595 = vld [vmem:[#allocation13] sm:$0xff]
          %v596 = vld [vmem:[#allocation13 + $0x8] sm:$0xff]
          %v597 = vld [vmem:[#allocation13 + $0x10] sm:$0xff]
          %v598 = vld [vmem:[#allocation13 + $0x18] sm:$0xff]
          %v599 = vld [vmem:[%s7] sm:$0x1]
          %v601 = vlaneseq
          %v602 = vshrl.u32 %v601, 7
          %v603 = vsub.s32 0, %v602
          %v604 = vrot.slane %v599, %v603
          %606 = vmatprep.subr.mxu0 0.0
          %607 = vmatpush1.msra.mxu0 0.0
          %608 = vmatprep.subr.mxu0 0.0
          %609 = vmatpush1.msra.mxu0 0.0
          %610 = vmatprep.subr.mxu0 0.0
          %611 = vmatpush1.msra.mxu0 0.0
          %612 = vmatprep.subr.mxu0 0.0
          %613 = vmatpush1.msra.mxu0 0.0
          %614 = vmatprep.subr.mxu0 0.0
          %615 = vmatpush1.msra.mxu0 0.0
          %616 = vmatprep.subr.mxu0 0.0
          %617 = vmatpush1.msra.mxu0 0.0
          %618 = vmatprep.subr.mxu0 0.0
          %619 = vmatpush1.msra.mxu0 0.0
          %620 = vmatprep.subr.mxu0 0.0
          %621 = vmatpush1.msra.mxu0 0.0
          %622 = vmatprep.subr.mxu0 0.0
          %623 = vmatpush1.msra.mxu0 0.0
          %624 = vmatprep.subr.mxu0 0.0
          %625 = vmatpush1.msra.mxu0 0.0
          %626 = vmatprep.subr.mxu0 0.0
          %627 = vmatpush1.msra.mxu0 0.0
          %628 = vmatprep.subr.mxu0 0.0
          %629 = vmatpush1.msra.mxu0 0.0
          %630 = vmatprep.subr.mxu0 0.0
          %631 = vmatpush1.msra.mxu0 %v598
          %632 = vmatprep.subr.mxu0 0.0
          %633 = vmatpush1.msra.mxu0 %v597
          %634 = vmatprep.subr.mxu0 0.0
          %635 = vmatpush1.msra.mxu0 %v596
          %636 = vmatprep.subr.mxu0 0.0
          %637 = vmatpush1.msra.mxu0 %v595
          %638 = vmatprep.subr.mxu0 0.0
          %639 = vmatpush2.msra.mxu0 0.0
          %640 = vmatprep.subr.mxu0 0.0
          %641 = vmatpush2.msra.mxu0 0.0
          %642 = vmatprep.subr.mxu0 0.0
          %643 = vmatpush2.msra.mxu0 0.0
          %644 = vmatprep.subr.mxu0 0.0
          %645 = vmatpush2.msra.mxu0 0.0
          %646 = vmatprep.subr.mxu0 0.0
          %647 = vmatpush2.msra.mxu0 0.0
          %648 = vmatprep.subr.mxu0 0.0
          %649 = vmatpush2.msra.mxu0 0.0
          %650 = vmatprep.subr.mxu0 0.0
          %651 = vmatpush2.msra.mxu0 0.0
          %652 = vmatprep.subr.mxu0 0.0
          %653 = vmatpush2.msra.mxu0 0.0
          %654 = vmatprep.subr.mxu0 0.0
          %655 = vmatpush2.msra.mxu0 0.0
          %656 = vmatprep.subr.mxu0 0.0
          %657 = vmatpush2.msra.mxu0 0.0
          %658 = vmatprep.subr.mxu0 0.0
          %659 = vmatpush2.msra.mxu0 0.0
          %660 = vmatprep.subr.mxu0 0.0
          %661 = vmatpush2.msra.mxu0 0.0
          %662 = vmatprep.subr.mxu0 0.0
          %663 = vmatpush2.msra.mxu0 0.0
          %664 = vmatprep.subr.mxu0 0.0
          %665 = vmatpush2.msra.mxu0 0.0
          %666 = vmatprep.subr.mxu0 0.0
          %667 = vmatpush2.msra.mxu0 0.0
          %668 = vmatprep.subr.mxu0 0.0
          %669 = vmatpush2.msra.mxu0 0.0
          %670 = vmatprep.mubr.f32.mxu0 0.0
          %671 = vmatmul.mubr.f32.gmra.mxu0 %v505
          %v672 = vpop.f32.mrf.mxu0
          %v673 = vadd.f32 %v604, %v672
          %v674 = vpop.f32.mrf.mxu0
          %675 = vdwg.mxu0
          %676 = vst.msk [vmem:[#allocation3] sm:$0xff] %vm577, %v673
          %678 = vrot.lane.b32.xlu0 %v673, 120
          %v679 = vpop.permute.xlu0 %678
          %s681 = scalar_lea.vmem [#allocation3], 8
          %682 = vst.msk [vmem:[%s681] sm:$0xff] %vm577, %v679
          %683 = vrot.lane.b32.xlu0 %v673, 112
          %v684 = vpop.permute.xlu0 %683
          %s686 = scalar_lea.vmem [#allocation3], 16
          %687 = vst.msk [vmem:[%s686] sm:$0xff] %vm577, %v684
          %688 = vrot.lane.b32.xlu0 %v673, 104
          %v689 = vpop.permute.xlu0 %688
          %s691 = scalar_lea.vmem [#allocation3], 24
          %692 = vst.msk [vmem:[%s691] sm:$0xff] %vm577, %v689
        $region88: #{tpu_custom_call.1} parent=59 // pred_fallthru
          _
        %v693 = vld [vmem:[%s429] sm:$0xff]
        %v694 = vld [vmem:[#allocation10] sm:$0xff]
        %v695 = vld [vmem:[#allocation10 + $0x8] sm:$0xff]
        %v696 = vld [vmem:[#allocation10 + $0x10] sm:$0xff]
        %v697 = vld [vmem:[#allocation10 + $0x18] sm:$0xff]
        %v698 = vld [vmem:[%s3] sm:$0x1]
        %v700 = vlaneseq
        %v701 = vshrl.u32 %v700, 7
        %v702 = vsub.s32 0, %v701
        %v703 = vrot.slane %v698, %v702
        %vm705 = vcmask 261120
        %v707 = vsel %vm705, %v693, 0
        %709 = vmatprep.subr.mxu0 0.0
        %710 = vmatpush1.msra.mxu0 0.0
        %711 = vmatprep.subr.mxu0 0.0
        %712 = vmatpush1.msra.mxu0 0.0
        %713 = vmatprep.subr.mxu0 0.0
        %714 = vmatpush1.msra.mxu0 0.0
        %715 = vmatprep.subr.mxu0 0.0
        %716 = vmatpush1.msra.mxu0 0.0
        %717 = vmatprep.subr.mxu0 0.0
        %718 = vmatpush1.msra.mxu0 0.0
        %719 = vmatprep.subr.mxu0 0.0
        %720 = vmatpush1.msra.mxu0 0.0
        %721 = vmatprep.subr.mxu0 0.0
        %722 = vmatpush1.msra.mxu0 0.0
        %723 = vmatprep.subr.mxu0 0.0
        %724 = vmatpush1.msra.mxu0 0.0
        %725 = vmatprep.subr.mxu0 0.0
        %726 = vmatpush1.msra.mxu0 0.0
        %727 = vmatprep.subr.mxu0 0.0
        %728 = vmatpush1.msra.mxu0 0.0
        %729 = vmatprep.subr.mxu0 0.0
        %730 = vmatpush1.msra.mxu0 0.0
        %731 = vmatprep.subr.mxu0 0.0
        %732 = vmatpush1.msra.mxu0 0.0
        %733 = vmatprep.subr.mxu0 0.0
        %734 = vmatpush1.msra.mxu0 %v697
        %735 = vmatprep.subr.mxu0 0.0
        %736 = vmatpush1.msra.mxu0 %v696
        %737 = vmatprep.subr.mxu0 0.0
        %738 = vmatpush1.msra.mxu0 %v695
        %739 = vmatprep.subr.mxu0 0.0
        %740 = vmatpush1.msra.mxu0 %v694
        %741 = vmatprep.subr.mxu0 0.0
        %742 = vmatpush2.msra.mxu0 0.0
        %743 = vmatprep.subr.mxu0 0.0
        %744 = vmatpush2.msra.mxu0 0.0
        %745 = vmatprep.subr.mxu0 0.0
        %746 = vmatpush2.msra.mxu0 0.0
        %747 = vmatprep.subr.mxu0 0.0
        %748 = vmatpush2.msra.mxu0 0.0
        %749 = vmatprep.subr.mxu0 0.0
        %750 = vmatpush2.msra.mxu0 0.0
        %751 = vmatprep.subr.mxu0 0.0
        %752 = vmatpush2.msra.mxu0 0.0
        %753 = vmatprep.subr.mxu0 0.0
        %754 = vmatpush2.msra.mxu0 0.0
        %755 = vmatprep.subr.mxu0 0.0
        %756 = vmatpush2.msra.mxu0 0.0
        %757 = vmatprep.subr.mxu0 0.0
        %758 = vmatpush2.msra.mxu0 0.0
        %759 = vmatprep.subr.mxu0 0.0
        %760 = vmatpush2.msra.mxu0 0.0
        %761 = vmatprep.subr.mxu0 0.0
        %762 = vmatpush2.msra.mxu0 0.0
        %763 = vmatprep.subr.mxu0 0.0
        %764 = vmatpush2.msra.mxu0 0.0
        %765 = vmatprep.subr.mxu0 0.0
        %766 = vmatpush2.msra.mxu0 0.0
        %767 = vmatprep.subr.mxu0 0.0
        %768 = vmatpush2.msra.mxu0 0.0
        %769 = vmatprep.subr.mxu0 0.0
        %770 = vmatpush2.msra.mxu0 0.0
        %771 = vmatprep.subr.mxu0 0.0
        %772 = vmatpush2.msra.mxu0 0.0
        %773 = vmatprep.mubr.f32.mxu0 0.0
        %774 = vmatmul.mubr.f32.gmra.mxu0 %v707
        %v775 = vpop.f32.mrf.mxu0
        %v776 = vadd.f32 %v703, %v775
        %v777 = vpop.f32.mrf.mxu0
        %778 = vdwg.mxu0
        %v779 = vld [vmem:[#allocation2] sm:$0xff]
        %v780 = vld [vmem:[#allocation3] sm:$0xff]
        %vm781 = vcmask 64512
        %v783 = vsel %vm781, %v776, 0
        %v786 = vsel %vm781, %v779, 0
        %788 = vmatprep.subr.mxu0 0.0
        %789 = vmatpush1.xpose.msra.mxu0 0.0
        %790 = vmatprep.subr.mxu0 0.0
        %791 = vmatpush1.xpose.msra.mxu0 0.0
        %792 = vmatprep.subr.mxu0 0.0
        %793 = vmatpush1.xpose.msra.mxu0 0.0
        %794 = vmatprep.subr.mxu0 0.0
        %795 = vmatpush1.xpose.msra.mxu0 0.0
        %796 = vmatprep.subr.mxu0 0.0
        %797 = vmatpush1.xpose.msra.mxu0 0.0
        %798 = vmatprep.subr.mxu0 0.0
        %799 = vmatpush1.xpose.msra.mxu0 0.0
        %800 = vmatprep.subr.mxu0 0.0
        %801 = vmatpush1.xpose.msra.mxu0 0.0
        %802 = vmatprep.subr.mxu0 0.0
        %803 = vmatpush1.xpose.msra.mxu0 0.0
        %804 = vmatprep.subr.mxu0 0.0
        %805 = vmatpush1.xpose.msra.mxu0 0.0
        %806 = vmatprep.subr.mxu0 0.0
        %807 = vmatpush1.xpose.msra.mxu0 0.0
        %808 = vmatprep.subr.mxu0 0.0
        %809 = vmatpush1.xpose.msra.mxu0 0.0
        %810 = vmatprep.subr.mxu0 0.0
        %811 = vmatpush1.xpose.msra.mxu0 0.0
        %812 = vmatprep.subr.mxu0 0.0
        %813 = vmatpush1.xpose.msra.mxu0 0.0
        %814 = vmatprep.subr.mxu0 0.0
        %815 = vmatpush1.xpose.msra.mxu0 0.0
        %816 = vmatprep.subr.mxu0 0.0
        %817 = vmatpush1.xpose.msra.mxu0 0.0
        %818 = vmatprep.subr.mxu0 0.0
        %819 = vmatpush1.xpose.msra.mxu0 %v786
        %820 = vmatprep.subr.mxu0 0.0
        %821 = vmatpush2.xpose.msra.mxu0 0.0
        %822 = vmatprep.subr.mxu0 0.0
        %823 = vmatpush2.xpose.msra.mxu0 0.0
        %824 = vmatprep.subr.mxu0 0.0
        %825 = vmatpush2.xpose.msra.mxu0 0.0
        %826 = vmatprep.subr.mxu0 0.0
        %827 = vmatpush2.xpose.msra.mxu0 0.0
        %828 = vmatprep.subr.mxu0 0.0
        %829 = vmatpush2.xpose.msra.mxu0 0.0
        %830 = vmatprep.subr.mxu0 0.0
        %831 = vmatpush2.xpose.msra.mxu0 0.0
        %832 = vmatprep.subr.mxu0 0.0
        %833 = vmatpush2.xpose.msra.mxu0 0.0
        %834 = vmatprep.subr.mxu0 0.0
        %835 = vmatpush2.xpose.msra.mxu0 0.0
        %836 = vmatprep.subr.mxu0 0.0
        %837 = vmatpush2.xpose.msra.mxu0 0.0
        %838 = vmatprep.subr.mxu0 0.0
        %839 = vmatpush2.xpose.msra.mxu0 0.0
        %840 = vmatprep.subr.mxu0 0.0
        %841 = vmatpush2.xpose.msra.mxu0 0.0
        %842 = vmatprep.subr.mxu0 0.0
        %843 = vmatpush2.xpose.msra.mxu0 0.0
        %844 = vmatprep.subr.mxu0 0.0
        %845 = vmatpush2.xpose.msra.mxu0 0.0
        %846 = vmatprep.subr.mxu0 0.0
        %847 = vmatpush2.xpose.msra.mxu0 0.0
        %848 = vmatprep.subr.mxu0 0.0
        %849 = vmatpush2.xpose.msra.mxu0 0.0
        %850 = vmatprep.subr.mxu0 0.0
        %851 = vmatpush2.xpose.msra.mxu0 0.0
        %852 = vmatprep.mubr.f32.mxu0 0.0
        %853 = vmatmul.mubr.f32.gmra.mxu0 %v783
        %v854 = vpop.f32.mrf.mxu0
        %v855 = vadd.f32 0.0, %v854
        %v856 = vpop.f32.mrf.mxu0
        %857 = vdwg.mxu0
        %v858 = vmul.f32 %v855, 0.35355338
        %v859 = vsel %vm781, %v858, -inf
        %860 = vmax.xlane.f32.xlu0 %v859
        %v861 = vpop.xlane.xlu0 %860
        %v862 = vsub.f32 %v858, %v861
        %v863 = vmul.f32 %v862, 1.442695
        %v864 = vpow.pop %v863
        %v865 = vsel %vm781, %v864, 0.0
        %866 = vadd.xlane.f32.xlu0 %v865
        %v867 = vpop.xlane.xlu0 %866
        %v868 = vrcp.pop %v867
        %v869 = vmul.f32 %v864, %v868
        %v871 = vsel %vm781, %v869, 0
        %873 = vmatprep.subr.mxu0 0.0
        %874 = vmatpush1.msra.mxu0 0.0
        %875 = vmatprep.subr.mxu0 0.0
        %876 = vmatpush1.msra.mxu0 0.0
        %877 = vmatprep.subr.mxu0 0.0
        %878 = vmatpush1.msra.mxu0 0.0
        %879 = vmatprep.subr.mxu0 0.0
        %880 = vmatpush1.msra.mxu0 0.0
        %881 = vmatprep.subr.mxu0 0.0
        %882 = vmatpush1.msra.mxu0 0.0
        %883 = vmatprep.subr.mxu0 0.0
        %884 = vmatpush1.msra.mxu0 0.0
        %885 = vmatprep.subr.mxu0 0.0
        %886 = vmatpush1.msra.mxu0 0.0
        %887 = vmatprep.subr.mxu0 0.0
        %888 = vmatpush1.msra.mxu0 0.0
        %889 = vmatprep.subr.mxu0 0.0
        %890 = vmatpush1.msra.mxu0 0.0
        %891 = vmatprep.subr.mxu0 0.0
        %892 = vmatpush1.msra.mxu0 0.0
        %893 = vmatprep.subr.mxu0 0.0
        %894 = vmatpush1.msra.mxu0 0.0
        %895 = vmatprep.subr.mxu0 0.0
        %896 = vmatpush1.msra.mxu0 0.0
        %897 = vmatprep.subr.mxu0 0.0
        %898 = vmatpush1.msra.mxu0 0.0
        %899 = vmatprep.subr.mxu0 0.0
        %900 = vmatpush1.msra.mxu0 0.0
        %901 = vmatprep.subr.mxu0 0.0
        %902 = vmatpush1.msra.mxu0 0.0
        %903 = vmatprep.subr.mxu0 0.0
        %904 = vmatpush1.msra.mxu0 %v780
        %905 = vmatprep.subr.mxu0 0.0
        %906 = vmatpush2.msra.mxu0 0.0
        %907 = vmatprep.subr.mxu0 0.0
        %908 = vmatpush2.msra.mxu0 0.0
        %909 = vmatprep.subr.mxu0 0.0
        %910 = vmatpush2.msra.mxu0 0.0
        %911 = vmatprep.subr.mxu0 0.0
        %912 = vmatpush2.msra.mxu0 0.0
        %913 = vmatprep.subr.mxu0 0.0
        %914 = vmatpush2.msra.mxu0 0.0
        %915 = vmatprep.subr.mxu0 0.0
        %916 = vmatpush2.msra.mxu0 0.0
        %917 = vmatprep.subr.mxu0 0.0
        %918 = vmatpush2.msra.mxu0 0.0
        %919 = vmatprep.subr.mxu0 0.0
        %920 = vmatpush2.msra.mxu0 0.0
        %921 = vmatprep.subr.mxu0 0.0
        %922 = vmatpush2.msra.mxu0 0.0
        %923 = vmatprep.subr.mxu0 0.0
        %924 = vmatpush2.msra.mxu0 0.0
        %925 = vmatprep.subr.mxu0 0.0
        %926 = vmatpush2.msra.mxu0 0.0
        %927 = vmatprep.subr.mxu0 0.0
        %928 = vmatpush2.msra.mxu0 0.0
        %929 = vmatprep.subr.mxu0 0.0
        %930 = vmatpush2.msra.mxu0 0.0
        %931 = vmatprep.subr.mxu0 0.0
        %932 = vmatpush2.msra.mxu0 0.0
        %933 = vmatprep.subr.mxu0 0.0
        %934 = vmatpush2.msra.mxu0 0.0
        %935 = vmatprep.subr.mxu0 0.0
        %936 = vmatpush2.msra.mxu0 0.0
        %937 = vmatprep.mubr.f32.mxu0 0.0
        %938 = vmatmul.mubr.f32.gmra.mxu0 %v871
        %v939 = vpop.f32.mrf.mxu0
        %v940 = vadd.f32 0.0, %v939
        %v941 = vpop.f32.mrf.mxu0
        %942 = vdwg.mxu0
        %943 = vst.msk [vmem:[#allocation4] sm:$0xff] %vm781, %v940
        %s944 = scalar_lea.vmem [#allocation2], 8
        %v945 = vld [vmem:[%s944] sm:$0xff]
        %s946 = scalar_lea.vmem [#allocation3], 8
        %v947 = vld [vmem:[%s946] sm:$0xff]
        %948 = vrot.lane.b32.xlu0 %v776, 120
        %v949 = vpop.permute.xlu0 %948
        %v950 = vsel %vm781, %v949, 0
        %v953 = vsel %vm781, %v945, 0
        %955 = vmatprep.subr.mxu0 0.0
        %956 = vmatpush1.xpose.msra.mxu0 0.0
        %957 = vmatprep.subr.mxu0 0.0
        %958 = vmatpush1.xpose.msra.mxu0 0.0
        %959 = vmatprep.subr.mxu0 0.0
        %960 = vmatpush1.xpose.msra.mxu0 0.0
        %961 = vmatprep.subr.mxu0 0.0
        %962 = vmatpush1.xpose.msra.mxu0 0.0
        %963 = vmatprep.subr.mxu0 0.0
        %964 = vmatpush1.xpose.msra.mxu0 0.0
        %965 = vmatprep.subr.mxu0 0.0
        %966 = vmatpush1.xpose.msra.mxu0 0.0
        %967 = vmatprep.subr.mxu0 0.0
        %968 = vmatpush1.xpose.msra.mxu0 0.0
        %969 = vmatprep.subr.mxu0 0.0
        %970 = vmatpush1.xpose.msra.mxu0 0.0
        %971 = vmatprep.subr.mxu0 0.0
        %972 = vmatpush1.xpose.msra.mxu0 0.0
        %973 = vmatprep.subr.mxu0 0.0
        %974 = vmatpush1.xpose.msra.mxu0 0.0
        %975 = vmatprep.subr.mxu0 0.0
        %976 = vmatpush1.xpose.msra.mxu0 0.0
        %977 = vmatprep.subr.mxu0 0.0
        %978 = vmatpush1.xpose.msra.mxu0 0.0
        %979 = vmatprep.subr.mxu0 0.0
        %980 = vmatpush1.xpose.msra.mxu0 0.0
        %981 = vmatprep.subr.mxu0 0.0
        %982 = vmatpush1.xpose.msra.mxu0 0.0
        %983 = vmatprep.subr.mxu0 0.0
        %984 = vmatpush1.xpose.msra.mxu0 0.0
        %985 = vmatprep.subr.mxu0 0.0
        %986 = vmatpush1.xpose.msra.mxu0 %v953
        %987 = vmatprep.subr.mxu0 0.0
        %988 = vmatpush2.xpose.msra.mxu0 0.0
        %989 = vmatprep.subr.mxu0 0.0
        %990 = vmatpush2.xpose.msra.mxu0 0.0
        %991 = vmatprep.subr.mxu0 0.0
        %992 = vmatpush2.xpose.msra.mxu0 0.0
        %993 = vmatprep.subr.mxu0 0.0
        %994 = vmatpush2.xpose.msra.mxu0 0.0
        %995 = vmatprep.subr.mxu0 0.0
        %996 = vmatpush2.xpose.msra.mxu0 0.0
        %997 = vmatprep.subr.mxu0 0.0
        %998 = vmatpush2.xpose.msra.mxu0 0.0
        %999 = vmatprep.subr.mxu0 0.0
        %1000 = vmatpush2.xpose.msra.mxu0 0.0
        %1001 = vmatprep.subr.mxu0 0.0
        %1002 = vmatpush2.xpose.msra.mxu0 0.0
        %1003 = vmatprep.subr.mxu0 0.0
        %1004 = vmatpush2.xpose.msra.mxu0 0.0
        %1005 = vmatprep.subr.mxu0 0.0
        %1006 = vmatpush2.xpose.msra.mxu0 0.0
        %1007 = vmatprep.subr.mxu0 0.0
        %1008 = vmatpush2.xpose.msra.mxu0 0.0
        %1009 = vmatprep.subr.mxu0 0.0
        %1010 = vmatpush2.xpose.msra.mxu0 0.0
        %1011 = vmatprep.subr.mxu0 0.0
        %1012 = vmatpush2.xpose.msra.mxu0 0.0
        %1013 = vmatprep.subr.mxu0 0.0
        %1014 = vmatpush2.xpose.msra.mxu0 0.0
        %1015 = vmatprep.subr.mxu0 0.0
        %1016 = vmatpush2.xpose.msra.mxu0 0.0
        %1017 = vmatprep.subr.mxu0 0.0
        %1018 = vmatpush2.xpose.msra.mxu0 0.0
        %1019 = vmatprep.mubr.f32.mxu0 0.0
        %1020 = vmatmul.mubr.f32.gmra.mxu0 %v950
        %v1021 = vpop.f32.mrf.mxu0
        %v1022 = vadd.f32 0.0, %v1021
        %v1023 = vpop.f32.mrf.mxu0
        %1024 = vdwg.mxu0
        %v1025 = vmul.f32 %v1022, 0.35355338
        %v1026 = vsel %vm781, %v1025, -inf
        %1027 = vmax.xlane.f32.xlu0 %v1026
        %v1028 = vpop.xlane.xlu0 %1027
        %v1029 = vsub.f32 %v1025, %v1028
        %v1030 = vmul.f32 %v1029, 1.442695
        %v1031 = vpow.pop %v1030
        %v1032 = vsel %vm781, %v1031, 0.0
        %1033 = vadd.xlane.f32.xlu0 %v1032
        %v1034 = vpop.xlane.xlu0 %1033
        %v1035 = vrcp.pop %v1034
        %v1036 = vmul.f32 %v1031, %v1035
        %v1038 = vsel %vm781, %v1036, 0
        %1040 = vmatprep.subr.mxu0 0.0
        %1041 = vmatpush1.msra.mxu0 0.0
        %1042 = vmatprep.subr.mxu0 0.0
        %1043 = vmatpush1.msra.mxu0 0.0
        %1044 = vmatprep.subr.mxu0 0.0
        %1045 = vmatpush1.msra.mxu0 0.0
        %1046 = vmatprep.subr.mxu0 0.0
        %1047 = vmatpush1.msra.mxu0 0.0
        %1048 = vmatprep.subr.mxu0 0.0
        %1049 = vmatpush1.msra.mxu0 0.0
        %1050 = vmatprep.subr.mxu0 0.0
        %1051 = vmatpush1.msra.mxu0 0.0
        %1052 = vmatprep.subr.mxu0 0.0
        %1053 = vmatpush1.msra.mxu0 0.0
        %1054 = vmatprep.subr.mxu0 0.0
        %1055 = vmatpush1.msra.mxu0 0.0
        %1056 = vmatprep.subr.mxu0 0.0
        %1057 = vmatpush1.msra.mxu0 0.0
        %1058 = vmatprep.subr.mxu0 0.0
        %1059 = vmatpush1.msra.mxu0 0.0
        %1060 = vmatprep.subr.mxu0 0.0
        %1061 = vmatpush1.msra.mxu0 0.0
        %1062 = vmatprep.subr.mxu0 0.0
        %1063 = vmatpush1.msra.mxu0 0.0
        %1064 = vmatprep.subr.mxu0 0.0
        %1065 = vmatpush1.msra.mxu0 0.0
        %1066 = vmatprep.subr.mxu0 0.0
        %1067 = vmatpush1.msra.mxu0 0.0
        %1068 = vmatprep.subr.mxu0 0.0
        %1069 = vmatpush1.msra.mxu0 0.0
        %1070 = vmatprep.subr.mxu0 0.0
        %1071 = vmatpush1.msra.mxu0 %v947
        %1072 = vmatprep.subr.mxu0 0.0
        %1073 = vmatpush2.msra.mxu0 0.0
        %1074 = vmatprep.subr.mxu0 0.0
        %1075 = vmatpush2.msra.mxu0 0.0
        %1076 = vmatprep.subr.mxu0 0.0
        %1077 = vmatpush2.msra.mxu0 0.0
        %1078 = vmatprep.subr.mxu0 0.0
        %1079 = vmatpush2.msra.mxu0 0.0
        %1080 = vmatprep.subr.mxu0 0.0
        %1081 = vmatpush2.msra.mxu0 0.0
        %1082 = vmatprep.subr.mxu0 0.0
        %1083 = vmatpush2.msra.mxu0 0.0
        %1084 = vmatprep.subr.mxu0 0.0
        %1085 = vmatpush2.msra.mxu0 0.0
        %1086 = vmatprep.subr.mxu0 0.0
        %1087 = vmatpush2.msra.mxu0 0.0
        %1088 = vmatprep.subr.mxu0 0.0
        %1089 = vmatpush2.msra.mxu0 0.0
        %1090 = vmatprep.subr.mxu0 0.0
        %1091 = vmatpush2.msra.mxu0 0.0
        %1092 = vmatprep.subr.mxu0 0.0
        %1093 = vmatpush2.msra.mxu0 0.0
        %1094 = vmatprep.subr.mxu0 0.0
        %1095 = vmatpush2.msra.mxu0 0.0
        %1096 = vmatprep.subr.mxu0 0.0
        %1097 = vmatpush2.msra.mxu0 0.0
        %1098 = vmatprep.subr.mxu0 0.0
        %1099 = vmatpush2.msra.mxu0 0.0
        %1100 = vmatprep.subr.mxu0 0.0
        %1101 = vmatpush2.msra.mxu0 0.0
        %1102 = vmatprep.subr.mxu0 0.0
        %1103 = vmatpush2.msra.mxu0 0.0
        %1104 = vmatprep.mubr.f32.mxu0 0.0
        %1105 = vmatmul.mubr.f32.gmra.mxu0 %v1038
        %v1106 = vpop.f32.mrf.mxu0
        %v1107 = vadd.f32 0.0, %v1106
        %v1108 = vpop.f32.mrf.mxu0
        %1109 = vdwg.mxu0
        %1111 = vrot.lane.b32.xlu0 %v1107, 8
        %v1112 = vpop.permute.xlu0 %1111
        %vm1114 = vcmask 130112
        %1115 = vst.msk [vmem:[#allocation4] sm:$0xff] %vm1114, %v1112
        %s1116 = scalar_lea.vmem [#allocation2], 16
        %v1117 = vld [vmem:[%s1116] sm:$0xff]
        %s1118 = scalar_lea.vmem [#allocation3], 16
        %v1119 = vld [vmem:[%s1118] sm:$0xff]
        %1120 = vrot.lane.b32.xlu0 %v776, 112
        %v1121 = vpop.permute.xlu0 %1120
        %v1122 = vsel %vm781, %v1121, 0
        %v1125 = vsel %vm781, %v1117, 0
        %1127 = vmatprep.subr.mxu0 0.0
        %1128 = vmatpush1.xpose.msra.mxu0 0.0
        %1129 = vmatprep.subr.mxu0 0.0
        %1130 = vmatpush1.xpose.msra.mxu0 0.0
        %1131 = vmatprep.subr.mxu0 0.0
        %1132 = vmatpush1.xpose.msra.mxu0 0.0
        %1133 = vmatprep.subr.mxu0 0.0
        %1134 = vmatpush1.xpose.msra.mxu0 0.0
        %1135 = vmatprep.subr.mxu0 0.0
        %1136 = vmatpush1.xpose.msra.mxu0 0.0
        %1137 = vmatprep.subr.mxu0 0.0
        %1138 = vmatpush1.xpose.msra.mxu0 0.0
        %1139 = vmatprep.subr.mxu0 0.0
        %1140 = vmatpush1.xpose.msra.mxu0 0.0
        %1141 = vmatprep.subr.mxu0 0.0
        %1142 = vmatpush1.xpose.msra.mxu0 0.0
        %1143 = vmatprep.subr.mxu0 0.0
        %1144 = vmatpush1.xpose.msra.mxu0 0.0
        %1145 = vmatprep.subr.mxu0 0.0
        %1146 = vmatpush1.xpose.msra.mxu0 0.0
        %1147 = vmatprep.subr.mxu0 0.0
        %1148 = vmatpush1.xpose.msra.mxu0 0.0
        %1149 = vmatprep.subr.mxu0 0.0
        %1150 = vmatpush1.xpose.msra.mxu0 0.0
        %1151 = vmatprep.subr.mxu0 0.0
        %1152 = vmatpush1.xpose.msra.mxu0 0.0
        %1153 = vmatprep.subr.mxu0 0.0
        %1154 = vmatpush1.xpose.msra.mxu0 0.0
        %1155 = vmatprep.subr.mxu0 0.0
        %1156 = vmatpush1.xpose.msra.mxu0 0.0
        %1157 = vmatprep.subr.mxu0 0.0
        %1158 = vmatpush1.xpose.msra.mxu0 %v1125
        %1159 = vmatprep.subr.mxu0 0.0
        %1160 = vmatpush2.xpose.msra.mxu0 0.0
        %1161 = vmatprep.subr.mxu0 0.0
        %1162 = vmatpush2.xpose.msra.mxu0 0.0
        %1163 = vmatprep.subr.mxu0 0.0
        %1164 = vmatpush2.xpose.msra.mxu0 0.0
        %1165 = vmatprep.subr.mxu0 0.0
        %1166 = vmatpush2.xpose.msra.mxu0 0.0
        %1167 = vmatprep.subr.mxu0 0.0
        %1168 = vmatpush2.xpose.msra.mxu0 0.0
        %1169 = vmatprep.subr.mxu0 0.0
        %1170 = vmatpush2.xpose.msra.mxu0 0.0
        %1171 = vmatprep.subr.mxu0 0.0
        %1172 = vmatpush2.xpose.msra.mxu0 0.0
        %1173 = vmatprep.subr.mxu0 0.0
        %1174 = vmatpush2.xpose.msra.mxu0 0.0
        %1175 = vmatprep.subr.mxu0 0.0
        %1176 = vmatpush2.xpose.msra.mxu0 0.0
        %1177 = vmatprep.subr.mxu0 0.0
        %1178 = vmatpush2.xpose.msra.mxu0 0.0
        %1179 = vmatprep.subr.mxu0 0.0
        %1180 = vmatpush2.xpose.msra.mxu0 0.0
        %1181 = vmatprep.subr.mxu0 0.0
        %1182 = vmatpush2.xpose.msra.mxu0 0.0
        %1183 = vmatprep.subr.mxu0 0.0
        %1184 = vmatpush2.xpose.msra.mxu0 0.0
        %1185 = vmatprep.subr.mxu0 0.0
        %1186 = vmatpush2.xpose.msra.mxu0 0.0
        %1187 = vmatprep.subr.mxu0 0.0
        %1188 = vmatpush2.xpose.msra.mxu0 0.0
        %1189 = vmatprep.subr.mxu0 0.0
        %1190 = vmatpush2.xpose.msra.mxu0 0.0
        %1191 = vmatprep.mubr.f32.mxu0 0.0
        %1192 = vmatmul.mubr.f32.gmra.mxu0 %v1122
        %v1193 = vpop.f32.mrf.mxu0
        %v1194 = vadd.f32 0.0, %v1193
        %v1195 = vpop.f32.mrf.mxu0
        %1196 = vdwg.mxu0
        %v1197 = vmul.f32 %v1194, 0.35355338
        %v1198 = vsel %vm781, %v1197, -inf
        %1199 = vmax.xlane.f32.xlu0 %v1198
        %v1200 = vpop.xlane.xlu0 %1199
        %v1201 = vsub.f32 %v1197, %v1200
        %v1202 = vmul.f32 %v1201, 1.442695
        %v1203 = vpow.pop %v1202
        %v1204 = vsel %vm781, %v1203, 0.0
        %1205 = vadd.xlane.f32.xlu0 %v1204
        %v1206 = vpop.xlane.xlu0 %1205
        %v1207 = vrcp.pop %v1206
        %v1208 = vmul.f32 %v1203, %v1207
        %v1210 = vsel %vm781, %v1208, 0
        %1212 = vmatprep.subr.mxu0 0.0
        %1213 = vmatpush1.msra.mxu0 0.0
        %1214 = vmatprep.subr.mxu0 0.0
        %1215 = vmatpush1.msra.mxu0 0.0
        %1216 = vmatprep.subr.mxu0 0.0
        %1217 = vmatpush1.msra.mxu0 0.0
        %1218 = vmatprep.subr.mxu0 0.0
        %1219 = vmatpush1.msra.mxu0 0.0
        %1220 = vmatprep.subr.mxu0 0.0
        %1221 = vmatpush1.msra.mxu0 0.0
        %1222 = vmatprep.subr.mxu0 0.0
        %1223 = vmatpush1.msra.mxu0 0.0
        %1224 = vmatprep.subr.mxu0 0.0
        %1225 = vmatpush1.msra.mxu0 0.0
        %1226 = vmatprep.subr.mxu0 0.0
        %1227 = vmatpush1.msra.mxu0 0.0
        %1228 = vmatprep.subr.mxu0 0.0
        %1229 = vmatpush1.msra.mxu0 0.0
        %1230 = vmatprep.subr.mxu0 0.0
        %1231 = vmatpush1.msra.mxu0 0.0
        %1232 = vmatprep.subr.mxu0 0.0
        %1233 = vmatpush1.msra.mxu0 0.0
        %1234 = vmatprep.subr.mxu0 0.0
        %1235 = vmatpush1.msra.mxu0 0.0
        %1236 = vmatprep.subr.mxu0 0.0
        %1237 = vmatpush1.msra.mxu0 0.0
        %1238 = vmatprep.subr.mxu0 0.0
        %1239 = vmatpush1.msra.mxu0 0.0
        %1240 = vmatprep.subr.mxu0 0.0
        %1241 = vmatpush1.msra.mxu0 0.0
        %1242 = vmatprep.subr.mxu0 0.0
        %1243 = vmatpush1.msra.mxu0 %v1119
        %1244 = vmatprep.subr.mxu0 0.0
        %1245 = vmatpush2.msra.mxu0 0.0
        %1246 = vmatprep.subr.mxu0 0.0
        %1247 = vmatpush2.msra.mxu0 0.0
        %1248 = vmatprep.subr.mxu0 0.0
        %1249 = vmatpush2.msra.mxu0 0.0
        %1250 = vmatprep.subr.mxu0 0.0
        %1251 = vmatpush2.msra.mxu0 0.0
        %1252 = vmatprep.subr.mxu0 0.0
        %1253 = vmatpush2.msra.mxu0 0.0
        %1254 = vmatprep.subr.mxu0 0.0
        %1255 = vmatpush2.msra.mxu0 0.0
        %1256 = vmatprep.subr.mxu0 0.0
        %1257 = vmatpush2.msra.mxu0 0.0
        %1258 = vmatprep.subr.mxu0 0.0
        %1259 = vmatpush2.msra.mxu0 0.0
        %1260 = vmatprep.subr.mxu0 0.0
        %1261 = vmatpush2.msra.mxu0 0.0
        %1262 = vmatprep.subr.mxu0 0.0
        %1263 = vmatpush2.msra.mxu0 0.0
        %1264 = vmatprep.subr.mxu0 0.0
        %1265 = vmatpush2.msra.mxu0 0.0
        %1266 = vmatprep.subr.mxu0 0.0
        %1267 = vmatpush2.msra.mxu0 0.0
        %1268 = vmatprep.subr.mxu0 0.0
        %1269 = vmatpush2.msra.mxu0 0.0
        %1270 = vmatprep.subr.mxu0 0.0
        %1271 = vmatpush2.msra.mxu0 0.0
        %1272 = vmatprep.subr.mxu0 0.0
        %1273 = vmatpush2.msra.mxu0 0.0
        %1274 = vmatprep.subr.mxu0 0.0
        %1275 = vmatpush2.msra.mxu0 0.0
        %1276 = vmatprep.mubr.f32.mxu0 0.0
        %1277 = vmatmul.mubr.f32.gmra.mxu0 %v1210
        %v1278 = vpop.f32.mrf.mxu0
        %v1279 = vadd.f32 0.0, %v1278
        %v1280 = vpop.f32.mrf.mxu0
        %1281 = vdwg.mxu0
        %1283 = vrot.lane.b32.xlu0 %v1279, 16
        %v1284 = vpop.permute.xlu0 %1283
        %vm1286 = vcmask 195712
        %1287 = vst.msk [vmem:[#allocation4] sm:$0xff] %vm1286, %v1284
        %s1288 = scalar_lea.vmem [#allocation2], 24
        %v1289 = vld [vmem:[%s1288] sm:$0xff]
        %s1290 = scalar_lea.vmem [#allocation3], 24
        %v1291 = vld [vmem:[%s1290] sm:$0xff]
        %1292 = vrot.lane.b32.xlu0 %v776, 104
        %v1293 = vpop.permute.xlu0 %1292
        %v1294 = vsel %vm781, %v1293, 0
        %v1297 = vsel %vm781, %v1289, 0
        %1299 = vmatprep.subr.mxu0 0.0
        %1300 = vmatpush1.xpose.msra.mxu0 0.0
        %1301 = vmatprep.subr.mxu0 0.0
        %1302 = vmatpush1.xpose.msra.mxu0 0.0
        %1303 = vmatprep.subr.mxu0 0.0
        %1304 = vmatpush1.xpose.msra.mxu0 0.0
        %1305 = vmatprep.subr.mxu0 0.0
        %1306 = vmatpush1.xpose.msra.mxu0 0.0
        %1307 = vmatprep.subr.mxu0 0.0
        %1308 = vmatpush1.xpose.msra.mxu0 0.0
        %1309 = vmatprep.subr.mxu0 0.0
        %1310 = vmatpush1.xpose.msra.mxu0 0.0
        %1311 = vmatprep.subr.mxu0 0.0
        %1312 = vmatpush1.xpose.msra.mxu0 0.0
        %1313 = vmatprep.subr.mxu0 0.0
        %1314 = vmatpush1.xpose.msra.mxu0 0.0
        %1315 = vmatprep.subr.mxu0 0.0
        %1316 = vmatpush1.xpose.msra.mxu0 0.0
        %1317 = vmatprep.subr.mxu0 0.0
        %1318 = vmatpush1.xpose.msra.mxu0 0.0
        %1319 = vmatprep.subr.mxu0 0.0
        %1320 = vmatpush1.xpose.msra.mxu0 0.0
        %1321 = vmatprep.subr.mxu0 0.0
        %1322 = vmatpush1.xpose.msra.mxu0 0.0
        %1323 = vmatprep.subr.mxu0 0.0
        %1324 = vmatpush1.xpose.msra.mxu0 0.0
        %1325 = vmatprep.subr.mxu0 0.0
        %1326 = vmatpush1.xpose.msra.mxu0 0.0
        %1327 = vmatprep.subr.mxu0 0.0
        %1328 = vmatpush1.xpose.msra.mxu0 0.0
        %1329 = vmatprep.subr.mxu0 0.0
        %1330 = vmatpush1.xpose.msra.mxu0 %v1297
        %1331 = vmatprep.subr.mxu0 0.0
        %1332 = vmatpush2.xpose.msra.mxu0 0.0
        %1333 = vmatprep.subr.mxu0 0.0
        %1334 = vmatpush2.xpose.msra.mxu0 0.0
        %1335 = vmatprep.subr.mxu0 0.0
        %1336 = vmatpush2.xpose.msra.mxu0 0.0
        %1337 = vmatprep.subr.mxu0 0.0
        %1338 = vmatpush2.xpose.msra.mxu0 0.0
        %1339 = vmatprep.subr.mxu0 0.0
        %1340 = vmatpush2.xpose.msra.mxu0 0.0
        %1341 = vmatprep.subr.mxu0 0.0
        %1342 = vmatpush2.xpose.msra.mxu0 0.0
        %1343 = vmatprep.subr.mxu0 0.0
        %1344 = vmatpush2.xpose.msra.mxu0 0.0
        %1345 = vmatprep.subr.mxu0 0.0
        %1346 = vmatpush2.xpose.msra.mxu0 0.0
        %1347 = vmatprep.subr.mxu0 0.0
        %1348 = vmatpush2.xpose.msra.mxu0 0.0
        %1349 = vmatprep.subr.mxu0 0.0
        %1350 = vmatpush2.xpose.msra.mxu0 0.0
        %1351 = vmatprep.subr.mxu0 0.0
        %1352 = vmatpush2.xpose.msra.mxu0 0.0
        %1353 = vmatprep.subr.mxu0 0.0
        %1354 = vmatpush2.xpose.msra.mxu0 0.0
        %1355 = vmatprep.subr.mxu0 0.0
        %1356 = vmatpush2.xpose.msra.mxu0 0.0
        %1357 = vmatprep.subr.mxu0 0.0
        %1358 = vmatpush2.xpose.msra.mxu0 0.0
        %1359 = vmatprep.subr.mxu0 0.0
        %1360 = vmatpush2.xpose.msra.mxu0 0.0
        %1361 = vmatprep.subr.mxu0 0.0
        %1362 = vmatpush2.xpose.msra.mxu0 0.0
        %1363 = vmatprep.mubr.f32.mxu0 0.0
        %1364 = vmatmul.mubr.f32.gmra.mxu0 %v1294
        %v1365 = vpop.f32.mrf.mxu0
        %v1366 = vadd.f32 0.0, %v1365
        %v1367 = vpop.f32.mrf.mxu0
        %1368 = vdwg.mxu0
        %v1369 = vmul.f32 %v1366, 0.35355338
        %v1370 = vsel %vm781, %v1369, -inf
        %1371 = vmax.xlane.f32.xlu0 %v1370
        %v1372 = vpop.xlane.xlu0 %1371
        %v1373 = vsub.f32 %v1369, %v1372
        %v1374 = vmul.f32 %v1373, 1.442695
        %v1375 = vpow.pop %v1374
        %v1376 = vsel %vm781, %v1375, 0.0
        %1377 = vadd.xlane.f32.xlu0 %v1376
        %v1378 = vpop.xlane.xlu0 %1377
        %v1379 = vrcp.pop %v1378
        %v1380 = vmul.f32 %v1375, %v1379
        %v1382 = vsel %vm781, %v1380, 0
        %1384 = vmatprep.subr.mxu0 0.0
        %1385 = vmatpush1.msra.mxu0 0.0
        %1386 = vmatprep.subr.mxu0 0.0
        %1387 = vmatpush1.msra.mxu0 0.0
        %1388 = vmatprep.subr.mxu0 0.0
        %1389 = vmatpush1.msra.mxu0 0.0
        %1390 = vmatprep.subr.mxu0 0.0
        %1391 = vmatpush1.msra.mxu0 0.0
        %1392 = vmatprep.subr.mxu0 0.0
        %1393 = vmatpush1.msra.mxu0 0.0
        %1394 = vmatprep.subr.mxu0 0.0
        %1395 = vmatpush1.msra.mxu0 0.0
        %1396 = vmatprep.subr.mxu0 0.0
        %1397 = vmatpush1.msra.mxu0 0.0
        %1398 = vmatprep.subr.mxu0 0.0
        %1399 = vmatpush1.msra.mxu0 0.0
        %1400 = vmatprep.subr.mxu0 0.0
        %1401 = vmatpush1.msra.mxu0 0.0
        %1402 = vmatprep.subr.mxu0 0.0
        %1403 = vmatpush1.msra.mxu0 0.0
        %1404 = vmatprep.subr.mxu0 0.0
        %1405 = vmatpush1.msra.mxu0 0.0
        %1406 = vmatprep.subr.mxu0 0.0
        %1407 = vmatpush1.msra.mxu0 0.0
        %1408 = vmatprep.subr.mxu0 0.0
        %1409 = vmatpush1.msra.mxu0 0.0
        %1410 = vmatprep.subr.mxu0 0.0
        %1411 = vmatpush1.msra.mxu0 0.0
        %1412 = vmatprep.subr.mxu0 0.0
        %1413 = vmatpush1.msra.mxu0 0.0
        %1414 = vmatprep.subr.mxu0 0.0
        %1415 = vmatpush1.msra.mxu0 %v1291
        %1416 = vmatprep.subr.mxu0 0.0
        %1417 = vmatpush2.msra.mxu0 0.0
        %1418 = vmatprep.subr.mxu0 0.0
        %1419 = vmatpush2.msra.mxu0 0.0
        %1420 = vmatprep.subr.mxu0 0.0
        %1421 = vmatpush2.msra.mxu0 0.0
        %1422 = vmatprep.subr.mxu0 0.0
        %1423 = vmatpush2.msra.mxu0 0.0
        %1424 = vmatprep.subr.mxu0 0.0
        %1425 = vmatpush2.msra.mxu0 0.0
        %1426 = vmatprep.subr.mxu0 0.0
        %1427 = vmatpush2.msra.mxu0 0.0
        %1428 = vmatprep.subr.mxu0 0.0
        %1429 = vmatpush2.msra.mxu0 0.0
        %1430 = vmatprep.subr.mxu0 0.0
        %1431 = vmatpush2.msra.mxu0 0.0
        %1432 = vmatprep.subr.mxu0 0.0
        %1433 = vmatpush2.msra.mxu0 0.0
        %1434 = vmatprep.subr.mxu0 0.0
        %1435 = vmatpush2.msra.mxu0 0.0
        %1436 = vmatprep.subr.mxu0 0.0
        %1437 = vmatpush2.msra.mxu0 0.0
        %1438 = vmatprep.subr.mxu0 0.0
        %1439 = vmatpush2.msra.mxu0 0.0
        %1440 = vmatprep.subr.mxu0 0.0
        %1441 = vmatpush2.msra.mxu0 0.0
        %1442 = vmatprep.subr.mxu0 0.0
        %1443 = vmatpush2.msra.mxu0 0.0
        %1444 = vmatprep.subr.mxu0 0.0
        %1445 = vmatpush2.msra.mxu0 0.0
        %1446 = vmatprep.subr.mxu0 0.0
        %1447 = vmatpush2.msra.mxu0 0.0
        %1448 = vmatprep.mubr.f32.mxu0 0.0
        %1449 = vmatmul.mubr.f32.gmra.mxu0 %v1382
        %v1450 = vpop.f32.mrf.mxu0
        %v1451 = vadd.f32 0.0, %v1450
        %v1452 = vpop.f32.mrf.mxu0
        %1453 = vdwg.mxu0
        %1455 = vrot.lane.b32.xlu0 %v1451, 24
        %v1456 = vpop.permute.xlu0 %1455
        %vm1458 = vcmask 261312
        %1459 = vst.msk [vmem:[#allocation4] sm:$0xff] %vm1458, %v1456
        %v1460 = vld [vmem:[#allocation4] sm:$0xff]
        %v1461 = vld [vmem:[#allocation14] sm:$0xff]
        %v1462 = vld [vmem:[#allocation14 + $0x8] sm:$0xff]
        %v1463 = vld [vmem:[#allocation14 + $0x10] sm:$0xff]
        %v1464 = vld [vmem:[#allocation14 + $0x18] sm:$0xff]
        %v1465 = vld [vmem:[%s9] sm:$0x1]
        %v1467 = vlaneseq
        %v1468 = vshrl.u32 %v1467, 7
        %v1469 = vsub.s32 0, %v1468
        %v1470 = vrot.slane %v1465, %v1469
        %v1473 = vsel %vm705, %v1460, 0
        %1475 = vmatprep.subr.mxu0 0.0
        %1476 = vmatpush1.msra.mxu0 0.0
        %1477 = vmatprep.subr.mxu0 0.0
        %1478 = vmatpush1.msra.mxu0 0.0
        %1479 = vmatprep.subr.mxu0 0.0
        %1480 = vmatpush1.msra.mxu0 0.0
        %1481 = vmatprep.subr.mxu0 0.0
        %1482 = vmatpush1.msra.mxu0 0.0
        %1483 = vmatprep.subr.mxu0 0.0
        %1484 = vmatpush1.msra.mxu0 0.0
        %1485 = vmatprep.subr.mxu0 0.0
        %1486 = vmatpush1.msra.mxu0 0.0
        %1487 = vmatprep.subr.mxu0 0.0
        %1488 = vmatpush1.msra.mxu0 0.0
        %1489 = vmatprep.subr.mxu0 0.0
        %1490 = vmatpush1.msra.mxu0 0.0
        %1491 = vmatprep.subr.mxu0 0.0
        %1492 = vmatpush1.msra.mxu0 0.0
        %1493 = vmatprep.subr.mxu0 0.0
        %1494 = vmatpush1.msra.mxu0 0.0
        %1495 = vmatprep.subr.mxu0 0.0
        %1496 = vmatpush1.msra.mxu0 0.0
        %1497 = vmatprep.subr.mxu0 0.0
        %1498 = vmatpush1.msra.mxu0 0.0
        %1499 = vmatprep.subr.mxu0 0.0
        %1500 = vmatpush1.msra.mxu0 %v1464
        %1501 = vmatprep.subr.mxu0 0.0
        %1502 = vmatpush1.msra.mxu0 %v1463
        %1503 = vmatprep.subr.mxu0 0.0
        %1504 = vmatpush1.msra.mxu0 %v1462
        %1505 = vmatprep.subr.mxu0 0.0
        %1506 = vmatpush1.msra.mxu0 %v1461
        %1507 = vmatprep.subr.mxu0 0.0
        %1508 = vmatpush2.msra.mxu0 0.0
        %1509 = vmatprep.subr.mxu0 0.0
        %1510 = vmatpush2.msra.mxu0 0.0
        %1511 = vmatprep.subr.mxu0 0.0
        %1512 = vmatpush2.msra.mxu0 0.0
        %1513 = vmatprep.subr.mxu0 0.0
        %1514 = vmatpush2.msra.mxu0 0.0
        %1515 = vmatprep.subr.mxu0 0.0
        %1516 = vmatpush2.msra.mxu0 0.0
        %1517 = vmatprep.subr.mxu0 0.0
        %1518 = vmatpush2.msra.mxu0 0.0
        %1519 = vmatprep.subr.mxu0 0.0
        %1520 = vmatpush2.msra.mxu0 0.0
        %1521 = vmatprep.subr.mxu0 0.0
        %1522 = vmatpush2.msra.mxu0 0.0
        %1523 = vmatprep.subr.mxu0 0.0
        %1524 = vmatpush2.msra.mxu0 0.0
        %1525 = vmatprep.subr.mxu0 0.0
        %1526 = vmatpush2.msra.mxu0 0.0
        %1527 = vmatprep.subr.mxu0 0.0
        %1528 = vmatpush2.msra.mxu0 0.0
        %1529 = vmatprep.subr.mxu0 0.0
        %1530 = vmatpush2.msra.mxu0 0.0
        %1531 = vmatprep.subr.mxu0 0.0
        %1532 = vmatpush2.msra.mxu0 0.0
        %1533 = vmatprep.subr.mxu0 0.0
        %1534 = vmatpush2.msra.mxu0 0.0
        %1535 = vmatprep.subr.mxu0 0.0
        %1536 = vmatpush2.msra.mxu0 0.0
        %1537 = vmatprep.subr.mxu0 0.0
        %1538 = vmatpush2.msra.mxu0 0.0
        %1539 = vmatprep.mubr.f32.mxu0 0.0
        %1540 = vmatmul.mubr.f32.gmra.mxu0 %v1473
        %v1541 = vpop.f32.mrf.mxu0
        %v1542 = vadd.f32 %v1470, %v1541
        %v1543 = vpop.f32.mrf.mxu0
        %1544 = vdwg.mxu0
        %1545 = vst.msk [vmem:[%s486] sm:$0xff] %vm705, %v1542
        %s1546 = sand.u32 %s276, 1
        %s1547 = scalar_lea.sflag [#allocation7], %s1546
        %s1548 = sand.u32 %s276, 1
        %s1549 = smul.addr %s1548, 8
        %s1550 = scalar_lea.vmem [#allocation16], %s1549
        // Predicated region
        $region89: #{tpu_custom_call.1} parent=59 // pred_check
          %p1551 = pneg %p286
        $region90: #{tpu_custom_call.1} parent=59 // pred_check_branch
          %1553 = sbr.rel (%p1551) target = $region92
        $region91: #{tpu_custom_call.1} parent=59 // pred_region
          %s1555 = ssub.s32 128, 128
          %1556 = vsyncadd %s1547, %s1555
          %s1557 = sadd.s32 %s37, %s36
          %s1558 = smul.addr %s1557, 128
          %s1559 = scalar_lea.hbm %s10, %s1558
          %s1561 = sshll.u32 %s1550, 4
          %s1562 = int_to_ptr.vmem [resolvable:$true] %s1561
          %1564 = dma.vmem_to_hbm [thread:$0]  %s1562, 128, %s1559, %s1547
        $region92: #{tpu_custom_call.1} parent=59 // pred_fallthru
          _
      $region60: #{tpu_custom_call.1} parent=5 // pred_fallthru
        _
      %p1565 = scmp.le.s32.totalorder 2, %s27
      // Predicated region
      $region93: #{tpu_custom_call.1} parent=5 // pred_check
        %p1566 = pneg %p1565
      $region94: #{tpu_custom_call.1} parent=5 // pred_check_branch
        %1568 = sbr.rel (%p1566) target = $region96
      $region95: #{tpu_custom_call.1} parent=5 // pred_region
        %s1569 = ssub.s32 %s27, 2
        // Predicated region
        $region97: #{tpu_custom_call.1} parent=95 // pred_check
          %p1570 = pneg %p292
        $region98: #{tpu_custom_call.1} parent=95 // pred_check_branch
          %1572 = sbr.rel (%p1570) target = $region100
        $region99: #{tpu_custom_call.1} parent=95 // pred_region
          %s1573 = sand.u32 %s277, 1
          %s1574 = scalar_lea.sflag [#allocation7], %s1573
          %s1575 = sand.u32 %s277, 1
          %s1576 = smul.addr %s1575, 8
          %s1577 = scalar_lea.vmem [#allocation16], %s1576
          %1578 = dma.done %s1574, 128
        $region100: #{tpu_custom_call.1} parent=95 // pred_fallthru
          _
      $region96: #{tpu_custom_call.1} parent=5 // pred_fallthru
        _
    $region6: #{tpu_custom_call.1} parent=1 // loop_footer
      %s31 = sadd.s32 1, %s27
    $region7: #{tpu_custom_call.1} parent=1 // loop_footer_branch
      %26 = sbr.rel target = $region3
    $region8: #{tpu_custom_call.1} parent=1 // loop_exit
      _
    %1579 = vsyncpa [#allocation6], 1
    %s1580 = scalar_lea.sflag [#allocation6], 1
    %1581 = vsyncpa %s1580, 1
    %1582 = vsyncpa [#allocation9], 1
    %s1583 = scalar_lea.sflag [#allocation9], 1
    %1584 = vsyncpa %s1583, 1
    %1585 = vsyncpa [#allocation12], 1
    %1586 = vsyncpa [#allocation15], 1
    %1587 = vsyncpa [#allocation7], 1
    %s1588 = scalar_lea.sflag [#allocation7], 1
    %1589 = vsyncpa %s1588, 1

// kernel: tpu_custom_call.1
$region0: #{tpu_custom_call.1}
  #allocation0 [shape = 'u32[]', space=smem, size = 0x4, offset = 0x4, fixed_abs, tag = 'smem constant byte address 0x4 - core index']
  #allocation1 [shape = 'u32[144,128]{1,0:T(1,128)}', space=vmem, size = 0x12000, scoped, tag = 'internal scratch']
  #allocation2 [shape = 'f32[4,8,8]{2,1,0:T(8,128)}', space=vmem, size = 0x4000, scoped, tag = 'scratch operand']
  #allocation3 [shape = 'f32[4,8,8]{2,1,0:T(8,128)}', space=vmem, size = 0x4000, scoped, tag = 'scratch operand']
  #allocation4 [shape = 'f32[8,32]{1,0:T(8,128)}', space=vmem, size = 0x1000, scoped, tag = 'scratch operand']
  %s0 = inlined_call_operand.hbm [shape: f32[2,8,32], index: 0, kind: input, shape index: {}]
  %s1 = inlined_call_operand.hbm [shape: f32[2,8,32], index: 1, kind: input, shape index: {}]
  %s2 = inlined_call_operand.hbm [shape: f32[32,32], index: 2, kind: input, shape index: {}]
  %s3 = inlined_call_operand.vmem [shape: f32[1,32], index: 3, kind: input, shape index: {}]
  %s4 = inlined_call_operand.hbm [shape: f32[32,32], index: 4, kind: input, shape index: {}]
  %s5 = inlined_call_operand.vmem [shape: f32[1,32], index: 5, kind: input, shape index: {}]
  %s6 = inlined_call_operand.hbm [shape: f32[32,32], index: 6, kind: input, shape index: {}]
  %s7 = inlined_call_operand.vmem [shape: f32[1,32], index: 7, kind: input, shape index: {}]
  %s8 = inlined_call_operand.hbm [shape: f32[32,32], index: 8, kind: input, shape index: {}]
  %s9 = inlined_call_operand.vmem [shape: f32[1,32], index: 9, kind: input, shape index: {}]
  %s10 = inlined_call_operand.hbm [shape: f32[2,8,32], index: 10, kind: output, shape index: {}]
  %s11 = sld [smem:[#allocation0]]
  $region101: #{tpu_custom_call.1} parent=0
    _
  %s13 = ssub.s32 1, %s11
  %s14 = scalar_select 0, %s13, %s11
  $region1: #{tpu_custom_call.1} parent=0
    #allocation5 [shape = 'u8[8192]{0}', space=vmem, size = 0x2000, scoped, tag = 'input window, operand 0']
    #allocation6 [shape = 's32[2]{0}', space=sflag, size = 0x8, scoped, tag = 'scoped memory for tpu_custom_call.1']
    #allocation7 [shape = 's32[2]{0}', space=sflag, size = 0x8, scoped, tag = 'scoped memory for tpu_custom_call.1']
    #allocation8 [shape = 'u8[8192]{0}', space=vmem, size = 0x2000, scoped, tag = 'input window, operand 1']
    #allocation9 [shape = 's32[2]{0}', space=sflag, size = 0x8, scoped, tag = 'scoped memory for tpu_custom_call.1']
    #allocation10 [shape = 'u8[16384]{0}', space=vmem, size = 0x4000, scoped, tag = 'input window, operand 2, single buffered']
    #allocation11 [shape = 'u8[16384]{0}', space=vmem, size = 0x4000, scoped, tag = 'input window, operand 4, single buffered']
    #allocation12 [shape = 's32[1]{0}', space=sflag, size = 0x4, scoped, tag = 'scoped memory for tpu_custom_call.1']
    #allocation13 [shape = 'u8[16384]{0}', space=vmem, size = 0x4000, scoped, tag = 'input window, operand 6, single buffered']
    #allocation14 [shape = 'u8[16384]{0}', space=vmem, size = 0x4000, scoped, tag = 'input window, operand 8, single buffered']
    #allocation15 [shape = 's32[1]{0}', space=sflag, size = 0x4, scoped, tag = 'scoped memory for tpu_custom_call.1']
    #allocation16 [shape = 'u8[8192]{0}', space=vmem, size = 0x2000, scoped, tag = 'output window, operand 0']
    %15 = vsyncpa [#allocation6], 0
    %s16 = scalar_lea.sflag [#allocation6], 1
    %17 = vsyncpa %s16, 0
    %18 = vsyncpa [#allocation9], 0
    %s19 = scalar_lea.sflag [#allocation9], 1
    %20 = vsyncpa %s19, 0
    %21 = vsyncpa [#allocation12], 0
    %22 = vsyncpa [#allocation15], 0
    %23 = vsyncpa [#allocation7], 0
    %s24 = scalar_lea.sflag [#allocation7], 1
    %25 = vsyncpa %s24, 0
    loop: start=0, step=1, limit=4
    $region2: #{tpu_custom_call.1} parent=1 // loop_pre_header
      _
    $region3: #{tpu_custom_call.1} parent=1 // loop_header
      %s27 = sphi 0, %s31
      %p28 = scmp.ge.s32.totalorder %s27, 4
      %s34 = sphi 0, %s46
      %s35 = sphi 0, %s42
      %s36 = sphi 0, %s34
      %s37 = sphi 0, %s35
      %s38 = sphi 0, %s36
      %s39 = sphi 0, %s37
      %s49 = sphi 0, %s51
      %s52 = sphi 0, %s49
      %s53 = sphi 0, %s52
      %s69 = sphi 0, %s53
      %s77 = sphi 0, %s79
      %s80 = sphi 0, %s77
      %s81 = sphi 0, %s80
      %s97 = sphi 0, %s81
      %s101 = sphi 0, %s101
      %s103 = sphi 0, %s101
      %s104 = sphi 0, %s103
      %s118 = sphi 0, %s104
      %s122 = sphi 0, %s122
      %s124 = sphi 0, %s122
      %s125 = sphi 0, %s124
      %s139 = sphi 0, %s125
      %s143 = sphi 0, %s143
      %s145 = sphi 0, %s143
      %s146 = sphi 0, %s145
      %s160 = sphi 0, %s146
      %s164 = sphi 0, %s164
      %s166 = sphi 0, %s164
      %s167 = sphi 0, %s166
      %s181 = sphi 0, %s167
      %s185 = sphi 0, %s185
      %s187 = sphi 0, %s185
      %s188 = sphi 0, %s187
      %s202 = sphi 0, %s188
      %s206 = sphi 0, %s206
      %s208 = sphi 0, %s206
      %s209 = sphi 0, %s208
      %s223 = sphi 0, %s209
      %s227 = sphi 0, %s227
      %s229 = sphi 0, %s227
      %s230 = sphi 0, %s229
      %s244 = sphi 0, %s230
      %s248 = sphi 0, %s248
      %s250 = sphi 0, %s248
      %s251 = sphi 0, %s250
      %s265 = sphi 0, %s251
      %s273 = sphi 0, %s275
      %s276 = sphi 0, %s273
      %s277 = sphi 0, %s276
      %s293 = sphi 0, %s277
    $region4: #{tpu_custom_call.1} parent=1 // loop_header_branch
      %30 = sbr.rel (%p28) target = $region8
    $region5: #{tpu_custom_call.1} parent=1 // loop_body
      %s32 = ssub.s32 %s27, 1
      %s33 = ssub.s32 %s27, 2
      %s40 = sadd.s32 1, %s35
      %p41 = scmp.ge.s32.totalorder %s40, 1
      %s42 = scalar_select %p41, 0, %s40
      %s43 = sadd.s32 1, %s34
      %s44 = scalar_select %p41, %s43, %s34
      %p45 = scmp.ge.s32.totalorder %s44, 2
      %s46 = scalar_select %p45, 0, %s44
      %s47 = ssub.s32 %s34, %s46
      %p48 = scmp.eq.s32.totalorder %s47, 0
      %s50 = sadd.s32 %s49, 1
      %s51 = scalar_select %p48, %s49, %s50
      %p54 = pneg %p48
      %p55 = scmp.eq.s32.totalorder %s27, 1
      %p56 = por %p54, %p55
      %p57 = scmp.ne.s32.totalorder %s49, %s52
      %p58 = scmp.eq.s32.totalorder %s27, 0
      %p59 = por %p57, %p58
      %p60 = scmp.ne.s32.totalorder %s49, %s52
      %p61 = scmp.eq.s32.totalorder %s32, 1
      %p62 = por %p60, %p61
      %p63 = scmp.ne.s32.totalorder %s52, %s53
      %p64 = scmp.eq.s32.totalorder %s32, 0
      %p65 = por %p63, %p64
      %p66 = scmp.ne.s32.totalorder %s52, %s53
      %p67 = scmp.eq.s32.totalorder %s33, 1
      %p68 = por %p66, %p67
      %p70 = scmp.ne.s32.totalorder %s53, %s69
      %p71 = scmp.eq.s32.totalorder %s33, 0
      %p72 = por %p70, %p71
      %s73 = ssub.s32 %s34, %s46
      %s74 = ssub.s32 %s35, %s42
      %s75 = sor.u32 %s73, %s74
      %p76 = scmp.eq.s32.totalorder %s75, 0
      %s78 = sadd.s32 %s77, 1
      %s79 = scalar_select %p76, %s77, %s78
      %p82 = pneg %p76
      %p83 = scmp.eq.s32.totalorder %s27, 1
      %p84 = por %p82, %p83
      %p85 = scmp.ne.s32.totalorder %s77, %s80
      %p86 = scmp.eq.s32.totalorder %s27, 0
      %p87 = por %p85, %p86
      %p88 = scmp.ne.s32.totalorder %s77, %s80
      %p89 = scmp.eq.s32.totalorder %s32, 1
      %p90 = por %p88, %p89
      %p91 = scmp.ne.s32.totalorder %s80, %s81
      %p92 = scmp.eq.s32.totalorder %s32, 0
      %p93 = por %p91, %p92
      %p94 = scmp.ne.s32.totalorder %s80, %s81
      %p95 = scmp.eq.s32.totalorder %s33, 1
      %p96 = por %p94, %p95
      %p98 = scmp.ne.s32.totalorder %s81, %s97
      %p99 = scmp.eq.s32.totalorder %s33, 0
      %p100 = por %p98, %p99
      %s102 = sadd.s32 %s101, 1
      %p105 = scmp.eq.s32.totalorder %s27, 1
      %p106 = scmp.ne.s32.totalorder %s101, %s103
      %p107 = scmp.eq.s32.totalorder %s27, 0
      %p108 = por %p106, %p107
      %p109 = scmp.ne.s32.totalorder %s101, %s103
      %p110 = scmp.eq.s32.totalorder %s32, 1
      %p111 = por %p109, %p110
      %p112 = scmp.ne.s32.totalorder %s103, %s104
      %p113 = scmp.eq.s32.totalorder %s32, 0
      %p114 = por %p112, %p113
      %p115 = scmp.ne.s32.totalorder %s103, %s104
      %p116 = scmp.eq.s32.totalorder %s33, 1
      %p117 = por %p115, %p116
      %p119 = scmp.ne.s32.totalorder %s104, %s118
      %p120 = scmp.eq.s32.totalorder %s33, 0
      %p121 = por %p119, %p120
      %s123 = sadd.s32 %s122, 1
      %p126 = scmp.eq.s32.totalorder %s27, 1
      %p127 = scmp.ne.s32.totalorder %s122, %s124
      %p128 = scmp.eq.s32.totalorder %s27, 0
      %p129 = por %p127, %p128
      %p130 = scmp.ne.s32.totalorder %s122, %s124
      %p131 = scmp.eq.s32.totalorder %s32, 1
      %p132 = por %p130, %p131
      %p133 = scmp.ne.s32.totalorder %s124, %s125
      %p134 = scmp.eq.s32.totalorder %s32, 0
      %p135 = por %p133, %p134
      %p136 = scmp.ne.s32.totalorder %s124, %s125
      %p137 = scmp.eq.s32.totalorder %s33, 1
      %p138 = por %p136, %p137
      %p140 = scmp.ne.s32.totalorder %s125, %s139
      %p141 = scmp.eq.s32.totalorder %s33, 0
      %p142 = por %p140, %p141
      %s144 = sadd.s32 %s143, 1
      %p147 = scmp.eq.s32.totalorder %s27, 1
      %p148 = scmp.ne.s32.totalorder %s143, %s145
      %p149 = scmp.eq.s32.totalorder %s27, 0
      %p150 = por %p148, %p149
      %p151 = scmp.ne.s32.totalorder %s143, %s145
      %p152 = scmp.eq.s32.totalorder %s32, 1
      %p153 = por %p151, %p152
      %p154 = scmp.ne.s32.totalorder %s145, %s146
      %p155 = scmp.eq.s32.totalorder %s32, 0
      %p156 = por %p154, %p155
      %p157 = scmp.ne.s32.totalorder %s145, %s146
      %p158 = scmp.eq.s32.totalorder %s33, 1
      %p159 = por %p157, %p158
      %p161 = scmp.ne.s32.totalorder %s146, %s160
      %p162 = scmp.eq.s32.totalorder %s33, 0
      %p163 = por %p161, %p162
      %s165 = sadd.s32 %s164, 1
      %p168 = scmp.eq.s32.totalorder %s27, 1
      %p169 = scmp.ne.s32.totalorder %s164, %s166
      %p170 = scmp.eq.s32.totalorder %s27, 0
      %p171 = por %p169, %p170
      %p172 = scmp.ne.s32.totalorder %s164, %s166
      %p173 = scmp.eq.s32.totalorder %s32, 1
      %p174 = por %p172, %p173
      %p175 = scmp.ne.s32.totalorder %s166, %s167
      %p176 = scmp.eq.s32.totalorder %s32, 0
      %p177 = por %p175, %p176
      %p178 = scmp.ne.s32.totalorder %s166, %s167
      %p179 = scmp.eq.s32.totalorder %s33, 1
      %p180 = por %p178, %p179
      %p182 = scmp.ne.s32.totalorder %s167, %s181
      %p183 = scmp.eq.s32.totalorder %s33, 0
      %p184 = por %p182, %p183
      %s186 = sadd.s32 %s185, 1
      %p189 = scmp.eq.s32.totalorder %s27, 1
      %p190 = scmp.ne.s32.totalorder %s185, %s187
      %p191 = scmp.eq.s32.totalorder %s27, 0
      %p192 = por %p190, %p191
      %p193 = scmp.ne.s32.totalorder %s185, %s187
      %p194 = scmp.eq.s32.totalorder %s32, 1
      %p195 = por %p193, %p194
      %p196 = scmp.ne.s32.totalorder %s187, %s188
      %p197 = scmp.eq.s32.totalorder %s32, 0
      %p198 = por %p196, %p197
      %p199 = scmp.ne.s32.totalorder %s187, %s188
      %p200 = scmp.eq.s32.totalorder %s33, 1
      %p201 = por %p199, %p200
      %p203 = scmp.ne.s32.totalorder %s188, %s202
      %p204 = scmp.eq.s32.totalorder %s33, 0
      %p205 = por %p203, %p204
      %s207 = sadd.s32 %s206, 1
      %p210 = scmp.eq.s32.totalorder %s27, 1
      %p211 = scmp.ne.s32.totalorder %s206, %s208
      %p212 = scmp.eq.s32.totalorder %s27, 0
      %p213 = por %p211, %p212
      %p214 = scmp.ne.s32.totalorder %s206, %s208
      %p215 = scmp.eq.s32.totalorder %s32, 1
      %p216 = por %p214, %p215
      %p217 = scmp.ne.s32.totalorder %s208, %s209
      %p218 = scmp.eq.s32.totalorder %s32, 0
      %p219 = por %p217, %p218
      %p220 = scmp.ne.s32.totalorder %s208, %s209
      %p221 = scmp.eq.s32.totalorder %s33, 1
      %p222 = por %p220, %p221
      %p224 = scmp.ne.s32.totalorder %s209, %s223
      %p225 = scmp.eq.s32.totalorder %s33, 0
      %p226 = por %p224, %p225
      %s228 = sadd.s32 %s227, 1
      %p231 = scmp.eq.s32.totalorder %s27, 1
      %p232 = scmp.ne.s32.totalorder %s227, %s229
      %p233 = scmp.eq.s32.totalorder %s27, 0
      %p234 = por %p232, %p233
      %p235 = scmp.ne.s32.totalorder %s227, %s229
      %p236 = scmp.eq.s32.totalorder %s32, 1
      %p237 = por %p235, %p236
      %p238 = scmp.ne.s32.totalorder %s229, %s230
      %p239 = scmp.eq.s32.totalorder %s32, 0
      %p240 = por %p238, %p239
      %p241 = scmp.ne.s32.totalorder %s229, %s230
      %p242 = scmp.eq.s32.totalorder %s33, 1
      %p243 = por %p241, %p242
      %p245 = scmp.ne.s32.totalorder %s230, %s244
      %p246 = scmp.eq.s32.totalorder %s33, 0
      %p247 = por %p245, %p246
      %s249 = sadd.s32 %s248, 1
      %p252 = scmp.eq.s32.totalorder %s27, 1
      %p253 = scmp.ne.s32.totalorder %s248, %s250
      %p254 = scmp.eq.s32.totalorder %s27, 0
      %p255 = por %p253, %p254
      %p256 = scmp.ne.s32.totalorder %s248, %s250
      %p257 = scmp.eq.s32.totalorder %s32, 1
      %p258 = por %p256, %p257
      %p259 = scmp.ne.s32.totalorder %s250, %s251
      %p260 = scmp.eq.s32.totalorder %s32, 0
      %p261 = por %p259, %p260
      %p262 = scmp.ne.s32.totalorder %s250, %s251
      %p263 = scmp.eq.s32.totalorder %s33, 1
      %p264 = por %p262, %p263
      %p266 = scmp.ne.s32.totalorder %s251, %s265
      %p267 = scmp.eq.s32.totalorder %s33, 0
      %p268 = por %p266, %p267
      %s269 = ssub.s32 %s34, %s46
      %s270 = ssub.s32 %s35, %s42
      %s271 = sor.u32 %s269, %s270
      %p272 = scmp.eq.s32.totalorder %s271, 0
      %s274 = sadd.s32 %s273, 1
      %s275 = scalar_select %p272, %s273, %s274
      %p278 = pneg %p272
      %p279 = scmp.eq.s32.totalorder %s27, 1
      %p280 = por %p278, %p279
      %p281 = scmp.ne.s32.totalorder %s273, %s276
      %p282 = scmp.eq.s32.totalorder %s27, 0
      %p283 = por %p281, %p282
      %p284 = scmp.ne.s32.totalorder %s273, %s276
      %p285 = scmp.eq.s32.totalorder %s32, 1
      %p286 = por %p284, %p285
      %p287 = scmp.ne.s32.totalorder %s276, %s277
      %p288 = scmp.eq.s32.totalorder %s32, 0
      %p289 = por %p287, %p288
      %p290 = scmp.ne.s32.totalorder %s276, %s277
      %p291 = scmp.eq.s32.totalorder %s33, 1
      %p292 = por %p290, %p291
      %p294 = scmp.ne.s32.totalorder %s277, %s293
      %p295 = scmp.eq.s32.totalorder %s33, 0
      %p296 = por %p294, %p295
      %p297 = scmp.le.s32.totalorder 1, %s27
      %p298 = scmp.lt.s32.totalorder %s27, 3
      %p299 = pnand %p297, %p298
      %p300 = pneg %p299
      // Predicated region
      $region9: #{tpu_custom_call.1} parent=5 // pred_check
        _
      $region10: #{tpu_custom_call.1} parent=5 // pred_check_branch
        %302 = sbr.rel (%p299) target = $region12
      $region11: #{tpu_custom_call.1} parent=5 // pred_region
        %s303 = ssub.s32 %s27, 1
        // Predicated region
        $region13: #{tpu_custom_call.1} parent=11 // pred_check
          %p304 = pneg %p114
        $region14: #{tpu_custom_call.1} parent=11 // pred_check_branch
          %306 = sbr.rel (%p304) target = $region16
        $region15: #{tpu_custom_call.1} parent=11 // pred_region
          %s308 = ssub.s32 512, 512
          %309 = vsyncadd [#allocation9], %s308
          %s310 = sshll.u32 [#allocation10], 4
          %s311 = int_to_ptr.vmem [resolvable:$true] %s310
          %316 = dma.hbm_to_vmem [thread:$0]  %s2, 512, %s311, [#allocation9], 128, 128, 8
        $region16: #{tpu_custom_call.1} parent=11 // pred_fallthru
          _
        // Predicated region
        $region17: #{tpu_custom_call.1} parent=11 // pred_check
          %p317 = pneg %p135
        $region18: #{tpu_custom_call.1} parent=11 // pred_check_branch
          %319 = sbr.rel (%p317) target = $region20
        $region19: #{tpu_custom_call.1} parent=11 // pred_region
          _
        $region20: #{tpu_custom_call.1} parent=11 // pred_fallthru
          _
        // Predicated region
        $region21: #{tpu_custom_call.1} parent=11 // pred_check
          %p320 = pneg %p156
        $region22: #{tpu_custom_call.1} parent=11 // pred_check_branch
          %322 = sbr.rel (%p320) target = $region24
        $region23: #{tpu_custom_call.1} parent=11 // pred_region
          %s324 = ssub.s32 512, 512
          %325 = vsyncadd [#allocation12], %s324
          %s326 = sshll.u32 [#allocation11], 4
          %s327 = int_to_ptr.vmem [resolvable:$true] %s326
          %332 = dma.hbm_to_vmem [thread:$0]  %s4, 512, %s327, [#allocation12], 128, 128, 8
        $region24: #{tpu_custom_call.1} parent=11 // pred_fallthru
          _
        // Predicated region
        $region25: #{tpu_custom_call.1} parent=11 // pred_check
          %p333 = pneg %p177
        $region26: #{tpu_custom_call.1} parent=11 // pred_check_branch
          %335 = sbr.rel (%p333) target = $region28
        $region27: #{tpu_custom_call.1} parent=11 // pred_region
          _
        $region28: #{tpu_custom_call.1} parent=11 // pred_fallthru
          _
        // Predicated region
        $region29: #{tpu_custom_call.1} parent=11 // pred_check
          %p336 = pneg %p198
        $region30: #{tpu_custom_call.1} parent=11 // pred_check_branch
          %338 = sbr.rel (%p336) target = $region32
        $region31: #{tpu_custom_call.1} parent=11 // pred_region
          %s340 = ssub.s32 512, 512
          %341 = vsyncadd [#allocation12], %s340
          %s342 = sshll.u32 [#allocation13], 4
          %s343 = int_to_ptr.vmem [resolvable:$true] %s342
          %348 = dma.hbm_to_vmem [thread:$0]  %s6, 512, %s343, [#allocation12], 128, 128, 8
        $region32: #{tpu_custom_call.1} parent=11 // pred_fallthru
          _
        // Predicated region
        $region33: #{tpu_custom_call.1} parent=11 // pred_check
          %p349 = pneg %p219
        $region34: #{tpu_custom_call.1} parent=11 // pred_check_branch
          %351 = sbr.rel (%p349) target = $region36
        $region35: #{tpu_custom_call.1} parent=11 // pred_region
          _
        $region36: #{tpu_custom_call.1} parent=11 // pred_fallthru
          _
        // Predicated region
        $region37: #{tpu_custom_call.1} parent=11 // pred_check
          %p352 = pneg %p240
        $region38: #{tpu_custom_call.1} parent=11 // pred_check_branch
          %354 = sbr.rel (%p352) target = $region40
        $region39: #{tpu_custom_call.1} parent=11 // pred_region
          %s356 = ssub.s32 512, 512
          %357 = vsyncadd [#allocation15], %s356
          %s358 = sshll.u32 [#allocation14], 4
          %s359 = int_to_ptr.vmem [resolvable:$true] %s358
          %364 = dma.hbm_to_vmem [thread:$0]  %s8, 512, %s359, [#allocation15], 128, 128, 8
        $region40: #{tpu_custom_call.1} parent=11 // pred_fallthru
          _
        // Predicated region
        $region41: #{tpu_custom_call.1} parent=11 // pred_check
          %p365 = pneg %p261
        $region42: #{tpu_custom_call.1} parent=11 // pred_check_branch
          %367 = sbr.rel (%p365) target = $region44
        $region43: #{tpu_custom_call.1} parent=11 // pred_region
          _
        $region44: #{tpu_custom_call.1} parent=11 // pred_fallthru
          _
      $region12: #{tpu_custom_call.1} parent=5 // pred_fallthru
        _
      %p368 = scmp.lt.s32.totalorder %s27, 2
      // Predicated region
      $region45: #{tpu_custom_call.1} parent=5 // pred_check
        %p369 = pneg %p368
      $region46: #{tpu_custom_call.1} parent=5 // pred_check_branch
        %371 = sbr.rel (%p369) target = $region48
      $region47: #{tpu_custom_call.1} parent=5 // pred_region
        // Predicated region
        $region49: #{tpu_custom_call.1} parent=47 // pred_check
          %p372 = pneg %p59
        $region50: #{tpu_custom_call.1} parent=47 // pred_check_branch
          %374 = sbr.rel (%p372) target = $region52
        $region51: #{tpu_custom_call.1} parent=47 // pred_region
          %s375 = sand.u32 %s49, 1
          %s376 = scalar_lea.sflag [#allocation6], %s375
          %s377 = sand.u32 %s49, 1
          %s378 = smul.addr %s377, 8
          %s379 = scalar_lea.vmem [#allocation5], %s378
          %s381 = ssub.s32 128, 128
          %382 = vsyncadd %s376, %s381
          %s383 = smul.addr %s34, 128
          %s384 = scalar_lea.hbm %s0, %s383
          %s386 = sshll.u32 %s379, 4
          %s387 = int_to_ptr.vmem [resolvable:$true] %s386
          %389 = dma.hbm_to_vmem [thread:$0]  %s384, 128, %s387, %s376
        $region52: #{tpu_custom_call.1} parent=47 // pred_fallthru
          _
        // Predicated region
        $region53: #{tpu_custom_call.1} parent=47 // pred_check
          %p390 = pneg %p87
        $region54: #{tpu_custom_call.1} parent=47 // pred_check_branch
          %392 = sbr.rel (%p390) target = $region56
        $region55: #{tpu_custom_call.1} parent=47 // pred_region
          %s393 = sand.u32 %s27, 1
          %s394 = scalar_lea.sflag [#allocation9], %s393
          %s395 = sand.u32 %s77, 1
          %s396 = smul.addr %s395, 8
          %s397 = scalar_lea.vmem [#allocation8], %s396
          %s399 = ssub.s32 128, 128
          %400 = vsyncadd %s394, %s399
          %s401 = sadd.s32 %s35, %s34
          %s402 = smul.addr %s401, 128
          %s403 = scalar_lea.hbm %s1, %s402
          %s405 = sshll.u32 %s397, 4
          %s406 = int_to_ptr.vmem [resolvable:$true] %s405
          %408 = dma.hbm_to_vmem [thread:$0]  %s403, 128, %s406, %s394
        $region56: #{tpu_custom_call.1} parent=47 // pred_fallthru
          _
      $region48: #{tpu_custom_call.1} parent=5 // pred_fallthru
        _
      %p409 = scmp.le.s32.totalorder 1, %s27
      %p410 = scmp.lt.s32.totalorder %s27, 3
      %p411 = pnand %p409, %p410
      %p412 = pneg %p411
      // Predicated region
      $region57: #{tpu_custom_call.1} parent=5 // pred_check
        _
      $region58: #{tpu_custom_call.1} parent=5 // pred_check_branch
        %414 = sbr.rel (%p411) target = $region60
      $region59: #{tpu_custom_call.1} parent=5 // pred_region
        %s415 = ssub.s32 %s27, 1
        %s416 = sand.u32 %s52, 1
        %s417 = scalar_lea.sflag [#allocation6], %s416
        %s418 = sand.u32 %s52, 1
        %s419 = smul.addr %s418, 8
        %s420 = scalar_lea.vmem [#allocation5], %s419
        // Predicated region
        $region61: #{tpu_custom_call.1} parent=59 // pred_check
          %p421 = pneg %p65
        $region62: #{tpu_custom_call.1} parent=59 // pred_check_branch
          %423 = sbr.rel (%p421) target = $region64
        $region63: #{tpu_custom_call.1} parent=59 // pred_region
          %424 = dma.done %s417, 128
        $region64: #{tpu_custom_call.1} parent=59 // pred_fallthru
          _
        %s425 = sand.u32 %s32, 1
        %s426 = scalar_lea.sflag [#allocation9], %s425
        %s427 = sand.u32 %s80, 1
        %s428 = smul.addr %s427, 8
        %s429 = scalar_lea.vmem [#allocation8], %s428
        // Predicated region
        $region65: #{tpu_custom_call.1} parent=59 // pred_check
          %p430 = pneg %p93
        $region66: #{tpu_custom_call.1} parent=59 // pred_check_branch
          %432 = sbr.rel (%p430) target = $region68
        $region67: #{tpu_custom_call.1} parent=59 // pred_region
          %433 = dma.done %s426, 128
        $region68: #{tpu_custom_call.1} parent=59 // pred_fallthru
          _
        // Predicated region
        $region69: #{tpu_custom_call.1} parent=59 // pred_check
          %p434 = pneg %p114
        $region70: #{tpu_custom_call.1} parent=59 // pred_check_branch
          %436 = sbr.rel (%p434) target = $region72
        $region71: #{tpu_custom_call.1} parent=59 // pred_region
          %437 = dma.done [#allocation9], 512
        $region72: #{tpu_custom_call.1} parent=59 // pred_fallthru
          _
        // Predicated region
        $region73: #{tpu_custom_call.1} parent=59 // pred_check
          %p438 = pneg %p156
        $region74: #{tpu_custom_call.1} parent=59 // pred_check_branch
          %440 = sbr.rel (%p438) target = $region76
        $region75: #{tpu_custom_call.1} parent=59 // pred_region
          %441 = dma.done [#allocation12], 512
        $region76: #{tpu_custom_call.1} parent=59 // pred_fallthru
          _
        // Predicated region
        $region77: #{tpu_custom_call.1} parent=59 // pred_check
          %p442 = pneg %p198
        $region78: #{tpu_custom_call.1} parent=59 // pred_check_branch
          %444 = sbr.rel (%p442) target = $region80
        $region79: #{tpu_custom_call.1} parent=59 // pred_region
          %445 = dma.done [#allocation12], 512
        $region80: #{tpu_custom_call.1} parent=59 // pred_fallthru
          _
        // Predicated region
        $region81: #{tpu_custom_call.1} parent=59 // pred_check
          %p446 = pneg %p240
        $region82: #{tpu_custom_call.1} parent=59 // pred_check_branch
          %448 = sbr.rel (%p446) target = $region84
        $region83: #{tpu_custom_call.1} parent=59 // pred_region
          %449 = dma.done [#allocation15], 512
        $region84: #{tpu_custom_call.1} parent=59 // pred_fallthru
          _
        %s450 = sand.u32 %s52, 1
        %s451 = scalar_lea.sflag [#allocation6], %s450
        %s452 = sand.u32 %s52, 1
        %s453 = smul.addr %s452, 8
        %s454 = scalar_lea.vmem [#allocation5], %s453
        %p455 = pneg %p65
        %p456 = pneg %p62
        %s457 = sand.u32 %s32, 1
        %s458 = scalar_lea.sflag [#allocation9], %s457
        %s459 = sand.u32 %s80, 1
        %s460 = smul.addr %s459, 8
        %s461 = scalar_lea.vmem [#allocation8], %s460
        %p462 = pneg %p93
        %p463 = pneg %p90
        %p464 = pneg %p114
        %p465 = pneg %p111
        %p466 = pneg %p135
        %p467 = pneg %p132
        %p468 = pneg %p156
        %p469 = pneg %p153
        %p470 = pneg %p177
        %p471 = pneg %p174
        %p472 = pneg %p198
        %p473 = pneg %p195
        %p474 = pneg %p219
        %p475 = pneg %p216
        %p476 = pneg %p240
        %p477 = pneg %p237
        %p478 = pneg %p261
        %p479 = pneg %p258
        %p480 = pneg %p289
        %p481 = pneg %p286
        %s482 = sand.u32 %s276, 1
        %s483 = scalar_lea.sflag [#allocation7], %s482
        %s484 = sand.u32 %s276, 1
        %s485 = smul.addr %s484, 8
        %s486 = scalar_lea.vmem [#allocation16], %s485
        %p487 = scmp.eq.s32.totalorder %s37, 0
        // Predicated region
        $region85: #{tpu_custom_call.1} parent=59 // pred_check
          %p488 = pneg %p487
        $region86: #{tpu_custom_call.1} parent=59 // pred_check_branch
          %490 = sbr.rel (%p488) target = $region88
        $region87: #{tpu_custom_call.1} parent=59 // pred_region
          %v491 = vld [vmem:[%s420] sm:$0xff]
          %v492 = vld [vmem:[#allocation11] sm:$0xff]
          %v493 = vld [vmem:[#allocation11 + $0x8] sm:$0xff]
          %v494 = vld [vmem:[#allocation11 + $0x10] sm:$0xff]
          %v495 = vld [vmem:[#allocation11 + $0x18] sm:$0xff]
          %v496 = vld [vmem:[%s5] sm:$0x1]
          %v498 = vlaneseq
          %v499 = vshrl.u32 %v498, 7
          %v500 = vsub.s32 0, %v499
          %v501 = vrot.slane %v496, %v500
          %vm503 = vcmask 261120
          %v505 = vsel %vm503, %v491, 0
          %507 = vmatprep.subr.mxu0 0.0
          %508 = vmatpush1.msra.mxu0 0.0
          %509 = vmatprep.subr.mxu0 0.0
          %510 = vmatpush1.msra.mxu0 0.0
          %511 = vmatprep.subr.mxu0 0.0
          %512 = vmatpush1.msra.mxu0 0.0
          %513 = vmatprep.subr.mxu0 0.0
          %514 = vmatpush1.msra.mxu0 0.0
          %515 = vmatprep.subr.mxu0 0.0
          %516 = vmatpush1.msra.mxu0 0.0
          %517 = vmatprep.subr.mxu0 0.0
          %518 = vmatpush1.msra.mxu0 0.0
          %519 = vmatprep.subr.mxu0 0.0
          %520 = vmatpush1.msra.mxu0 0.0
          %521 = vmatprep.subr.mxu0 0.0
          %522 = vmatpush1.msra.mxu0 0.0
          %523 = vmatprep.subr.mxu0 0.0
          %524 = vmatpush1.msra.mxu0 0.0
          %525 = vmatprep.subr.mxu0 0.0
          %526 = vmatpush1.msra.mxu0 0.0
          %527 = vmatprep.subr.mxu0 0.0
          %528 = vmatpush1.msra.mxu0 0.0
          %529 = vmatprep.subr.mxu0 0.0
          %530 = vmatpush1.msra.mxu0 0.0
          %531 = vmatprep.subr.mxu0 0.0
          %532 = vmatpush1.msra.mxu0 %v495
          %533 = vmatprep.subr.mxu0 0.0
          %534 = vmatpush1.msra.mxu0 %v494
          %535 = vmatprep.subr.mxu0 0.0
          %536 = vmatpush1.msra.mxu0 %v493
          %537 = vmatprep.subr.mxu0 0.0
          %538 = vmatpush1.msra.mxu0 %v492
          %539 = vmatprep.subr.mxu0 0.0
          %540 = vmatpush2.msra.mxu0 0.0
          %541 = vmatprep.subr.mxu0 0.0
          %542 = vmatpush2.msra.mxu0 0.0
          %543 = vmatprep.subr.mxu0 0.0
          %544 = vmatpush2.msra.mxu0 0.0
          %545 = vmatprep.subr.mxu0 0.0
          %546 = vmatpush2.msra.mxu0 0.0
          %547 = vmatprep.subr.mxu0 0.0
          %548 = vmatpush2.msra.mxu0 0.0
          %549 = vmatprep.subr.mxu0 0.0
          %550 = vmatpush2.msra.mxu0 0.0
          %551 = vmatprep.subr.mxu0 0.0
          %552 = vmatpush2.msra.mxu0 0.0
          %553 = vmatprep.subr.mxu0 0.0
          %554 = vmatpush2.msra.mxu0 0.0
          %555 = vmatprep.subr.mxu0 0.0
          %556 = vmatpush2.msra.mxu0 0.0
          %557 = vmatprep.subr.mxu0 0.0
          %558 = vmatpush2.msra.mxu0 0.0
          %559 = vmatprep.subr.mxu0 0.0
          %560 = vmatpush2.msra.mxu0 0.0
          %561 = vmatprep.subr.mxu0 0.0
          %562 = vmatpush2.msra.mxu0 0.0
          %563 = vmatprep.subr.mxu0 0.0
          %564 = vmatpush2.msra.mxu0 0.0
          %565 = vmatprep.subr.mxu0 0.0
          %566 = vmatpush2.msra.mxu0 0.0
          %567 = vmatprep.subr.mxu0 0.0
          %568 = vmatpush2.msra.mxu0 0.0
          %569 = vmatprep.subr.mxu0 0.0
          %570 = vmatpush2.msra.mxu0 0.0
          %571 = vmatprep.mubr.f32.mxu0 0.0
          %572 = vmatmul.mubr.f32.gmra.mxu0 %v505
          %v573 = vpop.f32.mrf.mxu0
          %v574 = vadd.f32 %v501, %v573
          %v575 = vpop.f32.mrf.mxu0
          %576 = vdwg.mxu0
          %vm577 = vcmask 64512
          %578 = vst.msk [vmem:[#allocation2] sm:$0xff] %vm577, %v574
          %580 = vrot.lane.b32.xlu0 %v574, 120
          %v581 = vpop.permute.xlu0 %580
          %s583 = scalar_lea.vmem [#allocation2], 8
          %584 = vst.msk [vmem:[%s583] sm:$0xff] %vm577, %v581
          %585 = vrot.lane.b32.xlu0 %v574, 112
          %v586 = vpop.permute.xlu0 %585
          %s588 = scalar_lea.vmem [#allocation2], 16
          %589 = vst.msk [vmem:[%s588] sm:$0xff] %vm577, %v586
          %590 = vrot.lane.b32.xlu0 %v574, 104
          %v591 = vpop.permute.xlu0 %590
          %s593 = scalar_lea.vmem [#allocation2], 24
          %594 = vst.msk [vmem:[%s593] sm:$0xff] %vm577, %v591
          %v595 = vld [vmem:[#allocation13] sm:$0xff]
          %v596 = vld [vmem:[#allocation13 + $0x8] sm:$0xff]
          %v597 = vld [vmem:[#allocation13 + $0x10] sm:$0xff]
          %v598 = vld [vmem:[#allocation13 + $0x18] sm:$0xff]
          %v599 = vld [vmem:[%s7] sm:$0x1]
          %v601 = vlaneseq
          %v602 = vshrl.u32 %v601, 7
          %v603 = vsub.s32 0, %v602
          %v604 = vrot.slane %v599, %v603
          %606 = vmatprep.subr.mxu0 0.0
          %607 = vmatpush1.msra.mxu0 0.0
          %608 = vmatprep.subr.mxu0 0.0
          %609 = vmatpush1.msra.mxu0 0.0
          %610 = vmatprep.subr.mxu0 0.0
          %611 = vmatpush1.msra.mxu0 0.0
          %612 = vmatprep.subr.mxu0 0.0
          %613 = vmatpush1.msra.mxu0 0.0
          %614 = vmatprep.subr.mxu0 0.0
          %615 = vmatpush1.msra.mxu0 0.0
          %616 = vmatprep.subr.mxu0 0.0
          %617 = vmatpush1.msra.mxu0 0.0
          %618 = vmatprep.subr.mxu0 0.0
          %619 = vmatpush1.msra.mxu0 0.0
          %620 = vmatprep.subr.mxu0 0.0
          %621 = vmatpush1.msra.mxu0 0.0
          %622 = vmatprep.subr.mxu0 0.0
          %623 = vmatpush1.msra.mxu0 0.0
          %624 = vmatprep.subr.mxu0 0.0
          %625 = vmatpush1.msra.mxu0 0.0
          %626 = vmatprep.subr.mxu0 0.0
          %627 = vmatpush1.msra.mxu0 0.0
          %628 = vmatprep.subr.mxu0 0.0
          %629 = vmatpush1.msra.mxu0 0.0
          %630 = vmatprep.subr.mxu0 0.0
          %631 = vmatpush1.msra.mxu0 %v598
          %632 = vmatprep.subr.mxu0 0.0
          %633 = vmatpush1.msra.mxu0 %v597
          %634 = vmatprep.subr.mxu0 0.0
          %635 = vmatpush1.msra.mxu0 %v596
          %636 = vmatprep.subr.mxu0 0.0
          %637 = vmatpush1.msra.mxu0 %v595
          %638 = vmatprep.subr.mxu0 0.0
          %639 = vmatpush2.msra.mxu0 0.0
          %640 = vmatprep.subr.mxu0 0.0
          %641 = vmatpush2.msra.mxu0 0.0
          %642 = vmatprep.subr.mxu0 0.0
          %643 = vmatpush2.msra.mxu0 0.0
          %644 = vmatprep.subr.mxu0 0.0
          %645 = vmatpush2.msra.mxu0 0.0
          %646 = vmatprep.subr.mxu0 0.0
          %647 = vmatpush2.msra.mxu0 0.0
          %648 = vmatprep.subr.mxu0 0.0
          %649 = vmatpush2.msra.mxu0 0.0
          %650 = vmatprep.subr.mxu0 0.0
          %651 = vmatpush2.msra.mxu0 0.0
          %652 = vmatprep.subr.mxu0 0.0
          %653 = vmatpush2.msra.mxu0 0.0
          %654 = vmatprep.subr.mxu0 0.0
          %655 = vmatpush2.msra.mxu0 0.0
          %656 = vmatprep.subr.mxu0 0.0
          %657 = vmatpush2.msra.mxu0 0.0
          %658 = vmatprep.subr.mxu0 0.0
          %659 = vmatpush2.msra.mxu0 0.0
          %660 = vmatprep.subr.mxu0 0.0
          %661 = vmatpush2.msra.mxu0 0.0
          %662 = vmatprep.subr.mxu0 0.0
          %663 = vmatpush2.msra.mxu0 0.0
          %664 = vmatprep.subr.mxu0 0.0
          %665 = vmatpush2.msra.mxu0 0.0
          %666 = vmatprep.subr.mxu0 0.0
          %667 = vmatpush2.msra.mxu0 0.0
          %668 = vmatprep.subr.mxu0 0.0
          %669 = vmatpush2.msra.mxu0 0.0
          %670 = vmatprep.mubr.f32.mxu0 0.0
          %671 = vmatmul.mubr.f32.gmra.mxu0 %v505
          %v672 = vpop.f32.mrf.mxu0
          %v673 = vadd.f32 %v604, %v672
          %v674 = vpop.f32.mrf.mxu0
          %675 = vdwg.mxu0
          %676 = vst.msk [vmem:[#allocation3] sm:$0xff] %vm577, %v673
          %678 = vrot.lane.b32.xlu0 %v673, 120
          %v679 = vpop.permute.xlu0 %678
          %s681 = scalar_lea.vmem [#allocation3], 8
          %682 = vst.msk [vmem:[%s681] sm:$0xff] %vm577, %v679
          %683 = vrot.lane.b32.xlu0 %v673, 112
          %v684 = vpop.permute.xlu0 %683
          %s686 = scalar_lea.vmem [#allocation3], 16
          %687 = vst.msk [vmem:[%s686] sm:$0xff] %vm577, %v684
          %688 = vrot.lane.b32.xlu0 %v673, 104
          %v689 = vpop.permute.xlu0 %688
          %s691 = scalar_lea.vmem [#allocation3], 24
          %692 = vst.msk [vmem:[%s691] sm:$0xff] %vm577, %v689
        $region88: #{tpu_custom_call.1} parent=59 // pred_fallthru
          _
        %v693 = vld [vmem:[%s429] sm:$0xff]
        %v694 = vld [vmem:[#allocation10] sm:$0xff]
        %v695 = vld [vmem:[#allocation10 + $0x8] sm:$0xff]
        %v696 = vld [vmem:[#allocation10 + $0x10] sm:$0xff]
        %v697 = vld [vmem:[#allocation10 + $0x18] sm:$0xff]
        %v698 = vld [vmem:[%s3] sm:$0x1]
        %v700 = vlaneseq
        %v701 = vshrl.u32 %v700, 7
        %v702 = vsub.s32 0, %v701
        %v703 = vrot.slane %v698, %v702
        %vm705 = vcmask 261120
        %v707 = vsel %vm705, %v693, 0
        %709 = vmatprep.subr.mxu0 0.0
        %710 = vmatpush1.msra.mxu0 0.0
        %711 = vmatprep.subr.mxu0 0.0
        %712 = vmatpush1.msra.mxu0 0.0
        %713 = vmatprep.subr.mxu0 0.0
        %714 = vmatpush1.msra.mxu0 0.0
        %715 = vmatprep.subr.mxu0 0.0
        %716 = vmatpush1.msra.mxu0 0.0
        %717 = vmatprep.subr.mxu0 0.0
        %718 = vmatpush1.msra.mxu0 0.0
        %719 = vmatprep.subr.mxu0 0.0
        %720 = vmatpush1.msra.mxu0 0.0
        %721 = vmatprep.subr.mxu0 0.0
        %722 = vmatpush1.msra.mxu0 0.0
        %723 = vmatprep.subr.mxu0 0.0
        %724 = vmatpush1.msra.mxu0 0.0
        %725 = vmatprep.subr.mxu0 0.0
        %726 = vmatpush1.msra.mxu0 0.0
        %727 = vmatprep.subr.mxu0 0.0
        %728 = vmatpush1.msra.mxu0 0.0
        %729 = vmatprep.subr.mxu0 0.0
        %730 = vmatpush1.msra.mxu0 0.0
        %731 = vmatprep.subr.mxu0 0.0
        %732 = vmatpush1.msra.mxu0 0.0
        %733 = vmatprep.subr.mxu0 0.0
        %734 = vmatpush1.msra.mxu0 %v697
        %735 = vmatprep.subr.mxu0 0.0
        %736 = vmatpush1.msra.mxu0 %v696
        %737 = vmatprep.subr.mxu0 0.0
        %738 = vmatpush1.msra.mxu0 %v695
        %739 = vmatprep.subr.mxu0 0.0
        %740 = vmatpush1.msra.mxu0 %v694
        %741 = vmatprep.subr.mxu0 0.0
        %742 = vmatpush2.msra.mxu0 0.0
        %743 = vmatprep.subr.mxu0 0.0
        %744 = vmatpush2.msra.mxu0 0.0
        %745 = vmatprep.subr.mxu0 0.0
        %746 = vmatpush2.msra.mxu0 0.0
        %747 = vmatprep.subr.mxu0 0.0
        %748 = vmatpush2.msra.mxu0 0.0
        %749 = vmatprep.subr.mxu0 0.0
        %750 = vmatpush2.msra.mxu0 0.0
        %751 = vmatprep.subr.mxu0 0.0
        %752 = vmatpush2.msra.mxu0 0.0
        %753 = vmatprep.subr.mxu0 0.0
        %754 = vmatpush2.msra.mxu0 0.0
        %755 = vmatprep.subr.mxu0 0.0
        %756 = vmatpush2.msra.mxu0 0.0
        %757 = vmatprep.subr.mxu0 0.0
        %758 = vmatpush2.msra.mxu0 0.0
        %759 = vmatprep.subr.mxu0 0.0
        %760 = vmatpush2.msra.mxu0 0.0
        %761 = vmatprep.subr.mxu0 0.0
        %762 = vmatpush2.msra.mxu0 0.0
        %763 = vmatprep.subr.mxu0 0.0
        %764 = vmatpush2.msra.mxu0 0.0
        %765 = vmatprep.subr.mxu0 0.0
        %766 = vmatpush2.msra.mxu0 0.0
        %767 = vmatprep.subr.mxu0 0.0
        %768 = vmatpush2.msra.mxu0 0.0
        %769 = vmatprep.subr.mxu0 0.0
        %770 = vmatpush2.msra.mxu0 0.0
        %771 = vmatprep.subr.mxu0 0.0
        %772 = vmatpush2.msra.mxu0 0.0
        %773 = vmatprep.mubr.f32.mxu0 0.0
        %774 = vmatmul.mubr.f32.gmra.mxu0 %v707
        %v775 = vpop.f32.mrf.mxu0
        %v776 = vadd.f32 %v703, %v775
        %v777 = vpop.f32.mrf.mxu0
        %778 = vdwg.mxu0
        %v779 = vld [vmem:[#allocation2] sm:$0xff]
        %v780 = vld [vmem:[#allocation3] sm:$0xff]
        %vm781 = vcmask 64512
        %v783 = vsel %vm781, %v776, 0
        %v786 = vsel %vm781, %v779, 0
        %788 = vmatprep.subr.mxu0 0.0
        %789 = vmatpush1.xpose.msra.mxu0 0.0
        %790 = vmatprep.subr.mxu0 0.0
        %791 = vmatpush1.xpose.msra.mxu0 0.0
        %792 = vmatprep.subr.mxu0 0.0
        %793 = vmatpush1.xpose.msra.mxu0 0.0
        %794 = vmatprep.subr.mxu0 0.0
        %795 = vmatpush1.xpose.msra.mxu0 0.0
        %796 = vmatprep.subr.mxu0 0.0
        %797 = vmatpush1.xpose.msra.mxu0 0.0
        %798 = vmatprep.subr.mxu0 0.0
        %799 = vmatpush1.xpose.msra.mxu0 0.0
        %800 = vmatprep.subr.mxu0 0.0
        %801 = vmatpush1.xpose.msra.mxu0 0.0
        %802 = vmatprep.subr.mxu0 0.0
        %803 = vmatpush1.xpose.msra.mxu0 0.0
        %804 = vmatprep.subr.mxu0 0.0
        %805 = vmatpush1.xpose.msra.mxu0 0.0
        %806 = vmatprep.subr.mxu0 0.0
        %807 = vmatpush1.xpose.msra.mxu0 0.0
        %808 = vmatprep.subr.mxu0 0.0
        %809 = vmatpush1.xpose.msra.mxu0 0.0
        %810 = vmatprep.subr.mxu0 0.0
        %811 = vmatpush1.xpose.msra.mxu0 0.0
        %812 = vmatprep.subr.mxu0 0.0
        %813 = vmatpush1.xpose.msra.mxu0 0.0
        %814 = vmatprep.subr.mxu0 0.0
        %815 = vmatpush1.xpose.msra.mxu0 0.0
        %816 = vmatprep.subr.mxu0 0.0
        %817 = vmatpush1.xpose.msra.mxu0 0.0
        %818 = vmatprep.subr.mxu0 0.0
        %819 = vmatpush1.xpose.msra.mxu0 %v786
        %820 = vmatprep.subr.mxu0 0.0
        %821 = vmatpush2.xpose.msra.mxu0 0.0
        %822 = vmatprep.subr.mxu0 0.0
        %823 = vmatpush2.xpose.msra.mxu0 0.0
        %824 = vmatprep.subr.mxu0 0.0
        %825 = vmatpush2.xpose.msra.mxu0 0.0
        %826 = vmatprep.subr.mxu0 0.0
        %827 = vmatpush2.xpose.msra.mxu0 0.0
        %828 = vmatprep.subr.mxu0 0.0
        %829 = vmatpush2.xpose.msra.mxu0 0.0
        %830 = vmatprep.subr.mxu0 0.0
        %831 = vmatpush2.xpose.msra.mxu0 0.0
        %832 = vmatprep.subr.mxu0 0.0
        %833 = vmatpush2.xpose.msra.mxu0 0.0
        %834 = vmatprep.subr.mxu0 0.0
        %835 = vmatpush2.xpose.msra.mxu0 0.0
        %836 = vmatprep.subr.mxu0 0.0
        %837 = vmatpush2.xpose.msra.mxu0 0.0
        %838 = vmatprep.subr.mxu0 0.0
        %839 = vmatpush2.xpose.msra.mxu0 0.0
        %840 = vmatprep.subr.mxu0 0.0
        %841 = vmatpush2.xpose.msra.mxu0 0.0
        %842 = vmatprep.subr.mxu0 0.0
        %843 = vmatpush2.xpose.msra.mxu0 0.0
        %844 = vmatprep.subr.mxu0 0.0
        %845 = vmatpush2.xpose.msra.mxu0 0.0
        %846 = vmatprep.subr.mxu0 0.0
        %847 = vmatpush2.xpose.msra.mxu0 0.0
        %848 = vmatprep.subr.mxu0 0.0
        %849 = vmatpush2.xpose.msra.mxu0 0.0
        %850 = vmatprep.subr.mxu0 0.0
        %851 = vmatpush2.xpose.msra.mxu0 0.0
        %852 = vmatprep.mubr.f32.mxu0 0.0
        %853 = vmatmul.mubr.f32.gmra.mxu0 %v783
        %v854 = vpop.f32.mrf.mxu0
        %v855 = vadd.f32 0.0, %v854
        %v856 = vpop.f32.mrf.mxu0
        %857 = vdwg.mxu0
        %v858 = vmul.f32 %v855, 0.35355338
        %v859 = vsel %vm781, %v858, -inf
        %860 = vmax.xlane.f32.xlu0 %v859
        %v861 = vpop.xlane.xlu0 %860
        %v862 = vsub.f32 %v858, %v861
        %v863 = vmul.f32 %v862, 1.442695
        %v864 = vpow.pop %v863
        %v865 = vsel %vm781, %v864, 0.0
        %866 = vadd.xlane.f32.xlu0 %v865
        %v867 = vpop.xlane.xlu0 %866
        %v868 = vrcp.pop %v867
        %v869 = vmul.f32 %v864, %v868
        %v871 = vsel %vm781, %v869, 0
        %873 = vmatprep.subr.mxu0 0.0
        %874 = vmatpush1.msra.mxu0 0.0
        %875 = vmatprep.subr.mxu0 0.0
        %876 = vmatpush1.msra.mxu0 0.0
        %877 = vmatprep.subr.mxu0 0.0
        %878 = vmatpush1.msra.mxu0 0.0
        %879 = vmatprep.subr.mxu0 0.0
        %880 = vmatpush1.msra.mxu0 0.0
        %881 = vmatprep.subr.mxu0 0.0
        %882 = vmatpush1.msra.mxu0 0.0
        %883 = vmatprep.subr.mxu0 0.0
        %884 = vmatpush1.msra.mxu0 0.0
        %885 = vmatprep.subr.mxu0 0.0
        %886 = vmatpush1.msra.mxu0 0.0
        %887 = vmatprep.subr.mxu0 0.0
        %888 = vmatpush1.msra.mxu0 0.0
        %889 = vmatprep.subr.mxu0 0.0
        %890 = vmatpush1.msra.mxu0 0.0
        %891 = vmatprep.subr.mxu0 0.0
        %892 = vmatpush1.msra.mxu0 0.0
        %893 = vmatprep.subr.mxu0 0.0
        %894 = vmatpush1.msra.mxu0 0.0
        %895 = vmatprep.subr.mxu0 0.0
        %896 = vmatpush1.msra.mxu0 0.0
        %897 = vmatprep.subr.mxu0 0.0
        %898 = vmatpush1.msra.mxu0 0.0
        %899 = vmatprep.subr.mxu0 0.0
        %900 = vmatpush1.msra.mxu0 0.0
        %901 = vmatprep.subr.mxu0 0.0
        %902 = vmatpush1.msra.mxu0 0.0
        %903 = vmatprep.subr.mxu0 0.0
        %904 = vmatpush1.msra.mxu0 %v780
        %905 = vmatprep.subr.mxu0 0.0
        %906 = vmatpush2.msra.mxu0 0.0
        %907 = vmatprep.subr.mxu0 0.0
        %908 = vmatpush2.msra.mxu0 0.0
        %909 = vmatprep.subr.mxu0 0.0
        %910 = vmatpush2.msra.mxu0 0.0
        %911 = vmatprep.subr.mxu0 0.0
        %912 = vmatpush2.msra.mxu0 0.0
        %913 = vmatprep.subr.mxu0 0.0
        %914 = vmatpush2.msra.mxu0 0.0
        %915 = vmatprep.subr.mxu0 0.0
        %916 = vmatpush2.msra.mxu0 0.0
        %917 = vmatprep.subr.mxu0 0.0
        %918 = vmatpush2.msra.mxu0 0.0
        %919 = vmatprep.subr.mxu0 0.0
        %920 = vmatpush2.msra.mxu0 0.0
        %921 = vmatprep.subr.mxu0 0.0
        %922 = vmatpush2.msra.mxu0 0.0
        %923 = vmatprep.subr.mxu0 0.0
        %924 = vmatpush2.msra.mxu0 0.0
        %925 = vmatprep.subr.mxu0 0.0
        %926 = vmatpush2.msra.mxu0 0.0
        %927 = vmatprep.subr.mxu0 0.0
        %928 = vmatpush2.msra.mxu0 0.0
        %929 = vmatprep.subr.mxu0 0.0
        %930 = vmatpush2.msra.mxu0 0.0
        %931 = vmatprep.subr.mxu0 0.0
        %932 = vmatpush2.msra.mxu0 0.0
        %933 = vmatprep.subr.mxu0 0.0
        %934 = vmatpush2.msra.mxu0 0.0
        %935 = vmatprep.subr.mxu0 0.0
        %936 = vmatpush2.msra.mxu0 0.0
        %937 = vmatprep.mubr.f32.mxu0 0.0
        %938 = vmatmul.mubr.f32.gmra.mxu0 %v871
        %v939 = vpop.f32.mrf.mxu0
        %v940 = vadd.f32 0.0, %v939
        %v941 = vpop.f32.mrf.mxu0
        %942 = vdwg.mxu0
        %943 = vst.msk [vmem:[#allocation4] sm:$0xff] %vm781, %v940
        %s944 = scalar_lea.vmem [#allocation2], 8
        %v945 = vld [vmem:[%s944] sm:$0xff]
        %s946 = scalar_lea.vmem [#allocation3], 8
        %v947 = vld [vmem:[%s946] sm:$0xff]
        %948 = vrot.lane.b32.xlu0 %v776, 120
        %v949 = vpop.permute.xlu0 %948
        %v950 = vsel %vm781, %v949, 0
        %v953 = vsel %vm781, %v945, 0
        %955 = vmatprep.subr.mxu0 0.0
        %956 = vmatpush1.xpose.msra.mxu0 0.0
        %957 = vmatprep.subr.mxu0 0.0
        %958 = vmatpush1.xpose.msra.mxu0 0.0
        %959 = vmatprep.subr.mxu0 0.0
        %960 = vmatpush1.xpose.msra.mxu0 0.0
        %961 = vmatprep.subr.mxu0 0.0
        %962 = vmatpush1.xpose.msra.mxu0 0.0
        %963 = vmatprep.subr.mxu0 0.0
        %964 = vmatpush1.xpose.msra.mxu0 0.0
        %965 = vmatprep.subr.mxu0 0.0
        %966 = vmatpush1.xpose.msra.mxu0 0.0
        %967 = vmatprep.subr.mxu0 0.0
        %968 = vmatpush1.xpose.msra.mxu0 0.0
        %969 = vmatprep.subr.mxu0 0.0
        %970 = vmatpush1.xpose.msra.mxu0 0.0
        %971 = vmatprep.subr.mxu0 0.0
        %972 = vmatpush1.xpose.msra.mxu0 0.0
        %973 = vmatprep.subr.mxu0 0.0
        %974 = vmatpush1.xpose.msra.mxu0 0.0
        %975 = vmatprep.subr.mxu0 0.0
        %976 = vmatpush1.xpose.msra.mxu0 0.0
        %977 = vmatprep.subr.mxu0 0.0
        %978 = vmatpush1.xpose.msra.mxu0 0.0
        %979 = vmatprep.subr.mxu0 0.0
        %980 = vmatpush1.xpose.msra.mxu0 0.0
        %981 = vmatprep.subr.mxu0 0.0
        %982 = vmatpush1.xpose.msra.mxu0 0.0
        %983 = vmatprep.subr.mxu0 0.0
        %984 = vmatpush1.xpose.msra.mxu0 0.0
        %985 = vmatprep.subr.mxu0 0.0
        %986 = vmatpush1.xpose.msra.mxu0 %v953
        %987 = vmatprep.subr.mxu0 0.0
        %988 = vmatpush2.xpose.msra.mxu0 0.0
        %989 = vmatprep.subr.mxu0 0.0
        %990 = vmatpush2.xpose.msra.mxu0 0.0
        %991 = vmatprep.subr.mxu0 0.0
        %992 = vmatpush2.xpose.msra.mxu0 0.0
        %993 = vmatprep.subr.mxu0 0.0
        %994 = vmatpush2.xpose.msra.mxu0 0.0
        %995 = vmatprep.subr.mxu0 0.0
        %996 = vmatpush2.xpose.msra.mxu0 0.0
        %997 = vmatprep.subr.mxu0 0.0
        %998 = vmatpush2.xpose.msra.mxu0 0.0
        %999 = vmatprep.subr.mxu0 0.0
        %1000 = vmatpush2.xpose.msra.mxu0 0.0
        %1001 = vmatprep.subr.mxu0 0.0
        %1002 = vmatpush2.xpose.msra.mxu0 0.0
        %1003 = vmatprep.subr.mxu0 0.0
        %1004 = vmatpush2.xpose.msra.mxu0 0.0
        %1005 = vmatprep.subr.mxu0 0.0
        %1006 = vmatpush2.xpose.msra.mxu0 0.0
        %1007 = vmatprep.subr.mxu0 0.0
        %1008 = vmatpush2.xpose.msra.mxu0 0.0
        %1009 = vmatprep.subr.mxu0 0.0
        %1010 = vmatpush2.xpose.msra.mxu0 0.0
        %1011 = vmatprep.subr.mxu0 0.0
        %1012 = vmatpush2.xpose.msra.mxu0 0.0
        %1013 = vmatprep.subr.mxu0 0.0
        %1014 = vmatpush2.xpose.msra.mxu0 0.0
        %1015 = vmatprep.subr.mxu0 0.0
        %1016 = vmatpush2.xpose.msra.mxu0 0.0
        %1017 = vmatprep.subr.mxu0 0.0
        %1018 = vmatpush2.xpose.msra.mxu0 0.0
        %1019 = vmatprep.mubr.f32.mxu0 0.0
        %1020 = vmatmul.mubr.f32.gmra.mxu0 %v950
        %v1021 = vpop.f32.mrf.mxu0
        %v1022 = vadd.f32 0.0, %v1021
        %v1023 = vpop.f32.mrf.mxu0
        %1024 = vdwg.mxu0
        %v1025 = vmul.f32 %v1022, 0.35355338
        %v1026 = vsel %vm781, %v1025, -inf
        %1027 = vmax.xlane.f32.xlu0 %v1026
        %v1028 = vpop.xlane.xlu0 %1027
        %v1029 = vsub.f32 %v1025, %v1028
        %v1030 = vmul.f32 %v1029, 1.442695
        %v1031 = vpow.pop %v1030
        %v1032 = vsel %vm781, %v1031, 0.0
        %1033 = vadd.xlane.f32.xlu0 %v1032
        %v1034 = vpop.xlane.xlu0 %1033
        %v1035 = vrcp.pop %v1034
        %v1036 = vmul.f32 %v1031, %v1035
        %v1038 = vsel %vm781, %v1036, 0
        %1040 = vmatprep.subr.mxu0 0.0
        %1041 = vmatpush1.msra.mxu0 0.0
        %1042 = vmatprep.subr.mxu0 0.0
        %1043 = vmatpush1.msra.mxu0 0.0
        %1044 = vmatprep.subr.mxu0 0.0
        %1045 = vmatpush1.msra.mxu0 0.0
        %1046 = vmatprep.subr.mxu0 0.0
        %1047 = vmatpush1.msra.mxu0 0.0
        %1048 = vmatprep.subr.mxu0 0.0
        %1049 = vmatpush1.msra.mxu0 0.0
        %1050 = vmatprep.subr.mxu0 0.0
        %1051 = vmatpush1.msra.mxu0 0.0
        %1052 = vmatprep.subr.mxu0 0.0
        %1053 = vmatpush1.msra.mxu0 0.0
        %1054 = vmatprep.subr.mxu0 0.0
        %1055 = vmatpush1.msra.mxu0 0.0
        %1056 = vmatprep.subr.mxu0 0.0
        %1057 = vmatpush1.msra.mxu0 0.0
        %1058 = vmatprep.subr.mxu0 0.0
        %1059 = vmatpush1.msra.mxu0 0.0
        %1060 = vmatprep.subr.mxu0 0.0
        %1061 = vmatpush1.msra.mxu0 0.0
        %1062 = vmatprep.subr.mxu0 0.0
        %1063 = vmatpush1.msra.mxu0 0.0
        %1064 = vmatprep.subr.mxu0 0.0
        %1065 = vmatpush1.msra.mxu0 0.0
        %1066 = vmatprep.subr.mxu0 0.0
        %1067 = vmatpush1.msra.mxu0 0.0
        %1068 = vmatprep.subr.mxu0 0.0
        %1069 = vmatpush1.msra.mxu0 0.0
        %1070 = vmatprep.subr.mxu0 0.0
        %1071 = vmatpush1.msra.mxu0 %v947
        %1072 = vmatprep.subr.mxu0 0.0
        %1073 = vmatpush2.msra.mxu0 0.0
        %1074 = vmatprep.subr.mxu0 0.0
        %1075 = vmatpush2.msra.mxu0 0.0
        %1076 = vmatprep.subr.mxu0 0.0
        %1077 = vmatpush2.msra.mxu0 0.0
        %1078 = vmatprep.subr.mxu0 0.0
        %1079 = vmatpush2.msra.mxu0 0.0
        %1080 = vmatprep.subr.mxu0 0.0
        %1081 = vmatpush2.msra.mxu0 0.0
        %1082 = vmatprep.subr.mxu0 0.0
        %1083 = vmatpush2.msra.mxu0 0.0
        %1084 = vmatprep.subr.mxu0 0.0
        %1085 = vmatpush2.msra.mxu0 0.0
        %1086 = vmatprep.subr.mxu0 0.0
        %1087 = vmatpush2.msra.mxu0 0.0
        %1088 = vmatprep.subr.mxu0 0.0
        %1089 = vmatpush2.msra.mxu0 0.0
        %1090 = vmatprep.subr.mxu0 0.0
        %1091 = vmatpush2.msra.mxu0 0.0
        %1092 = vmatprep.subr.mxu0 0.0
        %1093 = vmatpush2.msra.mxu0 0.0
        %1094 = vmatprep.subr.mxu0 0.0
        %1095 = vmatpush2.msra.mxu0 0.0
        %1096 = vmatprep.subr.mxu0 0.0
        %1097 = vmatpush2.msra.mxu0 0.0
        %1098 = vmatprep.subr.mxu0 0.0
        %1099 = vmatpush2.msra.mxu0 0.0
        %1100 = vmatprep.subr.mxu0 0.0
        %1101 = vmatpush2.msra.mxu0 0.0
        %1102 = vmatprep.subr.mxu0 0.0
        %1103 = vmatpush2.msra.mxu0 0.0
        %1104 = vmatprep.mubr.f32.mxu0 0.0
        %1105 = vmatmul.mubr.f32.gmra.mxu0 %v1038
        %v1106 = vpop.f32.mrf.mxu0
        %v1107 = vadd.f32 0.0, %v1106
        %v1108 = vpop.f32.mrf.mxu0
        %1109 = vdwg.mxu0
        %1111 = vrot.lane.b32.xlu0 %v1107, 8
        %v1112 = vpop.permute.xlu0 %1111
        %vm1114 = vcmask 130112
        %1115 = vst.msk [vmem:[#allocation4] sm:$0xff] %vm1114, %v1112
        %s1116 = scalar_lea.vmem [#allocation2], 16
        %v1117 = vld [vmem:[%s1116] sm:$0xff]
        %s1118 = scalar_lea.vmem [#allocation3], 16
        %v1119 = vld [vmem:[%s1118] sm:$0xff]
        %1120 = vrot.lane.b32.xlu0 %v776, 112
        %v1121 = vpop.permute.xlu0 %1120
        %v1122 = vsel %vm781, %v1121, 0
        %v1125 = vsel %vm781, %v1117, 0
        %1127 = vmatprep.subr.mxu0 0.0
        %1128 = vmatpush1.xpose.msra.mxu0 0.0
        %1129 = vmatprep.subr.mxu0 0.0
        %1130 = vmatpush1.xpose.msra.mxu0 0.0
        %1131 = vmatprep.subr.mxu0 0.0
        %1132 = vmatpush1.xpose.msra.mxu0 0.0
        %1133 = vmatprep.subr.mxu0 0.0
        %1134 = vmatpush1.xpose.msra.mxu0 0.0
        %1135 = vmatprep.subr.mxu0 0.0
        %1136 = vmatpush1.xpose.msra.mxu0 0.0
        %1137 = vmatprep.subr.mxu0 0.0
        %1138 = vmatpush1.xpose.msra.mxu0 0.0
        %1139 = vmatprep.subr.mxu0 0.0
        %1140 = vmatpush1.xpose.msra.mxu0 0.0
        %1141 = vmatprep.subr.mxu0 0.0
        %1142 = vmatpush1.xpose.msra.mxu0 0.0
        %1143 = vmatprep.subr.mxu0 0.0
        %1144 = vmatpush1.xpose.msra.mxu0 0.0
        %1145 = vmatprep.subr.mxu0 0.0
        %1146 = vmatpush1.xpose.msra.mxu0 0.0
        %1147 = vmatprep.subr.mxu0 0.0
        %1148 = vmatpush1.xpose.msra.mxu0 0.0
        %1149 = vmatprep.subr.mxu0 0.0
        %1150 = vmatpush1.xpose.msra.mxu0 0.0
        %1151 = vmatprep.subr.mxu0 0.0
        %1152 = vmatpush1.xpose.msra.mxu0 0.0
        %1153 = vmatprep.subr.mxu0 0.0
        %1154 = vmatpush1.xpose.msra.mxu0 0.0
        %1155 = vmatprep.subr.mxu0 0.0
        %1156 = vmatpush1.xpose.msra.mxu0 0.0
        %1157 = vmatprep.subr.mxu0 0.0
        %1158 = vmatpush1.xpose.msra.mxu0 %v1125
        %1159 = vmatprep.subr.mxu0 0.0
        %1160 = vmatpush2.xpose.msra.mxu0 0.0
        %1161 = vmatprep.subr.mxu0 0.0
        %1162 = vmatpush2.xpose.msra.mxu0 0.0
        %1163 = vmatprep.subr.mxu0 0.0
        %1164 = vmatpush2.xpose.msra.mxu0 0.0
        %1165 = vmatprep.subr.mxu0 0.0
        %1166 = vmatpush2.xpose.msra.mxu0 0.0
        %1167 = vmatprep.subr.mxu0 0.0
        %1168 = vmatpush2.xpose.msra.mxu0 0.0
        %1169 = vmatprep.subr.mxu0 0.0
        %1170 = vmatpush2.xpose.msra.mxu0 0.0
        %1171 = vmatprep.subr.mxu0 0.0
        %1172 = vmatpush2.xpose.msra.mxu0 0.0
        %1173 = vmatprep.subr.mxu0 0.0
        %1174 = vmatpush2.xpose.msra.mxu0 0.0
        %1175 = vmatprep.subr.mxu0 0.0
        %1176 = vmatpush2.xpose.msra.mxu0 0.0
        %1177 = vmatprep.subr.mxu0 0.0
        %1178 = vmatpush2.xpose.msra.mxu0 0.0
        %1179 = vmatprep.subr.mxu0 0.0
        %1180 = vmatpush2.xpose.msra.mxu0 0.0
        %1181 = vmatprep.subr.mxu0 0.0
        %1182 = vmatpush2.xpose.msra.mxu0 0.0
        %1183 = vmatprep.subr.mxu0 0.0
        %1184 = vmatpush2.xpose.msra.mxu0 0.0
        %1185 = vmatprep.subr.mxu0 0.0
        %1186 = vmatpush2.xpose.msra.mxu0 0.0
        %1187 = vmatprep.subr.mxu0 0.0
        %1188 = vmatpush2.xpose.msra.mxu0 0.0
        %1189 = vmatprep.subr.mxu0 0.0
        %1190 = vmatpush2.xpose.msra.mxu0 0.0
        %1191 = vmatprep.mubr.f32.mxu0 0.0
        %1192 = vmatmul.mubr.f32.gmra.mxu0 %v1122
        %v1193 = vpop.f32.mrf.mxu0
        %v1194 = vadd.f32 0.0, %v1193
        %v1195 = vpop.f32.mrf.mxu0
        %1196 = vdwg.mxu0
        %v1197 = vmul.f32 %v1194, 0.35355338
        %v1198 = vsel %vm781, %v1197, -inf
        %1199 = vmax.xlane.f32.xlu0 %v1198
        %v1200 = vpop.xlane.xlu0 %1199
        %v1201 = vsub.f32 %v1197, %v1200
        %v1202 = vmul.f32 %v1201, 1.442695
        %v1203 = vpow.pop %v1202
        %v1204 = vsel %vm781, %v1203, 0.0
        %1205 = vadd.xlane.f32.xlu0 %v1204
        %v1206 = vpop.xlane.xlu0 %1205
        %v1207 = vrcp.pop %v1206
        %v1208 = vmul.f32 %v1203, %v1207
        %v1210 = vsel %vm781, %v1208, 0
        %1212 = vmatprep.subr.mxu0 0.0
        %1213 = vmatpush1.msra.mxu0 0.0
        %1214 = vmatprep.subr.mxu0 0.0
        %1215 = vmatpush1.msra.mxu0 0.0
        %1216 = vmatprep.subr.mxu0 0.0
        %1217 = vmatpush1.msra.mxu0 0.0
        %1218 = vmatprep.subr.mxu0 0.0
        %1219 = vmatpush1.msra.mxu0 0.0
        %1220 = vmatprep.subr.mxu0 0.0
        %1221 = vmatpush1.msra.mxu0 0.0
        %1222 = vmatprep.subr.mxu0 0.0
        %1223 = vmatpush1.msra.mxu0 0.0
        %1224 = vmatprep.subr.mxu0 0.0
        %1225 = vmatpush1.msra.mxu0 0.0
        %1226 = vmatprep.subr.mxu0 0.0
        %1227 = vmatpush1.msra.mxu0 0.0
        %1228 = vmatprep.subr.mxu0 0.0
        %1229 = vmatpush1.msra.mxu0 0.0
        %1230 = vmatprep.subr.mxu0 0.0
        %1231 = vmatpush1.msra.mxu0 0.0
        %1232 = vmatprep.subr.mxu0 0.0
        %1233 = vmatpush1.msra.mxu0 0.0
        %1234 = vmatprep.subr.mxu0 0.0
        %1235 = vmatpush1.msra.mxu0 0.0
        %1236 = vmatprep.subr.mxu0 0.0
        %1237 = vmatpush1.msra.mxu0 0.0
        %1238 = vmatprep.subr.mxu0 0.0
        %1239 = vmatpush1.msra.mxu0 0.0
        %1240 = vmatprep.subr.mxu0 0.0
        %1241 = vmatpush1.msra.mxu0 0.0
        %1242 = vmatprep.subr.mxu0 0.0
        %1243 = vmatpush1.msra.mxu0 %v1119
        %1244 = vmatprep.subr.mxu0 0.0
        %1245 = vmatpush2.msra.mxu0 0.0
        %1246 = vmatprep.subr.mxu0 0.0
        %1247 = vmatpush2.msra.mxu0 0.0
        %1248 = vmatprep.subr.mxu0 0.0
        %1249 = vmatpush2.msra.mxu0 0.0
        %1250 = vmatprep.subr.mxu0 0.0
        %1251 = vmatpush2.msra.mxu0 0.0
        %1252 = vmatprep.subr.mxu0 0.0
        %1253 = vmatpush2.msra.mxu0 0.0
        %1254 = vmatprep.subr.mxu0 0.0
        %1255 = vmatpush2.msra.mxu0 0.0
        %1256 = vmatprep.subr.mxu0 0.0
        %1257 = vmatpush2.msra.mxu0 0.0
        %1258 = vmatprep.subr.mxu0 0.0
        %1259 = vmatpush2.msra.mxu0 0.0
        %1260 = vmatprep.subr.mxu0 0.0
        %1261 = vmatpush2.msra.mxu0 0.0
        %1262 = vmatprep.subr.mxu0 0.0
        %1263 = vmatpush2.msra.mxu0 0.0
        %1264 = vmatprep.subr.mxu0 0.0
        %1265 = vmatpush2.msra.mxu0 0.0
        %1266 = vmatprep.subr.mxu0 0.0
        %1267 = vmatpush2.msra.mxu0 0.0
        %1268 = vmatprep.subr.mxu0 0.0
        %1269 = vmatpush2.msra.mxu0 0.0
        %1270 = vmatprep.subr.mxu0 0.0
        %1271 = vmatpush2.msra.mxu0 0.0
        %1272 = vmatprep.subr.mxu0 0.0
        %1273 = vmatpush2.msra.mxu0 0.0
        %1274 = vmatprep.subr.mxu0 0.0
        %1275 = vmatpush2.msra.mxu0 0.0
        %1276 = vmatprep.mubr.f32.mxu0 0.0
        %1277 = vmatmul.mubr.f32.gmra.mxu0 %v1210
        %v1278 = vpop.f32.mrf.mxu0
        %v1279 = vadd.f32 0.0, %v1278
        %v1280 = vpop.f32.mrf.mxu0
        %1281 = vdwg.mxu0
        %1283 = vrot.lane.b32.xlu0 %v1279, 16
        %v1284 = vpop.permute.xlu0 %1283
        %vm1286 = vcmask 195712
        %1287 = vst.msk [vmem:[#allocation4] sm:$0xff] %vm1286, %v1284
        %s1288 = scalar_lea.vmem [#allocation2], 24
        %v1289 = vld [vmem:[%s1288] sm:$0xff]
        %s1290 = scalar_lea.vmem [#allocation3], 24
        %v1291 = vld [vmem:[%s1290] sm:$0xff]
        %1292 = vrot.lane.b32.xlu0 %v776, 104
        %v1293 = vpop.permute.xlu0 %1292
        %v1294 = vsel %vm781, %v1293, 0
        %v1297 = vsel %vm781, %v1289, 0
        %1299 = vmatprep.subr.mxu0 0.0
        %1300 = vmatpush1.xpose.msra.mxu0 0.0
        %1301 = vmatprep.subr.mxu0 0.0
        %1302 = vmatpush1.xpose.msra.mxu0 0.0
        %1303 = vmatprep.subr.mxu0 0.0
        %1304 = vmatpush1.xpose.msra.mxu0 0.0
        %1305 = vmatprep.subr.mxu0 0.0
        %1306 = vmatpush1.xpose.msra.mxu0 0.0
        %1307 = vmatprep.subr.mxu0 0.0
        %1308 = vmatpush1.xpose.msra.mxu0 0.0
        %1309 = vmatprep.subr.mxu0 0.0
        %1310 = vmatpush1.xpose.msra.mxu0 0.0
        %1311 = vmatprep.subr.mxu0 0.0
        %1312 = vmatpush1.xpose.msra.mxu0 0.0
        %1313 = vmatprep.subr.mxu0 0.0
        %1314 = vmatpush1.xpose.msra.mxu0 0.0
        %1315 = vmatprep.subr.mxu0 0.0
        %1316 = vmatpush1.xpose.msra.mxu0 0.0
        %1317 = vmatprep.subr.mxu0 0.0
        %1318 = vmatpush1.xpose.msra.mxu0 0.0
        %1319 = vmatprep.subr.mxu0 0.0
        %1320 = vmatpush1.xpose.msra.mxu0 0.0
        %1321 = vmatprep.subr.mxu0 0.0
        %1322 = vmatpush1.xpose.msra.mxu0 0.0
        %1323 = vmatprep.subr.mxu0 0.0
        %1324 = vmatpush1.xpose.msra.mxu0 0.0
        %1325 = vmatprep.subr.mxu0 0.0
        %1326 = vmatpush1.xpose.msra.mxu0 0.0
        %1327 = vmatprep.subr.mxu0 0.0
        %1328 = vmatpush1.xpose.msra.mxu0 0.0
        %1329 = vmatprep.subr.mxu0 0.0
        %1330 = vmatpush1.xpose.msra.mxu0 %v1297
        %1331 = vmatprep.subr.mxu0 0.0
        %1332 = vmatpush2.xpose.msra.mxu0 0.0
        %1333 = vmatprep.subr.mxu0 0.0
        %1334 = vmatpush2.xpose.msra.mxu0 0.0
        %1335 = vmatprep.subr.mxu0 0.0
        %1336 = vmatpush2.xpose.msra.mxu0 0.0
        %1337 = vmatprep.subr.mxu0 0.0
        %1338 = vmatpush2.xpose.msra.mxu0 0.0
        %1339 = vmatprep.subr.mxu0 0.0
        %1340 = vmatpush2.xpose.msra.mxu0 0.0
        %1341 = vmatprep.subr.mxu0 0.0
        %1342 = vmatpush2.xpose.msra.mxu0 0.0
        %1343 = vmatprep.subr.mxu0 0.0
        %1344 = vmatpush2.xpose.msra.mxu0 0.0
        %1345 = vmatprep.subr.mxu0 0.0
        %1346 = vmatpush2.xpose.msra.mxu0 0.0
        %1347 = vmatprep.subr.mxu0 0.0
        %1348 = vmatpush2.xpose.msra.mxu0 0.0
        %1349 = vmatprep.subr.mxu0 0.0
        %1350 = vmatpush2.xpose.msra.mxu0 0.0
        %1351 = vmatprep.subr.mxu0 0.0
        %1352 = vmatpush2.xpose.msra.mxu0 0.0
        %1353 = vmatprep.subr.mxu0 0.0
        %1354 = vmatpush2.xpose.msra.mxu0 0.0
        %1355 = vmatprep.subr.mxu0 0.0
        %1356 = vmatpush2.xpose.msra.mxu0 0.0
        %1357 = vmatprep.subr.mxu0 0.0
        %1358 = vmatpush2.xpose.msra.mxu0 0.0
        %1359 = vmatprep.subr.mxu0 0.0
        %1360 = vmatpush2.xpose.msra.mxu0 0.0
        %1361 = vmatprep.subr.mxu0 0.0
        %1362 = vmatpush2.xpose.msra.mxu0 0.0
        %1363 = vmatprep.mubr.f32.mxu0 0.0
        %1364 = vmatmul.mubr.f32.gmra.mxu0 %v1294
        %v1365 = vpop.f32.mrf.mxu0
        %v1366 = vadd.f32 0.0, %v1365
        %v1367 = vpop.f32.mrf.mxu0
        %1368 = vdwg.mxu0
        %v1369 = vmul.f32 %v1366, 0.35355338
        %v1370 = vsel %vm781, %v1369, -inf
        %1371 = vmax.xlane.f32.xlu0 %v1370
        %v1372 = vpop.xlane.xlu0 %1371
        %v1373 = vsub.f32 %v1369, %v1372
        %v1374 = vmul.f32 %v1373, 1.442695
        %v1375 = vpow.pop %v1374
        %v1376 = vsel %vm781, %v1375, 0.0
        %1377 = vadd.xlane.f32.xlu0 %v1376
        %v1378 = vpop.xlane.xlu0 %1377
        %v1379 = vrcp.pop %v1378
        %v1380 = vmul.f32 %v1375, %v1379
        %v1382 = vsel %vm781, %v1380, 0
        %1384 = vmatprep.subr.mxu0 0.0
        %1385 = vmatpush1.msra.mxu0 0.0
        %1386 = vmatprep.subr.mxu0 0.0
        %1387 = vmatpush1.msra.mxu0 0.0
        %1388 = vmatprep.subr.mxu0 0.0
        %1389 = vmatpush1.msra.mxu0 0.0
        %1390 = vmatprep.subr.mxu0 0.0
        %1391 = vmatpush1.msra.mxu0 0.0
        %1392 = vmatprep.subr.mxu0 0.0
        %1393 = vmatpush1.msra.mxu0 0.0
        %1394 = vmatprep.subr.mxu0 0.0
        %1395 = vmatpush1.msra.mxu0 0.0
        %1396 = vmatprep.subr.mxu0 0.0
        %1397 = vmatpush1.msra.mxu0 0.0
        %1398 = vmatprep.subr.mxu0 0.0
        %1399 = vmatpush1.msra.mxu0 0.0
        %1400 = vmatprep.subr.mxu0 0.0
        %1401 = vmatpush1.msra.mxu0 0.0
        %1402 = vmatprep.subr.mxu0 0.0
        %1403 = vmatpush1.msra.mxu0 0.0
        %1404 = vmatprep.subr.mxu0 0.0
        %1405 = vmatpush1.msra.mxu0 0.0
        %1406 = vmatprep.subr.mxu0 0.0
        %1407 = vmatpush1.msra.mxu0 0.0
        %1408 = vmatprep.subr.mxu0 0.0
        %1409 = vmatpush1.msra.mxu0 0.0
        %1410 = vmatprep.subr.mxu0 0.0
        %1411 = vmatpush1.msra.mxu0 0.0
        %1412 = vmatprep.subr.mxu0 0.0
        %1413 = vmatpush1.msra.mxu0 0.0
        %1414 = vmatprep.subr.mxu0 0.0
        %1415 = vmatpush1.msra.mxu0 %v1291
        %1416 = vmatprep.subr.mxu0 0.0
        %1417 = vmatpush2.msra.mxu0 0.0
        %1418 = vmatprep.subr.mxu0 0.0
        %1419 = vmatpush2.msra.mxu0 0.0
        %1420 = vmatprep.subr.mxu0 0.0
        %1421 = vmatpush2.msra.mxu0 0.0
        %1422 = vmatprep.subr.mxu0 0.0
        %1423 = vmatpush2.msra.mxu0 0.0
        %1424 = vmatprep.subr.mxu0 0.0
        %1425 = vmatpush2.msra.mxu0 0.0
        %1426 = vmatprep.subr.mxu0 0.0
        %1427 = vmatpush2.msra.mxu0 0.0
        %1428 = vmatprep.subr.mxu0 0.0
        %1429 = vmatpush2.msra.mxu0 0.0
        %1430 = vmatprep.subr.mxu0 0.0
        %1431 = vmatpush2.msra.mxu0 0.0
        %1432 = vmatprep.subr.mxu0 0.0
        %1433 = vmatpush2.msra.mxu0 0.0
        %1434 = vmatprep.subr.mxu0 0.0
        %1435 = vmatpush2.msra.mxu0 0.0
        %1436 = vmatprep.subr.mxu0 0.0
        %1437 = vmatpush2.msra.mxu0 0.0
        %1438 = vmatprep.subr.mxu0 0.0
        %1439 = vmatpush2.msra.mxu0 0.0
        %1440 = vmatprep.subr.mxu0 0.0
        %1441 = vmatpush2.msra.mxu0 0.0
        %1442 = vmatprep.subr.mxu0 0.0
        %1443 = vmatpush2.msra.mxu0 0.0
        %1444 = vmatprep.subr.mxu0 0.0
        %1445 = vmatpush2.msra.mxu0 0.0
        %1446 = vmatprep.subr.mxu0 0.0
        %1447 = vmatpush2.msra.mxu0 0.0
        %1448 = vmatprep.mubr.f32.mxu0 0.0
        %1449 = vmatmul.mubr.f32.gmra.mxu0 %v1382
        %v1450 = vpop.f32.mrf.mxu0
        %v1451 = vadd.f32 0.0, %v1450
        %v1452 = vpop.f32.mrf.mxu0
        %1453 = vdwg.mxu0
        %1455 = vrot.lane.b32.xlu0 %v1451, 24
        %v1456 = vpop.permute.xlu0 %1455
        %vm1458 = vcmask 261312
        %1459 = vst.msk [vmem:[#allocation4] sm:$0xff] %vm1458, %v1456
        %v1460 = vld [vmem:[#allocation4] sm:$0xff]
        %v1461 = vld [vmem:[#allocation14] sm:$0xff]
        %v1462 = vld [vmem:[#allocation14 + $0x8] sm:$0xff]
        %v1463 = vld [vmem:[#allocation14 + $0x10] sm:$0xff]
        %v1464 = vld [vmem:[#allocation14 + $0x18] sm:$0xff]
        %v1465 = vld [vmem:[%s9] sm:$0x1]
        %v1467 = vlaneseq
        %v1468 = vshrl.u32 %v1467, 7
        %v1469 = vsub.s32 0, %v1468
        %v1470 = vrot.slane %v1465, %v1469
        %v1473 = vsel %vm705, %v1460, 0
        %1475 = vmatprep.subr.mxu0 0.0
        %1476 = vmatpush1.msra.mxu0 0.0
        %1477 = vmatprep.subr.mxu0 0.0
        %1478 = vmatpush1.msra.mxu0 0.0
        %1479 = vmatprep.subr.mxu0 0.0
        %1480 = vmatpush1.msra.mxu0 0.0
        %1481 = vmatprep.subr.mxu0 0.0
        %1482 = vmatpush1.msra.mxu0 0.0
        %1483 = vmatprep.subr.mxu0 0.0
        %1484 = vmatpush1.msra.mxu0 0.0
        %1485 = vmatprep.subr.mxu0 0.0
        %1486 = vmatpush1.msra.mxu0 0.0
        %1487 = vmatprep.subr.mxu0 0.0
        %1488 = vmatpush1.msra.mxu0 0.0
        %1489 = vmatprep.subr.mxu0 0.0
        %1490 = vmatpush1.msra.mxu0 0.0
        %1491 = vmatprep.subr.mxu0 0.0
        %1492 = vmatpush1.msra.mxu0 0.0
        %1493 = vmatprep.subr.mxu0 0.0
        %1494 = vmatpush1.msra.mxu0 0.0
        %1495 = vmatprep.subr.mxu0 0.0
        %1496 = vmatpush1.msra.mxu0 0.0
        %1497 = vmatprep.subr.mxu0 0.0
        %1498 = vmatpush1.msra.mxu0 0.0
        %1499 = vmatprep.subr.mxu0 0.0
        %1500 = vmatpush1.msra.mxu0 %v1464
        %1501 = vmatprep.subr.mxu0 0.0
        %1502 = vmatpush1.msra.mxu0 %v1463
        %1503 = vmatprep.subr.mxu0 0.0
        %1504 = vmatpush1.msra.mxu0 %v1462
        %1505 = vmatprep.subr.mxu0 0.0
        %1506 = vmatpush1.msra.mxu0 %v1461
        %1507 = vmatprep.subr.mxu0 0.0
        %1508 = vmatpush2.msra.mxu0 0.0
        %1509 = vmatprep.subr.mxu0 0.0
        %1510 = vmatpush2.msra.mxu0 0.0
        %1511 = vmatprep.subr.mxu0 0.0
        %1512 = vmatpush2.msra.mxu0 0.0
        %1513 = vmatprep.subr.mxu0 0.0
        %1514 = vmatpush2.msra.mxu0 0.0
        %1515 = vmatprep.subr.mxu0 0.0
        %1516 = vmatpush2.msra.mxu0 0.0
        %1517 = vmatprep.subr.mxu0 0.0
        %1518 = vmatpush2.msra.mxu0 0.0
        %1519 = vmatprep.subr.mxu0 0.0
        %1520 = vmatpush2.msra.mxu0 0.0
        %1521 = vmatprep.subr.mxu0 0.0
        %1522 = vmatpush2.msra.mxu0 0.0
        %1523 = vmatprep.subr.mxu0 0.0
        %1524 = vmatpush2.msra.mxu0 0.0
        %1525 = vmatprep.subr.mxu0 0.0
        %1526 = vmatpush2.msra.mxu0 0.0
        %1527 = vmatprep.subr.mxu0 0.0
        %1528 = vmatpush2.msra.mxu0 0.0
        %1529 = vmatprep.subr.mxu0 0.0
        %1530 = vmatpush2.msra.mxu0 0.0
        %1531 = vmatprep.subr.mxu0 0.0
        %1532 = vmatpush2.msra.mxu0 0.0
        %1533 = vmatprep.subr.mxu0 0.0
        %1534 = vmatpush2.msra.mxu0 0.0
        %1535 = vmatprep.subr.mxu0 0.0
        %1536 = vmatpush2.msra.mxu0 0.0
        %1537 = vmatprep.subr.mxu0 0.0
        %1538 = vmatpush2.msra.mxu0 0.0
        %1539 = vmatprep.mubr.f32.mxu0 0.0
        %1540 = vmatmul.mubr.f32.gmra.mxu0 %v1473
        %v1541 = vpop.f32.mrf.mxu0
        %v1542 = vadd.f32 %v1470, %v1541
        %v1543 = vpop.f32.mrf.mxu0
        %1544 = vdwg.mxu0
        %1545 = vst.msk [vmem:[%s486] sm:$0xff] %vm705, %v1542
        %s1546 = sand.u32 %s276, 1
        %s1547 = scalar_lea.sflag [#allocation7], %s1546
        %s1548 = sand.u32 %s276, 1
        %s1549 = smul.addr %s1548, 8
        %s1550 = scalar_lea.vmem [#allocation16], %s1549
        // Predicated region
        $region89: #{tpu_custom_call.1} parent=59 // pred_check
          %p1551 = pneg %p286
        $region90: #{tpu_custom_call.1} parent=59 // pred_check_branch
          %1553 = sbr.rel (%p1551) target = $region92
        $region91: #{tpu_custom_call.1} parent=59 // pred_region
          %s1555 = ssub.s32 128, 128
          %1556 = vsyncadd %s1547, %s1555
          %s1557 = sadd.s32 %s37, %s36
          %s1558 = smul.addr %s1557, 128
          %s1559 = scalar_lea.hbm %s10, %s1558
          %s1561 = sshll.u32 %s1550, 4
          %s1562 = int_to_ptr.vmem [resolvable:$true] %s1561
          %1564 = dma.vmem_to_hbm [thread:$0]  %s1562, 128, %s1559, %s1547
        $region92: #{tpu_custom_call.1} parent=59 // pred_fallthru
          _
      $region60: #{tpu_custom_call.1} parent=5 // pred_fallthru
        _
      %p1565 = scmp.le.s32.totalorder 2, %s27
      // Predicated region
      $region93: #{tpu_custom_call.1} parent=5 // pred_check
        %p1566 = pneg %p1565
      $region94: #{tpu_custom_call.1} parent=5 // pred_check_branch
        %1568 = sbr.rel (%p1566) target = $region96
      $region95: #{tpu_custom_call.1} parent=5 // pred_region
        %s1569 = ssub.s32 %s27, 2
        // Predicated region
        $region97: #{tpu_custom_call.1} parent=95 // pred_check
          %p1570 = pneg %p292
        $region98: #{tpu_custom_call.1} parent=95 // pred_check_branch
          %1572 = sbr.rel (%p1570) target = $region100
        $region99: #{tpu_custom_call.1} parent=95 // pred_region
          %s1573 = sand.u32 %s277, 1
          %s1574 = scalar_lea.sflag [#allocation7], %s1573
          %s1575 = sand.u32 %s277, 1
          %s1576 = smul.addr %s1575, 8
          %s1577 = scalar_lea.vmem [#allocation16], %s1576
          %1578 = dma.done %s1574, 128
        $region100: #{tpu_custom_call.1} parent=95 // pred_fallthru
          _
      $region96: #{tpu_custom_call.1} parent=5 // pred_fallthru
        _
    $region6: #{tpu_custom_call.1} parent=1 // loop_footer
      %s31 = sadd.s32 1, %s27
    $region7: #{tpu_custom_call.1} parent=1 // loop_footer_branch
      %26 = sbr.rel target = $region3
    $region8: #{tpu_custom_call.1} parent=1 // loop_exit
      _
    %1579 = vsyncpa [#allocation6], 1
    %s1580 = scalar_lea.sflag [#allocation6], 1
    %1581 = vsyncpa %s1580, 1
    %1582 = vsyncpa [#allocation9], 1
    %s1583 = scalar_lea.sflag [#allocation9], 1
    %1584 = vsyncpa %s1583, 1
    %1585 = vsyncpa [#allocation12], 1
    %1586 = vsyncpa [#allocation15], 1
    %1587 = vsyncpa [#allocation7], 1
    %s1588 = scalar_lea.sflag [#allocation7], 1
    %1589 = vsyncpa %s1588, 1

</llo_original>
